<compile_context>
chip_gen: v6e
topology: v6e:2x2x1
jax: 0.10.0
libtpu: 0.0.40
codegen_flags: <defaults>
</compile_context>

<pallas_src>
import jax
import jax.numpy as jnp
from jax import lax
from jax.experimental import pallas as pl
from jax.experimental.pallas import tpu as pltpu

# ----- module hyper-parameters (small, consistent with the module) -----
DIM = 32          # dim
DIM_HEAD = 8      # dim_head
NUM_HEAD = 4      # num_head
INNER = DIM_HEAD * NUM_HEAD                    # 32
MLP_DIM = 64      # mlp_dim
HIDDEN = (int(MLP_DIM * 2 / 3) + 7) // 8 * 8   # SwiGLUFFNFused hidden = 48
EPS = 1e-5
SCALE = DIM_HEAD ** -0.5

# ----- Decoder-level hyper-parameters -----
IMAGE_SIZE = 16
PATCH_SIZE = 4
NUM_PATCHES = (IMAGE_SIZE // PATCH_SIZE) ** 2  # 16
NUM_SLOTS = 8
OUT_CHANNELS = 3
DEPTH = 2

# ----- packed-parameter slab layout (128-lane dense) -----
WCOLS = 128
R_QKV1 = 0        # [Wq1*SCALE | Wk1 | Wv1]   (32, 96)
R_O1 = 32         # Wo1                        (32, 32)
R_Q2 = 64         # Wq2*SCALE                  (32, 32)
R_KV2 = 96        # [Wk2 | Wv2]                (32, 64)
R_O2 = 128        # Wo2                        (32, 32)
R_W1 = 160        # W12[:, :48]                (32, 48)
R_W2 = 192        # W12[:, 48:]                (32, 48)
R_W3 = 224        # W3                         (48, 32)
W_ROWS = 272

(V_LN1W, V_LN1B, V_LN2W, V_LN2B, V_LN3W, V_LN3B,
 V_BO1, V_BO2, V_B3, V_B1, V_B2) = range(11)
V_ROWS = 11


# ---------------- shared math helpers ----------------
def _layernorm(x, w, b):
    # PyTorch nn.LayerNorm: biased variance, eps inside sqrt, affine. f32 stats.
    xf = x.astype(jnp.float32)
    mean = jnp.mean(xf, axis=-1, keepdims=True)
    var = jnp.mean((xf - mean) ** 2, axis=-1, keepdims=True)
    return (xf - mean) * lax.rsqrt(var + EPS) * w + b


def _silu(x):
    return x * (1.0 / (1.0 + jnp.exp(-x)))


def _split_heads(m, off):
    """(T, >=off+INNER) -> (NUM_HEAD, T, DIM_HEAD): static width-8 lane slices
    stacked along a new leading (major) axis — no minor-dim reshape/transpose."""
    return jnp.concatenate(
        [m[:, off + h * DIM_HEAD: off + (h + 1) * DIM_HEAD][None]
         for h in range(NUM_HEAD)], axis=0)


def _mha(q, k, v, cdt):
    """q: (H, Nq, dh); k, v: (H, Nk, dh). SCALE already folded into Wq.
    One head-batched contraction per stage (heads = leading batch dim)."""
    f32 = jnp.float32
    sim = jnp.einsum('hnd,hmd->hnm', q.astype(cdt), k.astype(cdt),
                     preferred_element_type=f32)
    sim = sim - jnp.max(sim, axis=-1, keepdims=True)
    p = jnp.exp(sim)
    # exact reciprocal (approx=True is available for pure inference)
    p = p * pl.reciprocal(jnp.sum(p, axis=-1, keepdims=True), approx=False)
    o = jnp.einsum('hnm,hmd->hnd', p.astype(cdt), v.astype(cdt),
                   preferred_element_type=f32)
    # merge heads back to the (Nq, H*dh) lane layout for the output projection
    return jnp.concatenate([o[h] for h in range(NUM_HEAD)], axis=-1)


# ---------------- fused DecoderLayer kernel: one grid step = one batch row ----
def decoder_layer_kernel(x_ref, slots_ref, w_ref, v_ref, out_ref):
    f32 = jnp.float32
    cdt = w_ref.dtype                       # matmul-operand (model) dtype
    x = x_ref[...].astype(f32)              # (N, DIM) residual stream in f32
    slots = slots_ref[...].astype(f32)      # (M, DIM)
    vv = v_ref[...].astype(f32)             # (V_ROWS, 128): one full-lane load

    def vec(row, width=DIM):
        return vv[row:row + 1, :width]      # in-register static slice

    def mm(a, rs, re, width):
        return jnp.dot(a.astype(cdt), w_ref[rs:re, :width],
                       preferred_element_type=f32)

    # ---- x = attn1(norm1(x)) + x   (self-attention, fused QKV projection) ----
    h1 = _layernorm(x, vec(V_LN1W), vec(V_LN1B))
    qkv = mm(h1, R_QKV1, R_QKV1 + DIM, 3 * INNER)                    # (N, 96)
    o1 = _mha(_split_heads(qkv, 0), _split_heads(qkv, INNER),
              _split_heads(qkv, 2 * INNER), cdt)                     # (N, 32)
    x = x + mm(o1, R_O1, R_O1 + INNER, DIM) + vec(V_BO1)

    # ---- x = attn2(norm2(x), context) + x   (cross-attention, fused K|V) ----
    h2 = _layernorm(x, vec(V_LN2W), vec(V_LN2B))
    q2 = mm(h2, R_Q2, R_Q2 + DIM, INNER)                             # (N, 32)
    kv2 = mm(slots, R_KV2, R_KV2 + DIM, 2 * INNER)                   # (M, 64)
    o2 = _mha(_split_heads(q2, 0), _split_heads(kv2, 0),
              _split_heads(kv2, INNER), cdt)                         # (N, 32)
    x = x + mm(o2, R_O2, R_O2 + INNER, DIM) + vec(V_BO2)

    # ---- x = ffnet(norm3(x)) + x   (SwiGLU, two lane-aligned in-projections) -
    h3 = _layernorm(x, vec(V_LN3W), vec(V_LN3B))
    x1 = mm(h3, R_W1, R_W1 + DIM, HIDDEN) + vec(V_B1, HIDDEN)
    x2 = mm(h3, R_W2, R_W2 + DIM, HIDDEN) + vec(V_B2, HIDDEN)
    ffn = mm(_silu(x1) * x2, R_W3, R_W3 + HIDDEN, DIM) + vec(V_B3)
    out_ref[...] = (x + ffn).astype(out_ref.dtype)


# ---------------- parameter packing: 2 slabs, called ONCE at setup ------------
def _pad_cols(a):
    a = jnp.asarray(a, jnp.float32)
    return jnp.pad(a, ((0, 0), (0, WCOLS - a.shape[1])))


def pack_params(p, dtype=jnp.float32):
    """Pack the 20 layer tensors into a weight slab and a vector slab.
    Call once (outside the jitted hot path). SCALE is folded into Wq here."""
    w12 = jnp.asarray(p["w12"], jnp.float32)
    blocks = [
        jnp.concatenate([jnp.asarray(p["wq1"], jnp.float32) * SCALE,
                         p["wk1"], p["wv1"]], axis=1),               # (32, 96)
        p["wo1"],
        jnp.asarray(p["wq2"], jnp.float32) * SCALE,
        jnp.concatenate([p["wk2"], p["wv2"]], axis=1),
        p["wo2"],
        w12[:, :HIDDEN],
        w12[:, HIDDEN:],
        p["w3"],
    ]
    w_slab = jnp.concatenate([_pad_cols(b) for b in blocks], axis=0).astype(dtype)

    b12 = jnp.asarray(p["b12"], jnp.float32).reshape(1, -1)
    rows = [p["ln1_w"], p["ln1_b"], p["ln2_w"], p["ln2_b"], p["ln3_w"], p["ln3_b"],
            p["bo1"], p["bo2"], p["b3"], b12[:, :HIDDEN], b12[:, HIDDEN:]]
    v_slab = jnp.concatenate(
        [_pad_cols(jnp.asarray(r, jnp.float32).reshape(1, -1)) for r in rows],
        axis=0)                                                       # (11, 128), f32
    return w_slab, v_slab


# ---------------- wrapper: one fused layer over the whole batch ---------------
@jax.jit
def decoder_layer(x, ctx, w_slab, v_slab):
    B, N, D = x.shape
    M = ctx.shape[1]
    assert D == DIM and ctx.shape[-1] == DIM
    assert N % 8 == 0 and M % 8 == 0, "token counts must be sublane-aligned"
    xf = x.reshape(B * N, D)
    cf = ctx.reshape(B * M, D)
    out = pl.pallas_call(
        decoder_layer_kernel,
        out_shape=jax.ShapeDtypeStruct((B * N, D), x.dtype),
        grid=(B,),
        in_specs=[pl.BlockSpec((N, D), lambda b: (b, 0)),
                  pl.BlockSpec((M, D), lambda b: (b, 0)),
                  # constant index_map -> slabs DMA'd once, not per grid step
                  pl.BlockSpec((W_ROWS, WCOLS), lambda b: (0, 0)),
                  pl.BlockSpec((V_ROWS, WCOLS), lambda b: (0, 0))],
        out_specs=pl.BlockSpec((N, D), lambda b: (b, 0)),
        compiler_params=pltpu.CompilerParams(
            dimension_semantics=("parallel",),        # both TCs on v7x
            vmem_limit_bytes=32 * 1024 * 1024),
    )(xf, cf, w_slab, v_slab)
    return out.reshape(B, N, D)


# ---------------- full Decoder forward (glue host-side, layers fused) ---------
@jax.jit
def decoder_forward(slots, dec, packed_layers):
    # TODO(synk): embedding add / concat / final norm+proj / patch rearrange are
    # host-side XLA ops; only the transformer layers are fused Pallas kernels.
    B = slots.shape[0]
    mask_tokens = dec["pos_emb"][None] + dec["mask_token"][None]      # (1, P, D)
    z = jnp.concatenate(
        [jnp.broadcast_to(mask_tokens, (B, NUM_PATCHES, DIM)), slots], axis=1)
    for (w_slab, v_slab) in packed_layers:
        # Decoder.forward calls transformer(z) with slots=None -> context = z
        z = decoder_layer(z, z, w_slab, v_slab)
    z = _layernorm(z, dec["norm_w"], dec["norm_b"])
    xp = z[:, :NUM_PATCHES] @ dec["proj_w"] + dec["proj_b"]
    g = IMAGE_SIZE // PATCH_SIZE
    xp = xp.reshape(B, g, g, PATCH_SIZE, PATCH_SIZE, OUT_CHANNELS)
    return jnp.transpose(xp, (0, 5, 1, 3, 2, 4)).reshape(
        B, OUT_CHANNELS, IMAGE_SIZE, IMAGE_SIZE)


# ---------------- pure-JAX references ----------------
def _mha_ref(q_in, kv_in, wq, wk, wv, wo, bo):
    q = q_in @ wq
    k = kv_in @ wk
    v = kv_in @ wv
    outs = []
    for h in range(NUM_HEAD):
        sl = slice(h * DIM_HEAD, (h + 1) * DIM_HEAD)
        sim = (q[:, sl] @ k[:, sl].T) * SCALE
        sim = sim - jnp.max(sim, axis=-1, keepdims=True)
        pr = jnp.exp(sim)
        pr = pr / jnp.sum(pr, axis=-1, keepdims=True)
        outs.append(pr @ v[:, sl])
    return jnp.concatenate(outs, axis=-1) @ wo + bo


def decoder_layer_ref(x, ctx, p):
    def one(xb, cb):
        h1 = _layernorm(xb, p["ln1_w"][0], p["ln1_b"][0])
        xb = _mha_ref(h1, h1, p["wq1"], p["wk1"], p["wv1"], p["wo1"], p["bo1"][0]) + xb
        h2 = _layernorm(xb, p["ln2_w"][0], p["ln2_b"][0])
        xb = _mha_ref(h2, cb, p["wq2"], p["wk2"], p["wv2"], p["wo2"], p["bo2"][0]) + xb
        h3 = _layernorm(xb, p["ln3_w"][0], p["ln3_b"][0])
        x12 = h3 @ p["w12"] + p["b12"][0]
        hid = _silu(x12[:, :HIDDEN]) * x12[:, HIDDEN:]
        return hid @ p["w3"] + p["b3"][0] + xb
    return jax.vmap(one)(x, ctx)


def decoder_forward_ref(slots, dec, layer_params):
    B = slots.shape[0]
    mask_tokens = dec["pos_emb"][None] + dec["mask_token"][None]
    z = jnp.concatenate(
        [jnp.broadcast_to(mask_tokens, (B, NUM_PATCHES, DIM)), slots], axis=1)
    for p in layer_params:
        z = decoder_layer_ref(z, z, p)
    z = _layernorm(z, dec["norm_w"], dec["norm_b"])
    xp = z[:, :NUM_PATCHES] @ dec["proj_w"] + dec["proj_b"]
    g = IMAGE_SIZE // PATCH_SIZE
    xp = xp.reshape(B, g, g, PATCH_SIZE, PATCH_SIZE, OUT_CHANNELS)
    return jnp.transpose(xp, (0, 5, 1, 3, 2, 4)).reshape(
        B, OUT_CHANNELS, IMAGE_SIZE, IMAGE_SIZE)


# ---------------- deterministic parameter construction ----------------
def make_params(key):
    keys = jax.random.split(key, 14)
    n = lambda k, shape, s=0.05: jax.random.normal(k, shape, jnp.float32) * s
    return {
        "ln1_w": jnp.ones((1, DIM), jnp.float32), "ln1_b": jnp.zeros((1, DIM), jnp.float32),
        "ln2_w": jnp.ones((1, DIM), jnp.float32), "ln2_b": jnp.zeros((1, DIM), jnp.float32),
        "ln3_w": jnp.ones((1, DIM), jnp.float32), "ln3_b": jnp.zeros((1, DIM), jnp.float32),
        "wq1": n(keys[0], (DIM, INNER)), "wk1": n(keys[1], (DIM, INNER)),
        "wv1": n(keys[2], (DIM, INNER)), "wo1": n(keys[3], (INNER, DIM)),
        "bo1": n(keys[4], (1, DIM)),
        "wq2": n(keys[5], (DIM, INNER)), "wk2": n(keys[6], (DIM, INNER)),
        "wv2": n(keys[7], (DIM, INNER)), "wo2": n(keys[8], (INNER, DIM)),
        "bo2": n(keys[9], (1, DIM)),
        "w12": n(keys[10], (DIM, 2 * HIDDEN)), "b12": n(keys[11], (1, 2 * HIDDEN)),
        "w3": n(keys[12], (HIDDEN, DIM)), "b3": n(keys[13], (1, DIM)),
    }


def make_decoder_params(key, depth=DEPTH):
    keys = jax.random.split(key, depth + 3)
    layer_params = [make_params(k) for k in keys[:depth]]
    n = lambda k, shape, s=0.05: jax.random.normal(k, shape, jnp.float32) * s
    dec = {
        "pos_emb": n(keys[depth], (NUM_PATCHES, DIM), 0.5),
        "mask_token": n(keys[depth + 1], (1, DIM), 0.5),
        "norm_w": jnp.ones((1, DIM), jnp.float32),
        "norm_b": jnp.zeros((1, DIM), jnp.float32),
        "proj_w": n(keys[depth + 2], (DIM, OUT_CHANNELS * PATCH_SIZE * PATCH_SIZE)),
        "proj_b": jnp.zeros((1, OUT_CHANNELS * PATCH_SIZE * PATCH_SIZE), jnp.float32),
    }
    return dec, layer_params


if __name__ == "__main__":
    key = jax.random.PRNGKey(0)
    kx, ks, kp, kd, ksl = jax.random.split(key, 5)

    # ---- standalone DecoderLayer (explicit cross-attention context) ----
    B, N, M = 2, 16, 8
    x = jax.random.normal(kx, (B, N, DIM), jnp.float32)
    slots = jax.random.normal(ks, (B, M, DIM), jnp.float32)
    params = make_params(kp)
    w_slab, v_slab = pack_params(params)      # packed once, outside the hot path

    out = jax.block_until_ready(decoder_layer(x, slots, w_slab, v_slab))
    ref = decoder_layer_ref(x, slots, params)
    assert out.shape == (B, N, DIM) and out.dtype == x.dtype
    # tolerance covers MXU default-precision f32 matmuls in the XLA reference
    assert jnp.allclose(out, ref, rtol=2e-3, atol=2e-3), "layer mismatch vs JAX reference"

    # ---- full Decoder forward: slots -> reconstructed image ----
    dec, layer_params = make_decoder_params(kd)
    packed_layers = [pack_params(p) for p in layer_params]
    dslots = jax.random.normal(ksl, (B, NUM_SLOTS, DIM), jnp.float32)

    img = jax.block_until_ready(decoder_forward(dslots, dec, packed_layers))
    img_ref = decoder_forward_ref(dslots, dec, layer_params)
    assert img.shape == (B, OUT_CHANNELS, IMAGE_SIZE, IMAGE_SIZE)
    assert jnp.allclose(img, img_ref, rtol=5e-3, atol=5e-3), "decoder mismatch vs JAX reference"

    print("KERNEL_OK")
</pallas_src>

<mosaic_0001>
module attributes {stable_mosaic.version = 11 : i64} {
  func.func @decoder_layer_kernel(%arg0: i32, %arg1: memref<16x32xf32, #tpu.memory_space<vmem>>, %arg2: memref<8x32xf32, #tpu.memory_space<vmem>>, %arg3: memref<272x128xf32, #tpu.memory_space<vmem>>, %arg4: memref<11x128xf32, #tpu.memory_space<vmem>>, %arg5: memref<16x32xf32, #tpu.memory_space<vmem>>) attributes {dimension_semantics = [#tpu.dimension_semantics<parallel>], iteration_bounds = array<i64: 2>, scalar_prefetch = 0 : i64, scratch_operands = 0 : i64, tpu.core_type = #tpu.core_type<tc>, window_params = [{transform_indices = @transform_0, window_bounds = array<i64: 16, 32>}, {transform_indices = @transform_1, window_bounds = array<i64: 8, 32>}, {pipeline_mode = #tpu.pipeline_mode<synchronous>, transform_indices = @transform_2, window_bounds = array<i64: 272, 128>}, {pipeline_mode = #tpu.pipeline_mode<synchronous>, transform_indices = @transform_3, window_bounds = array<i64: 11, 128>}, {transform_indices = @transform_4, window_bounds = array<i64: 16, 32>}]} {
    %c0 = arith.constant 0 : index
    %c0_0 = arith.constant 0 : index
    %0 = vector.load %arg1[%c0, %c0_0] : memref<16x32xf32, #tpu.memory_space<vmem>>, vector<16x32xf32>
    %c0_1 = arith.constant 0 : index
    %c0_2 = arith.constant 0 : index
    %1 = vector.load %arg2[%c0_1, %c0_2] : memref<8x32xf32, #tpu.memory_space<vmem>>, vector<8x32xf32>
    %c0_3 = arith.constant 0 : index
    %c0_4 = arith.constant 0 : index
    %2 = vector.load %arg4[%c0_3, %c0_4] : memref<11x128xf32, #tpu.memory_space<vmem>>, vector<11x128xf32>
    %3 = vector.extract_strided_slice %2 {offsets = [0, 0], sizes = [1, 32], strides = [1, 1]} : vector<11x128xf32> to vector<1x32xf32>
    %4 = vector.extract_strided_slice %2 {offsets = [1, 0], sizes = [1, 32], strides = [1, 1]} : vector<11x128xf32> to vector<1x32xf32>
    %cst = arith.constant dense<0.000000e+00> : vector<16xf32>
    %5 = vector.multi_reduction <add>, %0, %cst [1] : vector<16x32xf32> to vector<16xf32>
    %6 = vector.shape_cast %5 : vector<16xf32> to vector<16x1xf32>
    %cst_5 = arith.constant 3.200000e+01 : f32
    %7 = vector.broadcast %cst_5 : f32 to vector<16x1xf32>
    %8 = arith.divf %6, %7 : vector<16x1xf32>
    %9 = vector.broadcast %8 : vector<16x1xf32> to vector<16x32xf32>
    %10 = arith.subf %0, %9 : vector<16x32xf32>
    %11 = arith.mulf %10, %10 : vector<16x32xf32>
    %cst_6 = arith.constant dense<0.000000e+00> : vector<16xf32>
    %12 = vector.multi_reduction <add>, %11, %cst_6 [1] : vector<16x32xf32> to vector<16xf32>
    %13 = vector.shape_cast %12 : vector<16xf32> to vector<16x1xf32>
    %cst_7 = arith.constant 3.200000e+01 : f32
    %14 = vector.broadcast %cst_7 : f32 to vector<16x1xf32>
    %15 = arith.divf %13, %14 : vector<16x1xf32>
    %16 = vector.broadcast %8 : vector<16x1xf32> to vector<16x32xf32>
    %17 = arith.subf %0, %16 : vector<16x32xf32>
    %cst_8 = arith.constant 9.99999974E-6 : f32
    %18 = vector.broadcast %cst_8 : f32 to vector<16x1xf32>
    %19 = arith.addf %15, %18 : vector<16x1xf32>
    %20 = math.rsqrt %19 : vector<16x1xf32>
    %21 = vector.broadcast %20 : vector<16x1xf32> to vector<16x32xf32>
    %22 = arith.mulf %17, %21 : vector<16x32xf32>
    %23 = vector.broadcast %3 : vector<1x32xf32> to vector<16x32xf32>
    %24 = arith.mulf %22, %23 : vector<16x32xf32>
    %25 = vector.broadcast %4 : vector<1x32xf32> to vector<16x32xf32>
    %26 = arith.addf %24, %25 : vector<16x32xf32>
    %c0_9 = arith.constant 0 : index
    %c0_10 = arith.constant 0 : index
    %27 = vector.load %arg3[%c0_9, %c0_10] : memref<272x128xf32, #tpu.memory_space<vmem>>, vector<32x96xf32>
    %cst_11 = arith.constant dense<0.000000e+00> : vector<16x96xf32>
    %28 = tpu.matmul %26, %27, %cst_11 {dimension_numbers = #tpu.dot_dimension_numbers<[1], [0], [0], [1], [0, 0, 1, 1], [], []>} : vector<16x32xf32>, vector<32x96xf32>, vector<16x96xf32> -> vector<16x96xf32>
    %29 = vector.extract_strided_slice %28 {offsets = [0, 0], sizes = [16, 8], strides = [1, 1]} : vector<16x96xf32> to vector<16x8xf32>
    %30 = vector.shape_cast %29 : vector<16x8xf32> to vector<1x16x8xf32>
    %31 = vector.extract_strided_slice %28 {offsets = [0, 8], sizes = [16, 8], strides = [1, 1]} : vector<16x96xf32> to vector<16x8xf32>
    %32 = vector.shape_cast %31 : vector<16x8xf32> to vector<1x16x8xf32>
    %33 = vector.extract_strided_slice %28 {offsets = [0, 16], sizes = [16, 8], strides = [1, 1]} : vector<16x96xf32> to vector<16x8xf32>
    %34 = vector.shape_cast %33 : vector<16x8xf32> to vector<1x16x8xf32>
    %35 = vector.extract_strided_slice %28 {offsets = [0, 24], sizes = [16, 8], strides = [1, 1]} : vector<16x96xf32> to vector<16x8xf32>
    %36 = vector.shape_cast %35 : vector<16x8xf32> to vector<1x16x8xf32>
    %37 = tpu.concatenate %30, %32, %34, %36 in 0 : vector<1x16x8xf32>, vector<1x16x8xf32>, vector<1x16x8xf32>, vector<1x16x8xf32> -> vector<4x16x8xf32>
    %38 = vector.extract_strided_slice %28 {offsets = [0, 32], sizes = [16, 8], strides = [1, 1]} : vector<16x96xf32> to vector<16x8xf32>
    %39 = vector.shape_cast %38 : vector<16x8xf32> to vector<1x16x8xf32>
    %40 = vector.extract_strided_slice %28 {offsets = [0, 40], sizes = [16, 8], strides = [1, 1]} : vector<16x96xf32> to vector<16x8xf32>
    %41 = vector.shape_cast %40 : vector<16x8xf32> to vector<1x16x8xf32>
    %42 = vector.extract_strided_slice %28 {offsets = [0, 48], sizes = [16, 8], strides = [1, 1]} : vector<16x96xf32> to vector<16x8xf32>
    %43 = vector.shape_cast %42 : vector<16x8xf32> to vector<1x16x8xf32>
    %44 = vector.extract_strided_slice %28 {offsets = [0, 56], sizes = [16, 8], strides = [1, 1]} : vector<16x96xf32> to vector<16x8xf32>
    %45 = vector.shape_cast %44 : vector<16x8xf32> to vector<1x16x8xf32>
    %46 = tpu.concatenate %39, %41, %43, %45 in 0 : vector<1x16x8xf32>, vector<1x16x8xf32>, vector<1x16x8xf32>, vector<1x16x8xf32> -> vector<4x16x8xf32>
    %47 = vector.extract_strided_slice %28 {offsets = [0, 64], sizes = [16, 8], strides = [1, 1]} : vector<16x96xf32> to vector<16x8xf32>
    %48 = vector.shape_cast %47 : vector<16x8xf32> to vector<1x16x8xf32>
    %49 = vector.extract_strided_slice %28 {offsets = [0, 72], sizes = [16, 8], strides = [1, 1]} : vector<16x96xf32> to vector<16x8xf32>
    %50 = vector.shape_cast %49 : vector<16x8xf32> to vector<1x16x8xf32>
    %51 = vector.extract_strided_slice %28 {offsets = [0, 80], sizes = [16, 8], strides = [1, 1]} : vector<16x96xf32> to vector<16x8xf32>
    %52 = vector.shape_cast %51 : vector<16x8xf32> to vector<1x16x8xf32>
    %53 = vector.extract_strided_slice %28 {offsets = [0, 88], sizes = [16, 8], strides = [1, 1]} : vector<16x96xf32> to vector<16x8xf32>
    %54 = vector.shape_cast %53 : vector<16x8xf32> to vector<1x16x8xf32>
    %55 = tpu.concatenate %48, %50, %52, %54 in 0 : vector<1x16x8xf32>, vector<1x16x8xf32>, vector<1x16x8xf32>, vector<1x16x8xf32> -> vector<4x16x8xf32>
    "tpu.trace_start"() <{level = 10 : i32, message = "hnd,hmd->hnm"}> : () -> ()
    %cst_12 = arith.constant dense<0.000000e+00> : vector<4x16x16xf32>
    %56 = tpu.matmul %37, %46, %cst_12 {dimension_numbers = #tpu.dot_dimension_numbers<[2], [2], [1], [1], [0, 0, 0, 1, 1, 1], [0], [0]>} : vector<4x16x8xf32>, vector<4x16x8xf32>, vector<4x16x16xf32> -> vector<4x16x16xf32>
    "tpu.trace_stop"() : () -> ()
    %cst_13 = arith.constant dense<0xFF800000> : vector<4x16xf32>
    %57 = vector.multi_reduction <maximumf>, %56, %cst_13 [2] : vector<4x16x16xf32> to vector<4x16xf32>
    %58 = vector.shape_cast %57 : vector<4x16xf32> to vector<4x16x1xf32>
    %59 = vector.broadcast %58 : vector<4x16x1xf32> to vector<4x16x16xf32>
    %60 = arith.subf %56, %59 : vector<4x16x16xf32>
    %61 = math.exp %60 : vector<4x16x16xf32>
    %cst_14 = arith.constant dense<0.000000e+00> : vector<4x16xf32>
    %62 = vector.multi_reduction <add>, %61, %cst_14 [2] : vector<4x16x16xf32> to vector<4x16xf32>
    %63 = vector.shape_cast %62 : vector<4x16xf32> to vector<4x16x1xf32>
    %64 = tpu.reciprocal %63 : vector<4x16x1xf32> -> vector<4x16x1xf32>
    %65 = vector.broadcast %64 : vector<4x16x1xf32> to vector<4x16x16xf32>
    %66 = arith.mulf %61, %65 : vector<4x16x16xf32>
    "tpu.trace_start"() <{level = 10 : i32, message = "hnm,hmd->hnd"}> : () -> ()
    %cst_15 = arith.constant dense<0.000000e+00> : vector<4x16x8xf32>
    %67 = tpu.matmul %66, %55, %cst_15 {dimension_numbers = #tpu.dot_dimension_numbers<[2], [1], [1], [2], [0, 0, 0, 1, 1, 2], [0], [0]>} : vector<4x16x16xf32>, vector<4x16x8xf32>, vector<4x16x8xf32> -> vector<4x16x8xf32>
    "tpu.trace_stop"() : () -> ()
    %68 = vector.extract_strided_slice %67 {offsets = [0, 0, 0], sizes = [1, 16, 8], strides = [1, 1, 1]} : vector<4x16x8xf32> to vector<1x16x8xf32>
    %69 = vector.shape_cast %68 : vector<1x16x8xf32> to vector<16x8xf32>
    %70 = vector.extract_strided_slice %67 {offsets = [1, 0, 0], sizes = [1, 16, 8], strides = [1, 1, 1]} : vector<4x16x8xf32> to vector<1x16x8xf32>
    %71 = vector.shape_cast %70 : vector<1x16x8xf32> to vector<16x8xf32>
    %72 = vector.extract_strided_slice %67 {offsets = [2, 0, 0], sizes = [1, 16, 8], strides = [1, 1, 1]} : vector<4x16x8xf32> to vector<1x16x8xf32>
    %73 = vector.shape_cast %72 : vector<1x16x8xf32> to vector<16x8xf32>
    %74 = vector.extract_strided_slice %67 {offsets = [3, 0, 0], sizes = [1, 16, 8], strides = [1, 1, 1]} : vector<4x16x8xf32> to vector<1x16x8xf32>
    %75 = vector.shape_cast %74 : vector<1x16x8xf32> to vector<16x8xf32>
    %76 = tpu.concatenate %69, %71, %73, %75 in 1 : vector<16x8xf32>, vector<16x8xf32>, vector<16x8xf32>, vector<16x8xf32> -> vector<16x32xf32>
    %c32 = arith.constant 32 : index
    %c0_16 = arith.constant 0 : index
    %77 = vector.load %arg3[%c32, %c0_16] : memref<272x128xf32, #tpu.memory_space<vmem>>, vector<32x32xf32>
    %cst_17 = arith.constant dense<0.000000e+00> : vector<16x32xf32>
    %78 = tpu.matmul %76, %77, %cst_17 {dimension_numbers = #tpu.dot_dimension_numbers<[1], [0], [0], [1], [0, 0, 1, 1], [], []>} : vector<16x32xf32>, vector<32x32xf32>, vector<16x32xf32> -> vector<16x32xf32>
    %79 = arith.addf %0, %78 : vector<16x32xf32>
    %80 = vector.extract_strided_slice %2 {offsets = [6, 0], sizes = [1, 32], strides = [1, 1]} : vector<11x128xf32> to vector<1x32xf32>
    %81 = vector.broadcast %80 : vector<1x32xf32> to vector<16x32xf32>
    %82 = arith.addf %79, %81 : vector<16x32xf32>
    %83 = vector.extract_strided_slice %2 {offsets = [2, 0], sizes = [1, 32], strides = [1, 1]} : vector<11x128xf32> to vector<1x32xf32>
    %84 = vector.extract_strided_slice %2 {offsets = [3, 0], sizes = [1, 32], strides = [1, 1]} : vector<11x128xf32> to vector<1x32xf32>
    %cst_18 = arith.constant dense<0.000000e+00> : vector<16xf32>
    %85 = vector.multi_reduction <add>, %82, %cst_18 [1] : vector<16x32xf32> to vector<16xf32>
    %86 = vector.shape_cast %85 : vector<16xf32> to vector<16x1xf32>
    %cst_19 = arith.constant 3.200000e+01 : f32
    %87 = vector.broadcast %cst_19 : f32 to vector<16x1xf32>
    %88 = arith.divf %86, %87 : vector<16x1xf32>
    %89 = vector.broadcast %88 : vector<16x1xf32> to vector<16x32xf32>
    %90 = arith.subf %82, %89 : vector<16x32xf32>
    %91 = arith.mulf %90, %90 : vector<16x32xf32>
    %cst_20 = arith.constant dense<0.000000e+00> : vector<16xf32>
    %92 = vector.multi_reduction <add>, %91, %cst_20 [1] : vector<16x32xf32> to vector<16xf32>
    %93 = vector.shape_cast %92 : vector<16xf32> to vector<16x1xf32>
    %cst_21 = arith.constant 3.200000e+01 : f32
    %94 = vector.broadcast %cst_21 : f32 to vector<16x1xf32>
    %95 = arith.divf %93, %94 : vector<16x1xf32>
    %96 = vector.broadcast %88 : vector<16x1xf32> to vector<16x32xf32>
    %97 = arith.subf %82, %96 : vector<16x32xf32>
    %cst_22 = arith.constant 9.99999974E-6 : f32
    %98 = vector.broadcast %cst_22 : f32 to vector<16x1xf32>
    %99 = arith.addf %95, %98 : vector<16x1xf32>
    %100 = math.rsqrt %99 : vector<16x1xf32>
    %101 = vector.broadcast %100 : vector<16x1xf32> to vector<16x32xf32>
    %102 = arith.mulf %97, %101 : vector<16x32xf32>
    %103 = vector.broadcast %83 : vector<1x32xf32> to vector<16x32xf32>
    %104 = arith.mulf %102, %103 : vector<16x32xf32>
    %105 = vector.broadcast %84 : vector<1x32xf32> to vector<16x32xf32>
    %106 = arith.addf %104, %105 : vector<16x32xf32>
    %c64 = arith.constant 64 : index
    %c0_23 = arith.constant 0 : index
    %107 = vector.load %arg3[%c64, %c0_23] : memref<272x128xf32, #tpu.memory_space<vmem>>, vector<32x32xf32>
    %cst_24 = arith.constant dense<0.000000e+00> : vector<16x32xf32>
    %108 = tpu.matmul %106, %107, %cst_24 {dimension_numbers = #tpu.dot_dimension_numbers<[1], [0], [0], [1], [0, 0, 1, 1], [], []>} : vector<16x32xf32>, vector<32x32xf32>, vector<16x32xf32> -> vector<16x32xf32>
    %c96 = arith.constant 96 : index
    %c0_25 = arith.constant 0 : index
    %109 = vector.load %arg3[%c96, %c0_25] : memref<272x128xf32, #tpu.memory_space<vmem>>, vector<32x64xf32>
    %cst_26 = arith.constant dense<0.000000e+00> : vector<8x64xf32>
    %110 = tpu.matmul %1, %109, %cst_26 {dimension_numbers = #tpu.dot_dimension_numbers<[1], [0], [0], [1], [0, 0, 1, 1], [], []>} : vector<8x32xf32>, vector<32x64xf32>, vector<8x64xf32> -> vector<8x64xf32>
    %111 = vector.extract_strided_slice %108 {offsets = [0, 0], sizes = [16, 8], strides = [1, 1]} : vector<16x32xf32> to vector<16x8xf32>
    %112 = vector.shape_cast %111 : vector<16x8xf32> to vector<1x16x8xf32>
    %113 = vector.extract_strided_slice %108 {offsets = [0, 8], sizes = [16, 8], strides = [1, 1]} : vector<16x32xf32> to vector<16x8xf32>
    %114 = vector.shape_cast %113 : vector<16x8xf32> to vector<1x16x8xf32>
    %115 = vector.extract_strided_slice %108 {offsets = [0, 16], sizes = [16, 8], strides = [1, 1]} : vector<16x32xf32> to vector<16x8xf32>
    %116 = vector.shape_cast %115 : vector<16x8xf32> to vector<1x16x8xf32>
    %117 = vector.extract_strided_slice %108 {offsets = [0, 24], sizes = [16, 8], strides = [1, 1]} : vector<16x32xf32> to vector<16x8xf32>
    %118 = vector.shape_cast %117 : vector<16x8xf32> to vector<1x16x8xf32>
    %119 = tpu.concatenate %112, %114, %116, %118 in 0 : vector<1x16x8xf32>, vector<1x16x8xf32>, vector<1x16x8xf32>, vector<1x16x8xf32> -> vector<4x16x8xf32>
    %120 = vector.extract_strided_slice %110 {offsets = [0, 0], sizes = [8, 8], strides = [1, 1]} : vector<8x64xf32> to vector<8x8xf32>
    %121 = vector.shape_cast %120 : vector<8x8xf32> to vector<1x8x8xf32>
    %122 = vector.extract_strided_slice %110 {offsets = [0, 8], sizes = [8, 8], strides = [1, 1]} : vector<8x64xf32> to vector<8x8xf32>
    %123 = vector.shape_cast %122 : vector<8x8xf32> to vector<1x8x8xf32>
    %124 = vector.extract_strided_slice %110 {offsets = [0, 16], sizes = [8, 8], strides = [1, 1]} : vector<8x64xf32> to vector<8x8xf32>
    %125 = vector.shape_cast %124 : vector<8x8xf32> to vector<1x8x8xf32>
    %126 = vector.extract_strided_slice %110 {offsets = [0, 24], sizes = [8, 8], strides = [1, 1]} : vector<8x64xf32> to vector<8x8xf32>
    %127 = vector.shape_cast %126 : vector<8x8xf32> to vector<1x8x8xf32>
    %128 = tpu.concatenate %121, %123, %125, %127 in 0 : vector<1x8x8xf32>, vector<1x8x8xf32>, vector<1x8x8xf32>, vector<1x8x8xf32> -> vector<4x8x8xf32>
    %129 = vector.extract_strided_slice %110 {offsets = [0, 32], sizes = [8, 8], strides = [1, 1]} : vector<8x64xf32> to vector<8x8xf32>
    %130 = vector.shape_cast %129 : vector<8x8xf32> to vector<1x8x8xf32>
    %131 = vector.extract_strided_slice %110 {offsets = [0, 40], sizes = [8, 8], strides = [1, 1]} : vector<8x64xf32> to vector<8x8xf32>
    %132 = vector.shape_cast %131 : vector<8x8xf32> to vector<1x8x8xf32>
    %133 = vector.extract_strided_slice %110 {offsets = [0, 48], sizes = [8, 8], strides = [1, 1]} : vector<8x64xf32> to vector<8x8xf32>
    %134 = vector.shape_cast %133 : vector<8x8xf32> to vector<1x8x8xf32>
    %135 = vector.extract_strided_slice %110 {offsets = [0, 56], sizes = [8, 8], strides = [1, 1]} : vector<8x64xf32> to vector<8x8xf32>
    %136 = vector.shape_cast %135 : vector<8x8xf32> to vector<1x8x8xf32>
    %137 = tpu.concatenate %130, %132, %134, %136 in 0 : vector<1x8x8xf32>, vector<1x8x8xf32>, vector<1x8x8xf32>, vector<1x8x8xf32> -> vector<4x8x8xf32>
    "tpu.trace_start"() <{level = 10 : i32, message = "hnd,hmd->hnm"}> : () -> ()
    %cst_27 = arith.constant dense<0.000000e+00> : vector<4x16x8xf32>
    %138 = tpu.matmul %119, %128, %cst_27 {dimension_numbers = #tpu.dot_dimension_numbers<[2], [2], [1], [1], [0, 0, 0, 1, 1, 1], [0], [0]>} : vector<4x16x8xf32>, vector<4x8x8xf32>, vector<4x16x8xf32> -> vector<4x16x8xf32>
    "tpu.trace_stop"() : () -> ()
    %cst_28 = arith.constant dense<0xFF800000> : vector<4x16xf32>
    %139 = vector.multi_reduction <maximumf>, %138, %cst_28 [2] : vector<4x16x8xf32> to vector<4x16xf32>
    %140 = vector.shape_cast %139 : vector<4x16xf32> to vector<4x16x1xf32>
    %141 = vector.broadcast %140 : vector<4x16x1xf32> to vector<4x16x8xf32>
    %142 = arith.subf %138, %141 : vector<4x16x8xf32>
    %143 = math.exp %142 : vector<4x16x8xf32>
    %cst_29 = arith.constant dense<0.000000e+00> : vector<4x16xf32>
    %144 = vector.multi_reduction <add>, %143, %cst_29 [2] : vector<4x16x8xf32> to vector<4x16xf32>
    %145 = vector.shape_cast %144 : vector<4x16xf32> to vector<4x16x1xf32>
    %146 = tpu.reciprocal %145 : vector<4x16x1xf32> -> vector<4x16x1xf32>
    %147 = vector.broadcast %146 : vector<4x16x1xf32> to vector<4x16x8xf32>
    %148 = arith.mulf %143, %147 : vector<4x16x8xf32>
    "tpu.trace_start"() <{level = 10 : i32, message = "hnm,hmd->hnd"}> : () -> ()
    %cst_30 = arith.constant dense<0.000000e+00> : vector<4x16x8xf32>
    %149 = tpu.matmul %148, %137, %cst_30 {dimension_numbers = #tpu.dot_dimension_numbers<[2], [1], [1], [2], [0, 0, 0, 1, 1, 2], [0], [0]>} : vector<4x16x8xf32>, vector<4x8x8xf32>, vector<4x16x8xf32> -> vector<4x16x8xf32>
    "tpu.trace_stop"() : () -> ()
    %150 = vector.extract_strided_slice %149 {offsets = [0, 0, 0], sizes = [1, 16, 8], strides = [1, 1, 1]} : vector<4x16x8xf32> to vector<1x16x8xf32>
    %151 = vector.shape_cast %150 : vector<1x16x8xf32> to vector<16x8xf32>
    %152 = vector.extract_strided_slice %149 {offsets = [1, 0, 0], sizes = [1, 16, 8], strides = [1, 1, 1]} : vector<4x16x8xf32> to vector<1x16x8xf32>
    %153 = vector.shape_cast %152 : vector<1x16x8xf32> to vector<16x8xf32>
    %154 = vector.extract_strided_slice %149 {offsets = [2, 0, 0], sizes = [1, 16, 8], strides = [1, 1, 1]} : vector<4x16x8xf32> to vector<1x16x8xf32>
    %155 = vector.shape_cast %154 : vector<1x16x8xf32> to vector<16x8xf32>
    %156 = vector.extract_strided_slice %149 {offsets = [3, 0, 0], sizes = [1, 16, 8], strides = [1, 1, 1]} : vector<4x16x8xf32> to vector<1x16x8xf32>
    %157 = vector.shape_cast %156 : vector<1x16x8xf32> to vector<16x8xf32>
    %158 = tpu.concatenate %151, %153, %155, %157 in 1 : vector<16x8xf32>, vector<16x8xf32>, vector<16x8xf32>, vector<16x8xf32> -> vector<16x32xf32>
    %c128 = arith.constant 128 : index
    %c0_31 = arith.constant 0 : index
    %159 = vector.load %arg3[%c128, %c0_31] : memref<272x128xf32, #tpu.memory_space<vmem>>, vector<32x32xf32>
    %cst_32 = arith.constant dense<0.000000e+00> : vector<16x32xf32>
    %160 = tpu.matmul %158, %159, %cst_32 {dimension_numbers = #tpu.dot_dimension_numbers<[1], [0], [0], [1], [0, 0, 1, 1], [], []>} : vector<16x32xf32>, vector<32x32xf32>, vector<16x32xf32> -> vector<16x32xf32>
    %161 = arith.addf %82, %160 : vector<16x32xf32>
    %162 = vector.extract_strided_slice %2 {offsets = [7, 0], sizes = [1, 32], strides = [1, 1]} : vector<11x128xf32> to vector<1x32xf32>
    %163 = vector.broadcast %162 : vector<1x32xf32> to vector<16x32xf32>
    %164 = arith.addf %161, %163 : vector<16x32xf32>
    %165 = vector.extract_strided_slice %2 {offsets = [4, 0], sizes = [1, 32], strides = [1, 1]} : vector<11x128xf32> to vector<1x32xf32>
    %166 = vector.extract_strided_slice %2 {offsets = [5, 0], sizes = [1, 32], strides = [1, 1]} : vector<11x128xf32> to vector<1x32xf32>
    %cst_33 = arith.constant dense<0.000000e+00> : vector<16xf32>
    %167 = vector.multi_reduction <add>, %164, %cst_33 [1] : vector<16x32xf32> to vector<16xf32>
    %168 = vector.shape_cast %167 : vector<16xf32> to vector<16x1xf32>
    %cst_34 = arith.constant 3.200000e+01 : f32
    %169 = vector.broadcast %cst_34 : f32 to vector<16x1xf32>
    %170 = arith.divf %168, %169 : vector<16x1xf32>
    %171 = vector.broadcast %170 : vector<16x1xf32> to vector<16x32xf32>
    %172 = arith.subf %164, %171 : vector<16x32xf32>
    %173 = arith.mulf %172, %172 : vector<16x32xf32>
    %cst_35 = arith.constant dense<0.000000e+00> : vector<16xf32>
    %174 = vector.multi_reduction <add>, %173, %cst_35 [1] : vector<16x32xf32> to vector<16xf32>
    %175 = vector.shape_cast %174 : vector<16xf32> to vector<16x1xf32>
    %cst_36 = arith.constant 3.200000e+01 : f32
    %176 = vector.broadcast %cst_36 : f32 to vector<16x1xf32>
    %177 = arith.divf %175, %176 : vector<16x1xf32>
    %178 = vector.broadcast %170 : vector<16x1xf32> to vector<16x32xf32>
    %179 = arith.subf %164, %178 : vector<16x32xf32>
    %cst_37 = arith.constant 9.99999974E-6 : f32
    %180 = vector.broadcast %cst_37 : f32 to vector<16x1xf32>
    %181 = arith.addf %177, %180 : vector<16x1xf32>
    %182 = math.rsqrt %181 : vector<16x1xf32>
    %183 = vector.broadcast %182 : vector<16x1xf32> to vector<16x32xf32>
    %184 = arith.mulf %179, %183 : vector<16x32xf32>
    %185 = vector.broadcast %165 : vector<1x32xf32> to vector<16x32xf32>
    %186 = arith.mulf %184, %185 : vector<16x32xf32>
    %187 = vector.broadcast %166 : vector<1x32xf32> to vector<16x32xf32>
    %188 = arith.addf %186, %187 : vector<16x32xf32>
    %c160 = arith.constant 160 : index
    %c0_38 = arith.constant 0 : index
    %189 = vector.load %arg3[%c160, %c0_38] : memref<272x128xf32, #tpu.memory_space<vmem>>, vector<32x48xf32>
    %cst_39 = arith.constant dense<0.000000e+00> : vector<16x48xf32>
    %190 = tpu.matmul %188, %189, %cst_39 {dimension_numbers = #tpu.dot_dimension_numbers<[1], [0], [0], [1], [0, 0, 1, 1], [], []>} : vector<16x32xf32>, vector<32x48xf32>, vector<16x48xf32> -> vector<16x48xf32>
    %191 = vector.extract_strided_slice %2 {offsets = [9, 0], sizes = [1, 48], strides = [1, 1]} : vector<11x128xf32> to vector<1x48xf32>
    %192 = vector.broadcast %191 : vector<1x48xf32> to vector<16x48xf32>
    %193 = arith.addf %190, %192 : vector<16x48xf32>
    %c192 = arith.constant 192 : index
    %c0_40 = arith.constant 0 : index
    %194 = vector.load %arg3[%c192, %c0_40] : memref<272x128xf32, #tpu.memory_space<vmem>>, vector<32x48xf32>
    %cst_41 = arith.constant dense<0.000000e+00> : vector<16x48xf32>
    %195 = tpu.matmul %188, %194, %cst_41 {dimension_numbers = #tpu.dot_dimension_numbers<[1], [0], [0], [1], [0, 0, 1, 1], [], []>} : vector<16x32xf32>, vector<32x48xf32>, vector<16x48xf32> -> vector<16x48xf32>
    %196 = vector.extract_strided_slice %2 {offsets = [10, 0], sizes = [1, 48], strides = [1, 1]} : vector<11x128xf32> to vector<1x48xf32>
    %197 = vector.broadcast %196 : vector<1x48xf32> to vector<16x48xf32>
    %198 = arith.addf %195, %197 : vector<16x48xf32>
    %cst_42 = arith.constant 0.000000e+00 : f32
    %199 = vector.broadcast %cst_42 : f32 to vector<16x48xf32>
    %200 = arith.subf %199, %193 : vector<16x48xf32>
    %201 = math.exp %200 : vector<16x48xf32>
    %cst_43 = arith.constant 1.000000e+00 : f32
    %202 = vector.broadcast %cst_43 : f32 to vector<16x48xf32>
    %203 = arith.addf %202, %201 : vector<16x48xf32>
    %cst_44 = arith.constant 1.000000e+00 : f32
    %204 = vector.broadcast %cst_44 : f32 to vector<16x48xf32>
    %205 = arith.divf %204, %203 : vector<16x48xf32>
    %206 = arith.mulf %193, %205 : vector<16x48xf32>
    %207 = arith.mulf %206, %198 : vector<16x48xf32>
    %c224 = arith.constant 224 : index
    %c0_45 = arith.constant 0 : index
    %208 = vector.load %arg3[%c224, %c0_45] : memref<272x128xf32, #tpu.memory_space<vmem>>, vector<48x32xf32>
    %cst_46 = arith.constant dense<0.000000e+00> : vector<16x32xf32>
    %209 = tpu.matmul %207, %208, %cst_46 {dimension_numbers = #tpu.dot_dimension_numbers<[1], [0], [0], [1], [0, 0, 1, 1], [], []>} : vector<16x48xf32>, vector<48x32xf32>, vector<16x32xf32> -> vector<16x32xf32>
    %210 = vector.extract_strided_slice %2 {offsets = [8, 0], sizes = [1, 32], strides = [1, 1]} : vector<11x128xf32> to vector<1x32xf32>
    %211 = vector.broadcast %210 : vector<1x32xf32> to vector<16x32xf32>
    %212 = arith.addf %209, %211 : vector<16x32xf32>
    %213 = arith.addf %164, %212 : vector<16x32xf32>
    %c0_47 = arith.constant 0 : index
    %c0_48 = arith.constant 0 : index
    %214 = vector.load %arg5[%c0_47, %c0_48] : memref<16x32xf32, #tpu.memory_space<vmem>>, vector<16x32xf32>
    tpu.vector_store %arg5[%c0_47, %c0_48], %213 {strides = array<i32>} : memref<16x32xf32, #tpu.memory_space<vmem>>, vector<16x32xf32>,
    return
  }
  func.func @transform_0(%arg0: i32) -> (i32, i32) {
    %c0_i32 = arith.constant 0 : i32
    %c0_i32_0 = arith.constant 0 : i32
    return %arg0, %c0_i32 : i32, i32
  }
  func.func @transform_1(%arg0: i32) -> (i32, i32) {
    %c0_i32 = arith.constant 0 : i32
    %c0_i32_0 = arith.constant 0 : i32
    return %arg0, %c0_i32 : i32, i32
  }
  func.func @transform_2(%arg0: i32) -> (i32, i32) {
    %c0_i32 = arith.constant 0 : i32
    %c0_i32_0 = arith.constant 0 : i32
    %c0_i32_1 = arith.constant 0 : i32
    return %c0_i32, %c0_i32_0 : i32, i32
  }
  func.func @transform_3(%arg0: i32) -> (i32, i32) {
    %c0_i32 = arith.constant 0 : i32
    %c0_i32_0 = arith.constant 0 : i32
    %c0_i32_1 = arith.constant 0 : i32
    return %c0_i32, %c0_i32_0 : i32, i32
  }
  func.func @transform_4(%arg0: i32) -> (i32, i32) {
    %c0_i32 = arith.constant 0 : i32
    %c0_i32_0 = arith.constant 0 : i32
    return %arg0, %c0_i32 : i32, i32
  }
}

</mosaic_0001>

<llo_original>
// kernel: decoder_layer.1
$region0: #{decoder_layer.1}
  #allocation0 [shape = 'u32[]', space=smem, size = 0x4, offset = 0x4, fixed_abs, tag = 'smem constant byte address 0x4 - core index']
  #allocation1 [shape = 'u32[144,128]{1,0:T(1,128)}', space=vmem, size = 0x12000, scoped, tag = 'internal scratch']
  %s0 = inlined_call_operand.hbm [shape: f32[32,32], index: 0, kind: input, shape index: {}]
  %s1 = inlined_call_operand.hbm [shape: f32[16,32], index: 1, kind: input, shape index: {}]
  %s2 = inlined_call_operand.hbm [shape: f32[272,128], index: 2, kind: input, shape index: {}]
  %s3 = inlined_call_operand.hbm [shape: f32[11,128], index: 3, kind: input, shape index: {}]
  %s4 = inlined_call_operand.hbm [shape: f32[32,32], index: 4, kind: output, shape index: {}]
  %s5 = sld [smem:[#allocation0]]
  $region65: #{decoder_layer.1} parent=0
    _
  %s7 = ssub.s32 1, %s5
  %s8 = scalar_select 0, %s7, %s5
  $region1: #{decoder_layer.1} parent=0
    #allocation2 [shape = 'u8[16384]{0}', space=vmem, size = 0x4000, scoped, tag = 'input window, operand 0']
    #allocation3 [shape = 's32[2]{0}', space=sflag, size = 0x8, scoped, tag = 'scoped memory for decoder_layer.1']
    #allocation4 [shape = 's32[2]{0}', space=sflag, size = 0x8, scoped, tag = 'scoped memory for decoder_layer.1']
    #allocation5 [shape = 'u8[8192]{0}', space=vmem, size = 0x2000, scoped, tag = 'input window, operand 1']
    #allocation6 [shape = 's32[2]{0}', space=sflag, size = 0x8, scoped, tag = 'scoped memory for decoder_layer.1']
    #allocation7 [shape = 'u8[139264]{0}', space=vmem, size = 0x22000, scoped, tag = 'input window, operand 2, single buffered']
    #allocation8 [shape = 'u8[8192]{0}', space=vmem, size = 0x2000, scoped, tag = 'input window, operand 3, single buffered']
    #allocation9 [shape = 's32[1]{0}', space=sflag, size = 0x4, scoped, tag = 'scoped memory for decoder_layer.1']
    #allocation10 [shape = 'u8[16384]{0}', space=vmem, size = 0x4000, scoped, tag = 'output window, operand 0']
    %9 = vsyncpa [#allocation3], 0
    %s10 = scalar_lea.sflag [#allocation3], 1
    %11 = vsyncpa %s10, 0
    %12 = vsyncpa [#allocation6], 0
    %s13 = scalar_lea.sflag [#allocation6], 1
    %14 = vsyncpa %s13, 0
    %15 = vsyncpa [#allocation9], 0
    %16 = vsyncpa [#allocation4], 0
    %s17 = scalar_lea.sflag [#allocation4], 1
    %18 = vsyncpa %s17, 0
    loop: start=0, step=1, limit=4
    $region2: #{decoder_layer.1} parent=1 // loop_pre_header
      _
    $region3: #{decoder_layer.1} parent=1 // loop_header
      %s20 = sphi 0, %s24
      %p21 = scmp.ge.s32.totalorder %s20, 4
      %s30 = sphi 0, %s32
      %s33 = sphi 0, %s30
      %s34 = sphi 0, %s33
      %s50 = sphi 0, %s34
      %s56 = sphi 0, %s58
      %s59 = sphi 0, %s56
      %s60 = sphi 0, %s59
      %s76 = sphi 0, %s60
      %s80 = sphi 0, %s80
      %s82 = sphi 0, %s80
      %s83 = sphi 0, %s82
      %s97 = sphi 0, %s83
      %s101 = sphi 0, %s101
      %s103 = sphi 0, %s101
      %s104 = sphi 0, %s103
      %s118 = sphi 0, %s104
      %s124 = sphi 0, %s126
      %s127 = sphi 0, %s124
      %s128 = sphi 0, %s127
      %s144 = sphi 0, %s128
    $region4: #{decoder_layer.1} parent=1 // loop_header_branch
      %23 = sbr.rel (%p21) target = $region8
    $region5: #{decoder_layer.1} parent=1 // loop_body
      %s25 = ssub.s32 %s20, 1
      %s26 = ssub.s32 %s20, 2
      %s27 = sadd.s32 %s20, 1
      %s28 = ssub.s32 %s20, %s27
      %p29 = scmp.eq.s32.totalorder %s28, 0
      %s31 = sadd.s32 %s30, 1
      %s32 = scalar_select %p29, %s30, %s31
      %p35 = pneg %p29
      %p36 = scmp.eq.s32.totalorder %s20, 1
      %p37 = por %p35, %p36
      %p38 = scmp.ne.s32.totalorder %s30, %s33
      %p39 = scmp.eq.s32.totalorder %s20, 0
      %p40 = por %p38, %p39
      %p41 = scmp.ne.s32.totalorder %s30, %s33
      %p42 = scmp.eq.s32.totalorder %s25, 1
      %p43 = por %p41, %p42
      %p44 = scmp.ne.s32.totalorder %s33, %s34
      %p45 = scmp.eq.s32.totalorder %s25, 0
      %p46 = por %p44, %p45
      %p47 = scmp.ne.s32.totalorder %s33, %s34
      %p48 = scmp.eq.s32.totalorder %s26, 1
      %p49 = por %p47, %p48
      %p51 = scmp.ne.s32.totalorder %s34, %s50
      %p52 = scmp.eq.s32.totalorder %s26, 0
      %p53 = por %p51, %p52
      %s54 = ssub.s32 %s20, %s27
      %p55 = scmp.eq.s32.totalorder %s54, 0
      %s57 = sadd.s32 %s56, 1
      %s58 = scalar_select %p55, %s56, %s57
      %p61 = pneg %p55
      %p62 = scmp.eq.s32.totalorder %s20, 1
      %p63 = por %p61, %p62
      %p64 = scmp.ne.s32.totalorder %s56, %s59
      %p65 = scmp.eq.s32.totalorder %s20, 0
      %p66 = por %p64, %p65
      %p67 = scmp.ne.s32.totalorder %s56, %s59
      %p68 = scmp.eq.s32.totalorder %s25, 1
      %p69 = por %p67, %p68
      %p70 = scmp.ne.s32.totalorder %s59, %s60
      %p71 = scmp.eq.s32.totalorder %s25, 0
      %p72 = por %p70, %p71
      %p73 = scmp.ne.s32.totalorder %s59, %s60
      %p74 = scmp.eq.s32.totalorder %s26, 1
      %p75 = por %p73, %p74
      %p77 = scmp.ne.s32.totalorder %s60, %s76
      %p78 = scmp.eq.s32.totalorder %s26, 0
      %p79 = por %p77, %p78
      %s81 = sadd.s32 %s80, 1
      %p84 = scmp.eq.s32.totalorder %s20, 1
      %p85 = scmp.ne.s32.totalorder %s80, %s82
      %p86 = scmp.eq.s32.totalorder %s20, 0
      %p87 = por %p85, %p86
      %p88 = scmp.ne.s32.totalorder %s80, %s82
      %p89 = scmp.eq.s32.totalorder %s25, 1
      %p90 = por %p88, %p89
      %p91 = scmp.ne.s32.totalorder %s82, %s83
      %p92 = scmp.eq.s32.totalorder %s25, 0
      %p93 = por %p91, %p92
      %p94 = scmp.ne.s32.totalorder %s82, %s83
      %p95 = scmp.eq.s32.totalorder %s26, 1
      %p96 = por %p94, %p95
      %p98 = scmp.ne.s32.totalorder %s83, %s97
      %p99 = scmp.eq.s32.totalorder %s26, 0
      %p100 = por %p98, %p99
      %s102 = sadd.s32 %s101, 1
      %p105 = scmp.eq.s32.totalorder %s20, 1
      %p106 = scmp.ne.s32.totalorder %s101, %s103
      %p107 = scmp.eq.s32.totalorder %s20, 0
      %p108 = por %p106, %p107
      %p109 = scmp.ne.s32.totalorder %s101, %s103
      %p110 = scmp.eq.s32.totalorder %s25, 1
      %p111 = por %p109, %p110
      %p112 = scmp.ne.s32.totalorder %s103, %s104
      %p113 = scmp.eq.s32.totalorder %s25, 0
      %p114 = por %p112, %p113
      %p115 = scmp.ne.s32.totalorder %s103, %s104
      %p116 = scmp.eq.s32.totalorder %s26, 1
      %p117 = por %p115, %p116
      %p119 = scmp.ne.s32.totalorder %s104, %s118
      %p120 = scmp.eq.s32.totalorder %s26, 0
      %p121 = por %p119, %p120
      %s122 = ssub.s32 %s20, %s27
      %p123 = scmp.eq.s32.totalorder %s122, 0
      %s125 = sadd.s32 %s124, 1
      %s126 = scalar_select %p123, %s124, %s125
      %p129 = pneg %p123
      %p130 = scmp.eq.s32.totalorder %s20, 1
      %p131 = por %p129, %p130
      %p132 = scmp.ne.s32.totalorder %s124, %s127
      %p133 = scmp.eq.s32.totalorder %s20, 0
      %p134 = por %p132, %p133
      %p135 = scmp.ne.s32.totalorder %s124, %s127
      %p136 = scmp.eq.s32.totalorder %s25, 1
      %p137 = por %p135, %p136
      %p138 = scmp.ne.s32.totalorder %s127, %s128
      %p139 = scmp.eq.s32.totalorder %s25, 0
      %p140 = por %p138, %p139
      %p141 = scmp.ne.s32.totalorder %s127, %s128
      %p142 = scmp.eq.s32.totalorder %s26, 1
      %p143 = por %p141, %p142
      %p145 = scmp.ne.s32.totalorder %s128, %s144
      %p146 = scmp.eq.s32.totalorder %s26, 0
      %p147 = por %p145, %p146
      %p148 = scmp.le.s32.totalorder 1, %s20
      %p149 = scmp.lt.s32.totalorder %s20, 3
      %p150 = pnand %p148, %p149
      %p151 = pneg %p150
      // Predicated region
      $region9: #{decoder_layer.1} parent=5 // pred_check
        _
      $region10: #{decoder_layer.1} parent=5 // pred_check_branch
        %153 = sbr.rel (%p150) target = $region12
      $region11: #{decoder_layer.1} parent=5 // pred_region
        %s154 = ssub.s32 %s20, 1
        // Predicated region
        $region13: #{decoder_layer.1} parent=11 // pred_check
          %p155 = pneg %p93
        $region14: #{decoder_layer.1} parent=11 // pred_check_branch
          %157 = sbr.rel (%p155) target = $region16
        $region15: #{decoder_layer.1} parent=11 // pred_region
          %s159 = ssub.s32 4352, 4352
          %160 = vsyncadd [#allocation6], %s159
          %s161 = sshll.u32 [#allocation7], 4
          %s162 = int_to_ptr.vmem [resolvable:$true] %s161
          %167 = dma.hbm_to_vmem [thread:$0]  %s2, 4352, %s162, [#allocation6], 128, 128, 8
        $region16: #{decoder_layer.1} parent=11 // pred_fallthru
          _
        // Predicated region
        $region17: #{decoder_layer.1} parent=11 // pred_check
          %p168 = pneg %p114
        $region18: #{decoder_layer.1} parent=11 // pred_check_branch
          %170 = sbr.rel (%p168) target = $region20
        $region19: #{decoder_layer.1} parent=11 // pred_region
          %s172 = ssub.s32 256, 256
          %173 = vsyncadd [#allocation9], %s172
          %s174 = sshll.u32 [#allocation8], 4
          %s175 = int_to_ptr.vmem [resolvable:$true] %s174
          %180 = dma.hbm_to_vmem [thread:$0]  %s3, 256, %s175, [#allocation9], 128, 128, 8
        $region20: #{decoder_layer.1} parent=11 // pred_fallthru
          _
      $region12: #{decoder_layer.1} parent=5 // pred_fallthru
        _
      %p181 = scmp.lt.s32.totalorder %s20, 2
      // Predicated region
      $region21: #{decoder_layer.1} parent=5 // pred_check
        %p182 = pneg %p181
      $region22: #{decoder_layer.1} parent=5 // pred_check_branch
        %184 = sbr.rel (%p182) target = $region24
      $region23: #{decoder_layer.1} parent=5 // pred_region
        // Predicated region
        $region25: #{decoder_layer.1} parent=23 // pred_check
          %p185 = pneg %p40
        $region26: #{decoder_layer.1} parent=23 // pred_check_branch
          %187 = sbr.rel (%p185) target = $region28
        $region27: #{decoder_layer.1} parent=23 // pred_region
          %s188 = sand.u32 %s30, 1
          %s189 = scalar_lea.sflag [#allocation3], %s188
          %s190 = sand.u32 %s30, 1
          %s191 = smul.addr %s190, 16
          %s192 = scalar_lea.vmem [#allocation2], %s191
          %s193 = smul.u32 2, %s20
          %s195 = ssub.s32 256, 256
          %196 = vsyncadd %s189, %s195
          %s197 = smul.addr %s193, 128
          %s198 = scalar_lea.hbm %s0, %s197
          %s199 = sshll.u32 %s192, 4
          %s200 = int_to_ptr.vmem [resolvable:$true] %s199
          %205 = dma.hbm_to_vmem [thread:$0]  %s198, 256, %s200, %s189, 128, 128, 8
        $region28: #{decoder_layer.1} parent=23 // pred_fallthru
          _
        // Predicated region
        $region29: #{decoder_layer.1} parent=23 // pred_check
          %p206 = pneg %p66
        $region30: #{decoder_layer.1} parent=23 // pred_check_branch
          %208 = sbr.rel (%p206) target = $region32
        $region31: #{decoder_layer.1} parent=23 // pred_region
          %s209 = sand.u32 %s20, 1
          %s210 = scalar_lea.sflag [#allocation6], %s209
          %s211 = sand.u32 %s56, 1
          %s212 = smul.addr %s211, 8
          %s213 = scalar_lea.vmem [#allocation5], %s212
          %s215 = ssub.s32 128, 128
          %216 = vsyncadd %s210, %s215
          %s217 = smul.addr %s20, 128
          %s218 = scalar_lea.hbm %s1, %s217
          %s220 = sshll.u32 %s213, 4
          %s221 = int_to_ptr.vmem [resolvable:$true] %s220
          %223 = dma.hbm_to_vmem [thread:$0]  %s218, 128, %s221, %s210
        $region32: #{decoder_layer.1} parent=23 // pred_fallthru
          _
      $region24: #{decoder_layer.1} parent=5 // pred_fallthru
        _
      %p224 = scmp.le.s32.totalorder 1, %s20
      %p225 = scmp.lt.s32.totalorder %s20, 3
      %p226 = pnand %p224, %p225
      %p227 = pneg %p226
      // Predicated region
      $region33: #{decoder_layer.1} parent=5 // pred_check
        _
      $region34: #{decoder_layer.1} parent=5 // pred_check_branch
        %229 = sbr.rel (%p226) target = $region36
      $region35: #{decoder_layer.1} parent=5 // pred_region
        %s230 = ssub.s32 %s20, 1
        %s231 = sand.u32 %s33, 1
        %s232 = scalar_lea.sflag [#allocation3], %s231
        %s233 = sand.u32 %s33, 1
        %s234 = smul.addr %s233, 16
        %s235 = scalar_lea.vmem [#allocation2], %s234
        // Predicated region
        $region37: #{decoder_layer.1} parent=35 // pred_check
          %p236 = pneg %p46
        $region38: #{decoder_layer.1} parent=35 // pred_check_branch
          %238 = sbr.rel (%p236) target = $region40
        $region39: #{decoder_layer.1} parent=35 // pred_region
          %239 = dma.done %s232, 256
        $region40: #{decoder_layer.1} parent=35 // pred_fallthru
          _
        %s240 = sand.u32 %s25, 1
        %s241 = scalar_lea.sflag [#allocation6], %s240
        %s242 = sand.u32 %s59, 1
        %s243 = smul.addr %s242, 8
        %s244 = scalar_lea.vmem [#allocation5], %s243
        // Predicated region
        $region41: #{decoder_layer.1} parent=35 // pred_check
          %p245 = pneg %p72
        $region42: #{decoder_layer.1} parent=35 // pred_check_branch
          %247 = sbr.rel (%p245) target = $region44
        $region43: #{decoder_layer.1} parent=35 // pred_region
          %248 = dma.done %s241, 128
        $region44: #{decoder_layer.1} parent=35 // pred_fallthru
          _
        // Predicated region
        $region45: #{decoder_layer.1} parent=35 // pred_check
          %p249 = pneg %p93
        $region46: #{decoder_layer.1} parent=35 // pred_check_branch
          %251 = sbr.rel (%p249) target = $region48
        $region47: #{decoder_layer.1} parent=35 // pred_region
          %252 = dma.done [#allocation6], 4352
        $region48: #{decoder_layer.1} parent=35 // pred_fallthru
          _
        // Predicated region
        $region49: #{decoder_layer.1} parent=35 // pred_check
          %p253 = pneg %p114
        $region50: #{decoder_layer.1} parent=35 // pred_check_branch
          %255 = sbr.rel (%p253) target = $region52
        $region51: #{decoder_layer.1} parent=35 // pred_region
          %256 = dma.done [#allocation9], 256
        $region52: #{decoder_layer.1} parent=35 // pred_fallthru
          _
        %s257 = sand.u32 %s33, 1
        %s258 = scalar_lea.sflag [#allocation3], %s257
        %s259 = sand.u32 %s33, 1
        %s260 = smul.addr %s259, 16
        %s261 = scalar_lea.vmem [#allocation2], %s260
        %p262 = pneg %p46
        %p263 = pneg %p43
        %s264 = sand.u32 %s25, 1
        %s265 = scalar_lea.sflag [#allocation6], %s264
        %s266 = sand.u32 %s59, 1
        %s267 = smul.addr %s266, 8
        %s268 = scalar_lea.vmem [#allocation5], %s267
        %p269 = pneg %p72
        %p270 = pneg %p69
        %p271 = pneg %p93
        %p272 = pneg %p90
        %p273 = pneg %p114
        %p274 = pneg %p111
        %p275 = pneg %p140
        %p276 = pneg %p137
        %s277 = sand.u32 %s127, 1
        %s278 = scalar_lea.sflag [#allocation4], %s277
        %s279 = sand.u32 %s127, 1
        %s280 = smul.addr %s279, 16
        %s281 = scalar_lea.vmem [#allocation10], %s280
        %s282 = smul.u32 2, %s25
        %s283 = smul.u32 2, %s25
        %v284 = vld [vmem:[%s235] sm:$0xff]
        %v285 = vld [vmem:[%s235 + $0x8] sm:$0xff]
        %v286 = vld [vmem:[%s244] sm:$0xff]
        %v287 = vld [vmem:[#allocation8] sm:$0xff]
        %v288 = vld [vmem:[#allocation8 + $0x8] sm:$0x7]
        %vm289 = vcmask 261120
        %v290 = vsel %vm289, %v284, 0.0
        %291 = vadd.xlane.f32.xlu0 %v290
        %v292 = vpop.xlane.xlu0 %291
        %v293 = vsel %vm289, %v285, 0.0
        %294 = vadd.xlane.f32.xlu0 %v293
        %v295 = vpop.xlane.xlu0 %294
        %v296 = vrcp.pop 32.0
        %v297 = vmul.f32 %v292, %v296
        %v298 = vmul.f32 %v295, %v296
        %v299 = vsub.f32 %v284, %v297
        %v300 = vsub.f32 %v285, %v298
        %v301 = vmul.f32 %v299, %v299
        %v302 = vmul.f32 %v300, %v300
        %v303 = vsel %vm289, %v301, 0.0
        %304 = vadd.xlane.f32.xlu0 %v303
        %v305 = vpop.xlane.xlu0 %304
        %v306 = vsel %vm289, %v302, 0.0
        %307 = vadd.xlane.f32.xlu0 %v306
        %v308 = vpop.xlane.xlu0 %307
        %v309 = vmul.f32 %v305, %v296
        %v310 = vmul.f32 %v308, %v296
        %v311 = vadd.f32 %v309, 1e-05
        %v312 = vadd.f32 %v310, 1e-05
        %v313 = vrsqrt.pop %v311
        %v314 = vrsqrt.pop %v312
        %v315 = vmul.f32 %v299, %v313
        %v316 = vmul.f32 %v300, %v314
        %v317 = vlaneseq
        %v318 = vshrl.u32 %v317, 7
        %v319 = vsub.s32 0, %v318
        %v320 = vrot.slane %v287, %v319
        %v321 = vmul.f32 %v315, %v320
        %v322 = vmul.f32 %v316, %v320
        %v323 = vlaneseq
        %v324 = vshrl.u32 %v323, 7
        %v325 = vsub.s32 1, %v324
        %v326 = vrot.slane %v287, %v325
        %v327 = vadd.f32 %v321, %v326
        %v328 = vadd.f32 %v322, %v326
        %v329 = vld [vmem:[#allocation7] sm:$0xff]
        %v330 = vld [vmem:[#allocation7 + $0x8] sm:$0xff]
        %v331 = vld [vmem:[#allocation7 + $0x10] sm:$0xff]
        %v332 = vld [vmem:[#allocation7 + $0x18] sm:$0xff]
        %v334 = vsel %vm289, %v327, 0
        %v337 = vsel %vm289, %v328, 0
        %339 = vmatprep.subr.mxu0 0.0
        %340 = vmatpush1.msra.mxu0 0.0
        %341 = vmatprep.subr.mxu0 0.0
        %342 = vmatpush1.msra.mxu0 0.0
        %343 = vmatprep.subr.mxu0 0.0
        %344 = vmatpush1.msra.mxu0 0.0
        %345 = vmatprep.subr.mxu0 0.0
        %346 = vmatpush1.msra.mxu0 0.0
        %347 = vmatprep.subr.mxu0 0.0
        %348 = vmatpush1.msra.mxu0 0.0
        %349 = vmatprep.subr.mxu0 0.0
        %350 = vmatpush1.msra.mxu0 0.0
        %351 = vmatprep.subr.mxu0 0.0
        %352 = vmatpush1.msra.mxu0 0.0
        %353 = vmatprep.subr.mxu0 0.0
        %354 = vmatpush1.msra.mxu0 0.0
        %355 = vmatprep.subr.mxu0 0.0
        %356 = vmatpush1.msra.mxu0 0.0
        %357 = vmatprep.subr.mxu0 0.0
        %358 = vmatpush1.msra.mxu0 0.0
        %359 = vmatprep.subr.mxu0 0.0
        %360 = vmatpush1.msra.mxu0 0.0
        %361 = vmatprep.subr.mxu0 0.0
        %362 = vmatpush1.msra.mxu0 0.0
        %363 = vmatprep.subr.mxu0 0.0
        %364 = vmatpush1.msra.mxu0 %v332
        %365 = vmatprep.subr.mxu0 0.0
        %366 = vmatpush1.msra.mxu0 %v331
        %367 = vmatprep.subr.mxu0 0.0
        %368 = vmatpush1.msra.mxu0 %v330
        %369 = vmatprep.subr.mxu0 0.0
        %370 = vmatpush1.msra.mxu0 %v329
        %371 = vmatprep.subr.mxu0 0.0
        %372 = vmatpush2.msra.mxu0 0.0
        %373 = vmatprep.subr.mxu0 0.0
        %374 = vmatpush2.msra.mxu0 0.0
        %375 = vmatprep.subr.mxu0 0.0
        %376 = vmatpush2.msra.mxu0 0.0
        %377 = vmatprep.subr.mxu0 0.0
        %378 = vmatpush2.msra.mxu0 0.0
        %379 = vmatprep.subr.mxu0 0.0
        %380 = vmatpush2.msra.mxu0 0.0
        %381 = vmatprep.subr.mxu0 0.0
        %382 = vmatpush2.msra.mxu0 0.0
        %383 = vmatprep.subr.mxu0 0.0
        %384 = vmatpush2.msra.mxu0 0.0
        %385 = vmatprep.subr.mxu0 0.0
        %386 = vmatpush2.msra.mxu0 0.0
        %387 = vmatprep.subr.mxu0 0.0
        %388 = vmatpush2.msra.mxu0 0.0
        %389 = vmatprep.subr.mxu0 0.0
        %390 = vmatpush2.msra.mxu0 0.0
        %391 = vmatprep.subr.mxu0 0.0
        %392 = vmatpush2.msra.mxu0 0.0
        %393 = vmatprep.subr.mxu0 0.0
        %394 = vmatpush2.msra.mxu0 0.0
        %395 = vmatprep.subr.mxu0 0.0
        %396 = vmatpush2.msra.mxu0 0.0
        %397 = vmatprep.subr.mxu0 0.0
        %398 = vmatpush2.msra.mxu0 0.0
        %399 = vmatprep.subr.mxu0 0.0
        %400 = vmatpush2.msra.mxu0 0.0
        %401 = vmatprep.subr.mxu0 0.0
        %402 = vmatpush2.msra.mxu0 0.0
        %403 = vmatprep.mubr.f32.mxu0 0.0
        %404 = vmatmul.mubr.f32.gmra.mxu0 %v334
        %v405 = vpop.f32.mrf.mxu0
        %v406 = vadd.f32 0.0, %v405
        %v407 = vpop.f32.mrf.mxu0
        %408 = vmatprep.mubr.f32.mxu0 0.0
        %409 = vmatmul.mubr.f32.gmra.mxu0 %v337
        %v410 = vpop.f32.mrf.mxu0
        %v411 = vadd.f32 0.0, %v410
        %v412 = vpop.f32.mrf.mxu0
        %413 = vdwg.mxu0
        %416 = vrot.lane.b32.xlu0 %v406, 120
        %v417 = vpop.permute.xlu0 %416
        %418 = vrot.lane.b32.xlu0 %v411, 120
        %v419 = vpop.permute.xlu0 %418
        %420 = vrot.lane.b32.xlu0 %v406, 112
        %v421 = vpop.permute.xlu0 %420
        %422 = vrot.lane.b32.xlu0 %v411, 112
        %v423 = vpop.permute.xlu0 %422
        %424 = vrot.lane.b32.xlu0 %v406, 104
        %v425 = vpop.permute.xlu0 %424
        %426 = vrot.lane.b32.xlu0 %v411, 104
        %v427 = vpop.permute.xlu0 %426
        %428 = vrot.lane.b32.xlu0 %v406, 96
        %v429 = vpop.permute.xlu0 %428
        %430 = vrot.lane.b32.xlu0 %v411, 96
        %v431 = vpop.permute.xlu0 %430
        %vm432 = vcmask 64512
        %v433 = vsel %vm432, %v406, 0
        %v435 = vsel %vm432, %v411, 0
        %v437 = vsel %vm432, %v429, 0
        %v439 = vsel %vm432, %v431, 0
        %441 = vmatprep.subr.mxu0 0.0
        %442 = vmatpush1.xpose.msra.mxu0 0.0
        %443 = vmatprep.subr.mxu0 0.0
        %444 = vmatpush1.xpose.msra.mxu0 0.0
        %445 = vmatprep.subr.mxu0 0.0
        %446 = vmatpush1.xpose.msra.mxu0 0.0
        %447 = vmatprep.subr.mxu0 0.0
        %448 = vmatpush1.xpose.msra.mxu0 0.0
        %449 = vmatprep.subr.mxu0 0.0
        %450 = vmatpush1.xpose.msra.mxu0 0.0
        %451 = vmatprep.subr.mxu0 0.0
        %452 = vmatpush1.xpose.msra.mxu0 0.0
        %453 = vmatprep.subr.mxu0 0.0
        %454 = vmatpush1.xpose.msra.mxu0 0.0
        %455 = vmatprep.subr.mxu0 0.0
        %456 = vmatpush1.xpose.msra.mxu0 0.0
        %457 = vmatprep.subr.mxu0 0.0
        %458 = vmatpush1.xpose.msra.mxu0 0.0
        %459 = vmatprep.subr.mxu0 0.0
        %460 = vmatpush1.xpose.msra.mxu0 0.0
        %461 = vmatprep.subr.mxu0 0.0
        %462 = vmatpush1.xpose.msra.mxu0 0.0
        %463 = vmatprep.subr.mxu0 0.0
        %464 = vmatpush1.xpose.msra.mxu0 0.0
        %465 = vmatprep.subr.mxu0 0.0
        %466 = vmatpush1.xpose.msra.mxu0 0.0
        %467 = vmatprep.subr.mxu0 0.0
        %468 = vmatpush1.xpose.msra.mxu0 0.0
        %469 = vmatprep.subr.mxu0 0.0
        %470 = vmatpush1.xpose.msra.mxu0 %v439
        %471 = vmatprep.subr.mxu0 0.0
        %472 = vmatpush1.xpose.msra.mxu0 %v437
        %473 = vmatprep.subr.mxu0 0.0
        %474 = vmatpush2.xpose.msra.mxu0 0.0
        %475 = vmatprep.subr.mxu0 0.0
        %476 = vmatpush2.xpose.msra.mxu0 0.0
        %477 = vmatprep.subr.mxu0 0.0
        %478 = vmatpush2.xpose.msra.mxu0 0.0
        %479 = vmatprep.subr.mxu0 0.0
        %480 = vmatpush2.xpose.msra.mxu0 0.0
        %481 = vmatprep.subr.mxu0 0.0
        %482 = vmatpush2.xpose.msra.mxu0 0.0
        %483 = vmatprep.subr.mxu0 0.0
        %484 = vmatpush2.xpose.msra.mxu0 0.0
        %485 = vmatprep.subr.mxu0 0.0
        %486 = vmatpush2.xpose.msra.mxu0 0.0
        %487 = vmatprep.subr.mxu0 0.0
        %488 = vmatpush2.xpose.msra.mxu0 0.0
        %489 = vmatprep.subr.mxu0 0.0
        %490 = vmatpush2.xpose.msra.mxu0 0.0
        %491 = vmatprep.subr.mxu0 0.0
        %492 = vmatpush2.xpose.msra.mxu0 0.0
        %493 = vmatprep.subr.mxu0 0.0
        %494 = vmatpush2.xpose.msra.mxu0 0.0
        %495 = vmatprep.subr.mxu0 0.0
        %496 = vmatpush2.xpose.msra.mxu0 0.0
        %497 = vmatprep.subr.mxu0 0.0
        %498 = vmatpush2.xpose.msra.mxu0 0.0
        %499 = vmatprep.subr.mxu0 0.0
        %500 = vmatpush2.xpose.msra.mxu0 0.0
        %501 = vmatprep.subr.mxu0 0.0
        %502 = vmatpush2.xpose.msra.mxu0 0.0
        %503 = vmatprep.subr.mxu0 0.0
        %504 = vmatpush2.xpose.msra.mxu0 0.0
        %505 = vmatprep.mubr.f32.mxu0 0.0
        %506 = vmatmul.mubr.f32.gmra.mxu0 %v433
        %v507 = vpop.f32.mrf.mxu0
        %v508 = vadd.f32 0.0, %v507
        %v509 = vpop.f32.mrf.mxu0
        %510 = vmatprep.mubr.f32.mxu0 0.0
        %511 = vmatmul.mubr.f32.gmra.mxu0 %v435
        %v512 = vpop.f32.mrf.mxu0
        %v513 = vadd.f32 0.0, %v512
        %v514 = vpop.f32.mrf.mxu0
        %515 = vdwg.mxu0
        %516 = vrot.lane.b32.xlu0 %v417, 96
        %v517 = vpop.permute.xlu0 %516
        %518 = vrot.lane.b32.xlu0 %v419, 96
        %v519 = vpop.permute.xlu0 %518
        %v520 = vsel %vm432, %v417, 0
        %v522 = vsel %vm432, %v419, 0
        %v524 = vsel %vm432, %v517, 0
        %v526 = vsel %vm432, %v519, 0
        %528 = vmatprep.subr.mxu0 0.0
        %529 = vmatpush1.xpose.msra.mxu0 0.0
        %530 = vmatprep.subr.mxu0 0.0
        %531 = vmatpush1.xpose.msra.mxu0 0.0
        %532 = vmatprep.subr.mxu0 0.0
        %533 = vmatpush1.xpose.msra.mxu0 0.0
        %534 = vmatprep.subr.mxu0 0.0
        %535 = vmatpush1.xpose.msra.mxu0 0.0
        %536 = vmatprep.subr.mxu0 0.0
        %537 = vmatpush1.xpose.msra.mxu0 0.0
        %538 = vmatprep.subr.mxu0 0.0
        %539 = vmatpush1.xpose.msra.mxu0 0.0
        %540 = vmatprep.subr.mxu0 0.0
        %541 = vmatpush1.xpose.msra.mxu0 0.0
        %542 = vmatprep.subr.mxu0 0.0
        %543 = vmatpush1.xpose.msra.mxu0 0.0
        %544 = vmatprep.subr.mxu0 0.0
        %545 = vmatpush1.xpose.msra.mxu0 0.0
        %546 = vmatprep.subr.mxu0 0.0
        %547 = vmatpush1.xpose.msra.mxu0 0.0
        %548 = vmatprep.subr.mxu0 0.0
        %549 = vmatpush1.xpose.msra.mxu0 0.0
        %550 = vmatprep.subr.mxu0 0.0
        %551 = vmatpush1.xpose.msra.mxu0 0.0
        %552 = vmatprep.subr.mxu0 0.0
        %553 = vmatpush1.xpose.msra.mxu0 0.0
        %554 = vmatprep.subr.mxu0 0.0
        %555 = vmatpush1.xpose.msra.mxu0 0.0
        %556 = vmatprep.subr.mxu0 0.0
        %557 = vmatpush1.xpose.msra.mxu0 %v526
        %558 = vmatprep.subr.mxu0 0.0
        %559 = vmatpush1.xpose.msra.mxu0 %v524
        %560 = vmatprep.subr.mxu0 0.0
        %561 = vmatpush2.xpose.msra.mxu0 0.0
        %562 = vmatprep.subr.mxu0 0.0
        %563 = vmatpush2.xpose.msra.mxu0 0.0
        %564 = vmatprep.subr.mxu0 0.0
        %565 = vmatpush2.xpose.msra.mxu0 0.0
        %566 = vmatprep.subr.mxu0 0.0
        %567 = vmatpush2.xpose.msra.mxu0 0.0
        %568 = vmatprep.subr.mxu0 0.0
        %569 = vmatpush2.xpose.msra.mxu0 0.0
        %570 = vmatprep.subr.mxu0 0.0
        %571 = vmatpush2.xpose.msra.mxu0 0.0
        %572 = vmatprep.subr.mxu0 0.0
        %573 = vmatpush2.xpose.msra.mxu0 0.0
        %574 = vmatprep.subr.mxu0 0.0
        %575 = vmatpush2.xpose.msra.mxu0 0.0
        %576 = vmatprep.subr.mxu0 0.0
        %577 = vmatpush2.xpose.msra.mxu0 0.0
        %578 = vmatprep.subr.mxu0 0.0
        %579 = vmatpush2.xpose.msra.mxu0 0.0
        %580 = vmatprep.subr.mxu0 0.0
        %581 = vmatpush2.xpose.msra.mxu0 0.0
        %582 = vmatprep.subr.mxu0 0.0
        %583 = vmatpush2.xpose.msra.mxu0 0.0
        %584 = vmatprep.subr.mxu0 0.0
        %585 = vmatpush2.xpose.msra.mxu0 0.0
        %586 = vmatprep.subr.mxu0 0.0
        %587 = vmatpush2.xpose.msra.mxu0 0.0
        %588 = vmatprep.subr.mxu0 0.0
        %589 = vmatpush2.xpose.msra.mxu0 0.0
        %590 = vmatprep.subr.mxu0 0.0
        %591 = vmatpush2.xpose.msra.mxu0 0.0
        %592 = vmatprep.mubr.f32.mxu0 0.0
        %593 = vmatmul.mubr.f32.gmra.mxu0 %v520
        %v594 = vpop.f32.mrf.mxu0
        %v595 = vadd.f32 0.0, %v594
        %v596 = vpop.f32.mrf.mxu0
        %597 = vmatprep.mubr.f32.mxu0 0.0
        %598 = vmatmul.mubr.f32.gmra.mxu0 %v522
        %v599 = vpop.f32.mrf.mxu0
        %v600 = vadd.f32 0.0, %v599
        %v601 = vpop.f32.mrf.mxu0
        %602 = vdwg.mxu0
        %603 = vrot.lane.b32.xlu0 %v421, 96
        %v604 = vpop.permute.xlu0 %603
        %605 = vrot.lane.b32.xlu0 %v423, 96
        %v606 = vpop.permute.xlu0 %605
        %v607 = vsel %vm432, %v421, 0
        %v609 = vsel %vm432, %v423, 0
        %v611 = vsel %vm432, %v604, 0
        %v613 = vsel %vm432, %v606, 0
        %615 = vmatprep.subr.mxu0 0.0
        %616 = vmatpush1.xpose.msra.mxu0 0.0
        %617 = vmatprep.subr.mxu0 0.0
        %618 = vmatpush1.xpose.msra.mxu0 0.0
        %619 = vmatprep.subr.mxu0 0.0
        %620 = vmatpush1.xpose.msra.mxu0 0.0
        %621 = vmatprep.subr.mxu0 0.0
        %622 = vmatpush1.xpose.msra.mxu0 0.0
        %623 = vmatprep.subr.mxu0 0.0
        %624 = vmatpush1.xpose.msra.mxu0 0.0
        %625 = vmatprep.subr.mxu0 0.0
        %626 = vmatpush1.xpose.msra.mxu0 0.0
        %627 = vmatprep.subr.mxu0 0.0
        %628 = vmatpush1.xpose.msra.mxu0 0.0
        %629 = vmatprep.subr.mxu0 0.0
        %630 = vmatpush1.xpose.msra.mxu0 0.0
        %631 = vmatprep.subr.mxu0 0.0
        %632 = vmatpush1.xpose.msra.mxu0 0.0
        %633 = vmatprep.subr.mxu0 0.0
        %634 = vmatpush1.xpose.msra.mxu0 0.0
        %635 = vmatprep.subr.mxu0 0.0
        %636 = vmatpush1.xpose.msra.mxu0 0.0
        %637 = vmatprep.subr.mxu0 0.0
        %638 = vmatpush1.xpose.msra.mxu0 0.0
        %639 = vmatprep.subr.mxu0 0.0
        %640 = vmatpush1.xpose.msra.mxu0 0.0
        %641 = vmatprep.subr.mxu0 0.0
        %642 = vmatpush1.xpose.msra.mxu0 0.0
        %643 = vmatprep.subr.mxu0 0.0
        %644 = vmatpush1.xpose.msra.mxu0 %v613
        %645 = vmatprep.subr.mxu0 0.0
        %646 = vmatpush1.xpose.msra.mxu0 %v611
        %647 = vmatprep.subr.mxu0 0.0
        %648 = vmatpush2.xpose.msra.mxu0 0.0
        %649 = vmatprep.subr.mxu0 0.0
        %650 = vmatpush2.xpose.msra.mxu0 0.0
        %651 = vmatprep.subr.mxu0 0.0
        %652 = vmatpush2.xpose.msra.mxu0 0.0
        %653 = vmatprep.subr.mxu0 0.0
        %654 = vmatpush2.xpose.msra.mxu0 0.0
        %655 = vmatprep.subr.mxu0 0.0
        %656 = vmatpush2.xpose.msra.mxu0 0.0
        %657 = vmatprep.subr.mxu0 0.0
        %658 = vmatpush2.xpose.msra.mxu0 0.0
        %659 = vmatprep.subr.mxu0 0.0
        %660 = vmatpush2.xpose.msra.mxu0 0.0
        %661 = vmatprep.subr.mxu0 0.0
        %662 = vmatpush2.xpose.msra.mxu0 0.0
        %663 = vmatprep.subr.mxu0 0.0
        %664 = vmatpush2.xpose.msra.mxu0 0.0
        %665 = vmatprep.subr.mxu0 0.0
        %666 = vmatpush2.xpose.msra.mxu0 0.0
        %667 = vmatprep.subr.mxu0 0.0
        %668 = vmatpush2.xpose.msra.mxu0 0.0
        %669 = vmatprep.subr.mxu0 0.0
        %670 = vmatpush2.xpose.msra.mxu0 0.0
        %671 = vmatprep.subr.mxu0 0.0
        %672 = vmatpush2.xpose.msra.mxu0 0.0
        %673 = vmatprep.subr.mxu0 0.0
        %674 = vmatpush2.xpose.msra.mxu0 0.0
        %675 = vmatprep.subr.mxu0 0.0
        %676 = vmatpush2.xpose.msra.mxu0 0.0
        %677 = vmatprep.subr.mxu0 0.0
        %678 = vmatpush2.xpose.msra.mxu0 0.0
        %679 = vmatprep.mubr.f32.mxu0 0.0
        %680 = vmatmul.mubr.f32.gmra.mxu0 %v607
        %v681 = vpop.f32.mrf.mxu0
        %v682 = vadd.f32 0.0, %v681
        %v683 = vpop.f32.mrf.mxu0
        %684 = vmatprep.mubr.f32.mxu0 0.0
        %685 = vmatmul.mubr.f32.gmra.mxu0 %v609
        %v686 = vpop.f32.mrf.mxu0
        %v687 = vadd.f32 0.0, %v686
        %v688 = vpop.f32.mrf.mxu0
        %689 = vdwg.mxu0
        %690 = vrot.lane.b32.xlu0 %v425, 96
        %v691 = vpop.permute.xlu0 %690
        %692 = vrot.lane.b32.xlu0 %v427, 96
        %v693 = vpop.permute.xlu0 %692
        %v694 = vsel %vm432, %v425, 0
        %v696 = vsel %vm432, %v427, 0
        %v698 = vsel %vm432, %v691, 0
        %v700 = vsel %vm432, %v693, 0
        %702 = vmatprep.subr.mxu0 0.0
        %703 = vmatpush1.xpose.msra.mxu0 0.0
        %704 = vmatprep.subr.mxu0 0.0
        %705 = vmatpush1.xpose.msra.mxu0 0.0
        %706 = vmatprep.subr.mxu0 0.0
        %707 = vmatpush1.xpose.msra.mxu0 0.0
        %708 = vmatprep.subr.mxu0 0.0
        %709 = vmatpush1.xpose.msra.mxu0 0.0
        %710 = vmatprep.subr.mxu0 0.0
        %711 = vmatpush1.xpose.msra.mxu0 0.0
        %712 = vmatprep.subr.mxu0 0.0
        %713 = vmatpush1.xpose.msra.mxu0 0.0
        %714 = vmatprep.subr.mxu0 0.0
        %715 = vmatpush1.xpose.msra.mxu0 0.0
        %716 = vmatprep.subr.mxu0 0.0
        %717 = vmatpush1.xpose.msra.mxu0 0.0
        %718 = vmatprep.subr.mxu0 0.0
        %719 = vmatpush1.xpose.msra.mxu0 0.0
        %720 = vmatprep.subr.mxu0 0.0
        %721 = vmatpush1.xpose.msra.mxu0 0.0
        %722 = vmatprep.subr.mxu0 0.0
        %723 = vmatpush1.xpose.msra.mxu0 0.0
        %724 = vmatprep.subr.mxu0 0.0
        %725 = vmatpush1.xpose.msra.mxu0 0.0
        %726 = vmatprep.subr.mxu0 0.0
        %727 = vmatpush1.xpose.msra.mxu0 0.0
        %728 = vmatprep.subr.mxu0 0.0
        %729 = vmatpush1.xpose.msra.mxu0 0.0
        %730 = vmatprep.subr.mxu0 0.0
        %731 = vmatpush1.xpose.msra.mxu0 %v700
        %732 = vmatprep.subr.mxu0 0.0
        %733 = vmatpush1.xpose.msra.mxu0 %v698
        %734 = vmatprep.subr.mxu0 0.0
        %735 = vmatpush2.xpose.msra.mxu0 0.0
        %736 = vmatprep.subr.mxu0 0.0
        %737 = vmatpush2.xpose.msra.mxu0 0.0
        %738 = vmatprep.subr.mxu0 0.0
        %739 = vmatpush2.xpose.msra.mxu0 0.0
        %740 = vmatprep.subr.mxu0 0.0
        %741 = vmatpush2.xpose.msra.mxu0 0.0
        %742 = vmatprep.subr.mxu0 0.0
        %743 = vmatpush2.xpose.msra.mxu0 0.0
        %744 = vmatprep.subr.mxu0 0.0
        %745 = vmatpush2.xpose.msra.mxu0 0.0
        %746 = vmatprep.subr.mxu0 0.0
        %747 = vmatpush2.xpose.msra.mxu0 0.0
        %748 = vmatprep.subr.mxu0 0.0
        %749 = vmatpush2.xpose.msra.mxu0 0.0
        %750 = vmatprep.subr.mxu0 0.0
        %751 = vmatpush2.xpose.msra.mxu0 0.0
        %752 = vmatprep.subr.mxu0 0.0
        %753 = vmatpush2.xpose.msra.mxu0 0.0
        %754 = vmatprep.subr.mxu0 0.0
        %755 = vmatpush2.xpose.msra.mxu0 0.0
        %756 = vmatprep.subr.mxu0 0.0
        %757 = vmatpush2.xpose.msra.mxu0 0.0
        %758 = vmatprep.subr.mxu0 0.0
        %759 = vmatpush2.xpose.msra.mxu0 0.0
        %760 = vmatprep.subr.mxu0 0.0
        %761 = vmatpush2.xpose.msra.mxu0 0.0
        %762 = vmatprep.subr.mxu0 0.0
        %763 = vmatpush2.xpose.msra.mxu0 0.0
        %764 = vmatprep.subr.mxu0 0.0
        %765 = vmatpush2.xpose.msra.mxu0 0.0
        %766 = vmatprep.mubr.f32.mxu0 0.0
        %767 = vmatmul.mubr.f32.gmra.mxu0 %v694
        %v768 = vpop.f32.mrf.mxu0
        %v769 = vadd.f32 0.0, %v768
        %v770 = vpop.f32.mrf.mxu0
        %771 = vmatprep.mubr.f32.mxu0 0.0
        %772 = vmatmul.mubr.f32.gmra.mxu0 %v696
        %v773 = vpop.f32.mrf.mxu0
        %v774 = vadd.f32 0.0, %v773
        %v775 = vpop.f32.mrf.mxu0
        %776 = vdwg.mxu0
        %vm777 = vcmask 130048
        %v778 = vsel %vm777, %v508, -inf
        %779 = vmax.xlane.f32.xlu0 %v778
        %v780 = vpop.xlane.xlu0 %779
        %v781 = vsel %vm777, %v513, -inf
        %782 = vmax.xlane.f32.xlu0 %v781
        %v783 = vpop.xlane.xlu0 %782
        %v784 = vsel %vm777, %v595, -inf
        %785 = vmax.xlane.f32.xlu0 %v784
        %v786 = vpop.xlane.xlu0 %785
        %v787 = vsel %vm777, %v600, -inf
        %788 = vmax.xlane.f32.xlu0 %v787
        %v789 = vpop.xlane.xlu0 %788
        %v790 = vsel %vm777, %v682, -inf
        %791 = vmax.xlane.f32.xlu0 %v790
        %v792 = vpop.xlane.xlu0 %791
        %v793 = vsel %vm777, %v687, -inf
        %794 = vmax.xlane.f32.xlu0 %v793
        %v795 = vpop.xlane.xlu0 %794
        %v796 = vsel %vm777, %v769, -inf
        %797 = vmax.xlane.f32.xlu0 %v796
        %v798 = vpop.xlane.xlu0 %797
        %v799 = vsel %vm777, %v774, -inf
        %800 = vmax.xlane.f32.xlu0 %v799
        %v801 = vpop.xlane.xlu0 %800
        %v802 = vsub.f32 %v508, %v780
        %v803 = vsub.f32 %v513, %v783
        %v804 = vsub.f32 %v595, %v786
        %v805 = vsub.f32 %v600, %v789
        %v806 = vsub.f32 %v682, %v792
        %v807 = vsub.f32 %v687, %v795
        %v808 = vsub.f32 %v769, %v798
        %v809 = vsub.f32 %v774, %v801
        %v810 = vmul.f32 %v802, 1.442695
        %v811 = vpow.pop %v810
        %v812 = vmul.f32 %v803, 1.442695
        %v813 = vpow.pop %v812
        %v814 = vmul.f32 %v804, 1.442695
        %v815 = vpow.pop %v814
        %v816 = vmul.f32 %v805, 1.442695
        %v817 = vpow.pop %v816
        %v818 = vmul.f32 %v806, 1.442695
        %v819 = vpow.pop %v818
        %v820 = vmul.f32 %v807, 1.442695
        %v821 = vpow.pop %v820
        %v822 = vmul.f32 %v808, 1.442695
        %v823 = vpow.pop %v822
        %v824 = vmul.f32 %v809, 1.442695
        %v825 = vpow.pop %v824
        %v826 = vsel %vm777, %v811, 0.0
        %827 = vadd.xlane.f32.xlu0 %v826
        %v828 = vpop.xlane.xlu0 %827
        %v829 = vsel %vm777, %v813, 0.0
        %830 = vadd.xlane.f32.xlu0 %v829
        %v831 = vpop.xlane.xlu0 %830
        %v832 = vsel %vm777, %v815, 0.0
        %833 = vadd.xlane.f32.xlu0 %v832
        %v834 = vpop.xlane.xlu0 %833
        %v835 = vsel %vm777, %v817, 0.0
        %836 = vadd.xlane.f32.xlu0 %v835
        %v837 = vpop.xlane.xlu0 %836
        %v838 = vsel %vm777, %v819, 0.0
        %839 = vadd.xlane.f32.xlu0 %v838
        %v840 = vpop.xlane.xlu0 %839
        %v841 = vsel %vm777, %v821, 0.0
        %842 = vadd.xlane.f32.xlu0 %v841
        %v843 = vpop.xlane.xlu0 %842
        %v844 = vsel %vm777, %v823, 0.0
        %845 = vadd.xlane.f32.xlu0 %v844
        %v846 = vpop.xlane.xlu0 %845
        %v847 = vsel %vm777, %v825, 0.0
        %848 = vadd.xlane.f32.xlu0 %v847
        %v849 = vpop.xlane.xlu0 %848
        %v850 = vrcp.pop %v828
        %v851 = vrcp.pop %v831
        %v852 = vrcp.pop %v834
        %v853 = vrcp.pop %v837
        %v854 = vrcp.pop %v840
        %v855 = vrcp.pop %v843
        %v856 = vrcp.pop %v846
        %v857 = vrcp.pop %v849
        %v858 = vmul.f32 %v811, %v850
        %v859 = vmul.f32 %v813, %v851
        %v860 = vmul.f32 %v815, %v852
        %v861 = vmul.f32 %v817, %v853
        %v862 = vmul.f32 %v819, %v854
        %v863 = vmul.f32 %v821, %v855
        %v864 = vmul.f32 %v823, %v856
        %v865 = vmul.f32 %v825, %v857
        %866 = vrot.lane.b32.xlu0 %v406, 64
        %v867 = vpop.permute.xlu0 %866
        %868 = vrot.lane.b32.xlu0 %v411, 64
        %v869 = vpop.permute.xlu0 %868
        %v873 = vsel %vm777, %v858, 0
        %v876 = vsel %vm777, %v859, 0
        %878 = vmatprep.subr.mxu0 0.0
        %879 = vmatpush1.msra.mxu0 0.0
        %880 = vmatprep.subr.mxu0 0.0
        %881 = vmatpush1.msra.mxu0 0.0
        %882 = vmatprep.subr.mxu0 0.0
        %883 = vmatpush1.msra.mxu0 0.0
        %884 = vmatprep.subr.mxu0 0.0
        %885 = vmatpush1.msra.mxu0 0.0
        %886 = vmatprep.subr.mxu0 0.0
        %887 = vmatpush1.msra.mxu0 0.0
        %888 = vmatprep.subr.mxu0 0.0
        %889 = vmatpush1.msra.mxu0 0.0
        %890 = vmatprep.subr.mxu0 0.0
        %891 = vmatpush1.msra.mxu0 0.0
        %892 = vmatprep.subr.mxu0 0.0
        %893 = vmatpush1.msra.mxu0 0.0
        %894 = vmatprep.subr.mxu0 0.0
        %895 = vmatpush1.msra.mxu0 0.0
        %896 = vmatprep.subr.mxu0 0.0
        %897 = vmatpush1.msra.mxu0 0.0
        %898 = vmatprep.subr.mxu0 0.0
        %899 = vmatpush1.msra.mxu0 0.0
        %900 = vmatprep.subr.mxu0 0.0
        %901 = vmatpush1.msra.mxu0 0.0
        %902 = vmatprep.subr.mxu0 0.0
        %903 = vmatpush1.msra.mxu0 0.0
        %904 = vmatprep.subr.mxu0 0.0
        %905 = vmatpush1.msra.mxu0 0.0
        %906 = vmatprep.subr.mxu0 0.0
        %907 = vmatpush1.msra.mxu0 %v869
        %908 = vmatprep.subr.mxu0 0.0
        %909 = vmatpush1.msra.mxu0 %v867
        %910 = vmatprep.subr.mxu0 0.0
        %911 = vmatpush2.msra.mxu0 0.0
        %912 = vmatprep.subr.mxu0 0.0
        %913 = vmatpush2.msra.mxu0 0.0
        %914 = vmatprep.subr.mxu0 0.0
        %915 = vmatpush2.msra.mxu0 0.0
        %916 = vmatprep.subr.mxu0 0.0
        %917 = vmatpush2.msra.mxu0 0.0
        %918 = vmatprep.subr.mxu0 0.0
        %919 = vmatpush2.msra.mxu0 0.0
        %920 = vmatprep.subr.mxu0 0.0
        %921 = vmatpush2.msra.mxu0 0.0
        %922 = vmatprep.subr.mxu0 0.0
        %923 = vmatpush2.msra.mxu0 0.0
        %924 = vmatprep.subr.mxu0 0.0
        %925 = vmatpush2.msra.mxu0 0.0
        %926 = vmatprep.subr.mxu0 0.0
        %927 = vmatpush2.msra.mxu0 0.0
        %928 = vmatprep.subr.mxu0 0.0
        %929 = vmatpush2.msra.mxu0 0.0
        %930 = vmatprep.subr.mxu0 0.0
        %931 = vmatpush2.msra.mxu0 0.0
        %932 = vmatprep.subr.mxu0 0.0
        %933 = vmatpush2.msra.mxu0 0.0
        %934 = vmatprep.subr.mxu0 0.0
        %935 = vmatpush2.msra.mxu0 0.0
        %936 = vmatprep.subr.mxu0 0.0
        %937 = vmatpush2.msra.mxu0 0.0
        %938 = vmatprep.subr.mxu0 0.0
        %939 = vmatpush2.msra.mxu0 0.0
        %940 = vmatprep.subr.mxu0 0.0
        %941 = vmatpush2.msra.mxu0 0.0
        %942 = vmatprep.mubr.f32.mxu0 0.0
        %943 = vmatmul.mubr.f32.gmra.mxu0 %v873
        %v944 = vpop.f32.mrf.mxu0
        %v945 = vadd.f32 0.0, %v944
        %v946 = vpop.f32.mrf.mxu0
        %947 = vmatprep.mubr.f32.mxu0 0.0
        %948 = vmatmul.mubr.f32.gmra.mxu0 %v876
        %v949 = vpop.f32.mrf.mxu0
        %v950 = vadd.f32 0.0, %v949
        %v951 = vpop.f32.mrf.mxu0
        %952 = vdwg.mxu0
        %953 = vrot.lane.b32.xlu0 %v417, 64
        %v954 = vpop.permute.xlu0 %953
        %955 = vrot.lane.b32.xlu0 %v419, 64
        %v956 = vpop.permute.xlu0 %955
        %v960 = vsel %vm777, %v860, 0
        %v963 = vsel %vm777, %v861, 0
        %965 = vmatprep.subr.mxu0 0.0
        %966 = vmatpush1.msra.mxu0 0.0
        %967 = vmatprep.subr.mxu0 0.0
        %968 = vmatpush1.msra.mxu0 0.0
        %969 = vmatprep.subr.mxu0 0.0
        %970 = vmatpush1.msra.mxu0 0.0
        %971 = vmatprep.subr.mxu0 0.0
        %972 = vmatpush1.msra.mxu0 0.0
        %973 = vmatprep.subr.mxu0 0.0
        %974 = vmatpush1.msra.mxu0 0.0
        %975 = vmatprep.subr.mxu0 0.0
        %976 = vmatpush1.msra.mxu0 0.0
        %977 = vmatprep.subr.mxu0 0.0
        %978 = vmatpush1.msra.mxu0 0.0
        %979 = vmatprep.subr.mxu0 0.0
        %980 = vmatpush1.msra.mxu0 0.0
        %981 = vmatprep.subr.mxu0 0.0
        %982 = vmatpush1.msra.mxu0 0.0
        %983 = vmatprep.subr.mxu0 0.0
        %984 = vmatpush1.msra.mxu0 0.0
        %985 = vmatprep.subr.mxu0 0.0
        %986 = vmatpush1.msra.mxu0 0.0
        %987 = vmatprep.subr.mxu0 0.0
        %988 = vmatpush1.msra.mxu0 0.0
        %989 = vmatprep.subr.mxu0 0.0
        %990 = vmatpush1.msra.mxu0 0.0
        %991 = vmatprep.subr.mxu0 0.0
        %992 = vmatpush1.msra.mxu0 0.0
        %993 = vmatprep.subr.mxu0 0.0
        %994 = vmatpush1.msra.mxu0 %v956
        %995 = vmatprep.subr.mxu0 0.0
        %996 = vmatpush1.msra.mxu0 %v954
        %997 = vmatprep.subr.mxu0 0.0
        %998 = vmatpush2.msra.mxu0 0.0
        %999 = vmatprep.subr.mxu0 0.0
        %1000 = vmatpush2.msra.mxu0 0.0
        %1001 = vmatprep.subr.mxu0 0.0
        %1002 = vmatpush2.msra.mxu0 0.0
        %1003 = vmatprep.subr.mxu0 0.0
        %1004 = vmatpush2.msra.mxu0 0.0
        %1005 = vmatprep.subr.mxu0 0.0
        %1006 = vmatpush2.msra.mxu0 0.0
        %1007 = vmatprep.subr.mxu0 0.0
        %1008 = vmatpush2.msra.mxu0 0.0
        %1009 = vmatprep.subr.mxu0 0.0
        %1010 = vmatpush2.msra.mxu0 0.0
        %1011 = vmatprep.subr.mxu0 0.0
        %1012 = vmatpush2.msra.mxu0 0.0
        %1013 = vmatprep.subr.mxu0 0.0
        %1014 = vmatpush2.msra.mxu0 0.0
        %1015 = vmatprep.subr.mxu0 0.0
        %1016 = vmatpush2.msra.mxu0 0.0
        %1017 = vmatprep.subr.mxu0 0.0
        %1018 = vmatpush2.msra.mxu0 0.0
        %1019 = vmatprep.subr.mxu0 0.0
        %1020 = vmatpush2.msra.mxu0 0.0
        %1021 = vmatprep.subr.mxu0 0.0
        %1022 = vmatpush2.msra.mxu0 0.0
        %1023 = vmatprep.subr.mxu0 0.0
        %1024 = vmatpush2.msra.mxu0 0.0
        %1025 = vmatprep.subr.mxu0 0.0
        %1026 = vmatpush2.msra.mxu0 0.0
        %1027 = vmatprep.subr.mxu0 0.0
        %1028 = vmatpush2.msra.mxu0 0.0
        %1029 = vmatprep.mubr.f32.mxu0 0.0
        %1030 = vmatmul.mubr.f32.gmra.mxu0 %v960
        %v1031 = vpop.f32.mrf.mxu0
        %v1032 = vadd.f32 0.0, %v1031
        %v1033 = vpop.f32.mrf.mxu0
        %1034 = vmatprep.mubr.f32.mxu0 0.0
        %1035 = vmatmul.mubr.f32.gmra.mxu0 %v963
        %v1036 = vpop.f32.mrf.mxu0
        %v1037 = vadd.f32 0.0, %v1036
        %v1038 = vpop.f32.mrf.mxu0
        %1039 = vdwg.mxu0
        %1040 = vrot.lane.b32.xlu0 %v421, 64
        %v1041 = vpop.permute.xlu0 %1040
        %1042 = vrot.lane.b32.xlu0 %v423, 64
        %v1043 = vpop.permute.xlu0 %1042
        %v1047 = vsel %vm777, %v862, 0
        %v1050 = vsel %vm777, %v863, 0
        %1052 = vmatprep.subr.mxu0 0.0
        %1053 = vmatpush1.msra.mxu0 0.0
        %1054 = vmatprep.subr.mxu0 0.0
        %1055 = vmatpush1.msra.mxu0 0.0
        %1056 = vmatprep.subr.mxu0 0.0
        %1057 = vmatpush1.msra.mxu0 0.0
        %1058 = vmatprep.subr.mxu0 0.0
        %1059 = vmatpush1.msra.mxu0 0.0
        %1060 = vmatprep.subr.mxu0 0.0
        %1061 = vmatpush1.msra.mxu0 0.0
        %1062 = vmatprep.subr.mxu0 0.0
        %1063 = vmatpush1.msra.mxu0 0.0
        %1064 = vmatprep.subr.mxu0 0.0
        %1065 = vmatpush1.msra.mxu0 0.0
        %1066 = vmatprep.subr.mxu0 0.0
        %1067 = vmatpush1.msra.mxu0 0.0
        %1068 = vmatprep.subr.mxu0 0.0
        %1069 = vmatpush1.msra.mxu0 0.0
        %1070 = vmatprep.subr.mxu0 0.0
        %1071 = vmatpush1.msra.mxu0 0.0
        %1072 = vmatprep.subr.mxu0 0.0
        %1073 = vmatpush1.msra.mxu0 0.0
        %1074 = vmatprep.subr.mxu0 0.0
        %1075 = vmatpush1.msra.mxu0 0.0
        %1076 = vmatprep.subr.mxu0 0.0
        %1077 = vmatpush1.msra.mxu0 0.0
        %1078 = vmatprep.subr.mxu0 0.0
        %1079 = vmatpush1.msra.mxu0 0.0
        %1080 = vmatprep.subr.mxu0 0.0
        %1081 = vmatpush1.msra.mxu0 %v1043
        %1082 = vmatprep.subr.mxu0 0.0
        %1083 = vmatpush1.msra.mxu0 %v1041
        %1084 = vmatprep.subr.mxu0 0.0
        %1085 = vmatpush2.msra.mxu0 0.0
        %1086 = vmatprep.subr.mxu0 0.0
        %1087 = vmatpush2.msra.mxu0 0.0
        %1088 = vmatprep.subr.mxu0 0.0
        %1089 = vmatpush2.msra.mxu0 0.0
        %1090 = vmatprep.subr.mxu0 0.0
        %1091 = vmatpush2.msra.mxu0 0.0
        %1092 = vmatprep.subr.mxu0 0.0
        %1093 = vmatpush2.msra.mxu0 0.0
        %1094 = vmatprep.subr.mxu0 0.0
        %1095 = vmatpush2.msra.mxu0 0.0
        %1096 = vmatprep.subr.mxu0 0.0
        %1097 = vmatpush2.msra.mxu0 0.0
        %1098 = vmatprep.subr.mxu0 0.0
        %1099 = vmatpush2.msra.mxu0 0.0
        %1100 = vmatprep.subr.mxu0 0.0
        %1101 = vmatpush2.msra.mxu0 0.0
        %1102 = vmatprep.subr.mxu0 0.0
        %1103 = vmatpush2.msra.mxu0 0.0
        %1104 = vmatprep.subr.mxu0 0.0
        %1105 = vmatpush2.msra.mxu0 0.0
        %1106 = vmatprep.subr.mxu0 0.0
        %1107 = vmatpush2.msra.mxu0 0.0
        %1108 = vmatprep.subr.mxu0 0.0
        %1109 = vmatpush2.msra.mxu0 0.0
        %1110 = vmatprep.subr.mxu0 0.0
        %1111 = vmatpush2.msra.mxu0 0.0
        %1112 = vmatprep.subr.mxu0 0.0
        %1113 = vmatpush2.msra.mxu0 0.0
        %1114 = vmatprep.subr.mxu0 0.0
        %1115 = vmatpush2.msra.mxu0 0.0
        %1116 = vmatprep.mubr.f32.mxu0 0.0
        %1117 = vmatmul.mubr.f32.gmra.mxu0 %v1047
        %v1118 = vpop.f32.mrf.mxu0
        %v1119 = vadd.f32 0.0, %v1118
        %v1120 = vpop.f32.mrf.mxu0
        %1121 = vmatprep.mubr.f32.mxu0 0.0
        %1122 = vmatmul.mubr.f32.gmra.mxu0 %v1050
        %v1123 = vpop.f32.mrf.mxu0
        %v1124 = vadd.f32 0.0, %v1123
        %v1125 = vpop.f32.mrf.mxu0
        %1126 = vdwg.mxu0
        %1127 = vrot.lane.b32.xlu0 %v425, 64
        %v1128 = vpop.permute.xlu0 %1127
        %1129 = vrot.lane.b32.xlu0 %v427, 64
        %v1130 = vpop.permute.xlu0 %1129
        %v1134 = vsel %vm777, %v864, 0
        %v1137 = vsel %vm777, %v865, 0
        %1139 = vmatprep.subr.mxu0 0.0
        %1140 = vmatpush1.msra.mxu0 0.0
        %1141 = vmatprep.subr.mxu0 0.0
        %1142 = vmatpush1.msra.mxu0 0.0
        %1143 = vmatprep.subr.mxu0 0.0
        %1144 = vmatpush1.msra.mxu0 0.0
        %1145 = vmatprep.subr.mxu0 0.0
        %1146 = vmatpush1.msra.mxu0 0.0
        %1147 = vmatprep.subr.mxu0 0.0
        %1148 = vmatpush1.msra.mxu0 0.0
        %1149 = vmatprep.subr.mxu0 0.0
        %1150 = vmatpush1.msra.mxu0 0.0
        %1151 = vmatprep.subr.mxu0 0.0
        %1152 = vmatpush1.msra.mxu0 0.0
        %1153 = vmatprep.subr.mxu0 0.0
        %1154 = vmatpush1.msra.mxu0 0.0
        %1155 = vmatprep.subr.mxu0 0.0
        %1156 = vmatpush1.msra.mxu0 0.0
        %1157 = vmatprep.subr.mxu0 0.0
        %1158 = vmatpush1.msra.mxu0 0.0
        %1159 = vmatprep.subr.mxu0 0.0
        %1160 = vmatpush1.msra.mxu0 0.0
        %1161 = vmatprep.subr.mxu0 0.0
        %1162 = vmatpush1.msra.mxu0 0.0
        %1163 = vmatprep.subr.mxu0 0.0
        %1164 = vmatpush1.msra.mxu0 0.0
        %1165 = vmatprep.subr.mxu0 0.0
        %1166 = vmatpush1.msra.mxu0 0.0
        %1167 = vmatprep.subr.mxu0 0.0
        %1168 = vmatpush1.msra.mxu0 %v1130
        %1169 = vmatprep.subr.mxu0 0.0
        %1170 = vmatpush1.msra.mxu0 %v1128
        %1171 = vmatprep.subr.mxu0 0.0
        %1172 = vmatpush2.msra.mxu0 0.0
        %1173 = vmatprep.subr.mxu0 0.0
        %1174 = vmatpush2.msra.mxu0 0.0
        %1175 = vmatprep.subr.mxu0 0.0
        %1176 = vmatpush2.msra.mxu0 0.0
        %1177 = vmatprep.subr.mxu0 0.0
        %1178 = vmatpush2.msra.mxu0 0.0
        %1179 = vmatprep.subr.mxu0 0.0
        %1180 = vmatpush2.msra.mxu0 0.0
        %1181 = vmatprep.subr.mxu0 0.0
        %1182 = vmatpush2.msra.mxu0 0.0
        %1183 = vmatprep.subr.mxu0 0.0
        %1184 = vmatpush2.msra.mxu0 0.0
        %1185 = vmatprep.subr.mxu0 0.0
        %1186 = vmatpush2.msra.mxu0 0.0
        %1187 = vmatprep.subr.mxu0 0.0
        %1188 = vmatpush2.msra.mxu0 0.0
        %1189 = vmatprep.subr.mxu0 0.0
        %1190 = vmatpush2.msra.mxu0 0.0
        %1191 = vmatprep.subr.mxu0 0.0
        %1192 = vmatpush2.msra.mxu0 0.0
        %1193 = vmatprep.subr.mxu0 0.0
        %1194 = vmatpush2.msra.mxu0 0.0
        %1195 = vmatprep.subr.mxu0 0.0
        %1196 = vmatpush2.msra.mxu0 0.0
        %1197 = vmatprep.subr.mxu0 0.0
        %1198 = vmatpush2.msra.mxu0 0.0
        %1199 = vmatprep.subr.mxu0 0.0
        %1200 = vmatpush2.msra.mxu0 0.0
        %1201 = vmatprep.subr.mxu0 0.0
        %1202 = vmatpush2.msra.mxu0 0.0
        %1203 = vmatprep.mubr.f32.mxu0 0.0
        %1204 = vmatmul.mubr.f32.gmra.mxu0 %v1134
        %v1205 = vpop.f32.mrf.mxu0
        %v1206 = vadd.f32 0.0, %v1205
        %v1207 = vpop.f32.mrf.mxu0
        %1208 = vmatprep.mubr.f32.mxu0 0.0
        %1209 = vmatmul.mubr.f32.gmra.mxu0 %v1137
        %v1210 = vpop.f32.mrf.mxu0
        %v1211 = vadd.f32 0.0, %v1210
        %v1212 = vpop.f32.mrf.mxu0
        %1213 = vdwg.mxu0
        %1216 = vrot.lane.b32.xlu0 %v1032, 8
        %v1217 = vpop.permute.xlu0 %1216
        %1218 = vrot.lane.b32.xlu0 %v1037, 8
        %v1219 = vpop.permute.xlu0 %1218
        %1224 = vrot.lane.b32.xlu0 %v1119, 16
        %v1225 = vpop.permute.xlu0 %1224
        %1226 = vrot.lane.b32.xlu0 %v1124, 16
        %v1227 = vpop.permute.xlu0 %1226
        %1232 = vrot.lane.b32.xlu0 %v1206, 24
        %v1233 = vpop.permute.xlu0 %1232
        %1234 = vrot.lane.b32.xlu0 %v1211, 24
        %v1235 = vpop.permute.xlu0 %1234
        %v1238 = vsel %vm432, %v945, %v1217
        %v1239 = vsel %vm432, %v950, %v1219
        %v1240 = vsel %vm777, %v1238, %v1225
        %v1241 = vsel %vm777, %v1239, %v1227
        %vm1242 = vcmask 195584
        %v1243 = vsel %vm1242, %v1240, %v1233
        %v1244 = vsel %vm1242, %v1241, %v1235
        %v1245 = vld [vmem:[#allocation7 + $0x20] sm:$0xff]
        %v1246 = vld [vmem:[#allocation7 + $0x28] sm:$0xff]
        %v1247 = vld [vmem:[#allocation7 + $0x30] sm:$0xff]
        %v1248 = vld [vmem:[#allocation7 + $0x38] sm:$0xff]
        %v1250 = vsel %vm289, %v1243, 0
        %v1253 = vsel %vm289, %v1244, 0
        %1255 = vmatprep.subr.mxu0 0.0
        %1256 = vmatpush1.msra.mxu0 0.0
        %1257 = vmatprep.subr.mxu0 0.0
        %1258 = vmatpush1.msra.mxu0 0.0
        %1259 = vmatprep.subr.mxu0 0.0
        %1260 = vmatpush1.msra.mxu0 0.0
        %1261 = vmatprep.subr.mxu0 0.0
        %1262 = vmatpush1.msra.mxu0 0.0
        %1263 = vmatprep.subr.mxu0 0.0
        %1264 = vmatpush1.msra.mxu0 0.0
        %1265 = vmatprep.subr.mxu0 0.0
        %1266 = vmatpush1.msra.mxu0 0.0
        %1267 = vmatprep.subr.mxu0 0.0
        %1268 = vmatpush1.msra.mxu0 0.0
        %1269 = vmatprep.subr.mxu0 0.0
        %1270 = vmatpush1.msra.mxu0 0.0
        %1271 = vmatprep.subr.mxu0 0.0
        %1272 = vmatpush1.msra.mxu0 0.0
        %1273 = vmatprep.subr.mxu0 0.0
        %1274 = vmatpush1.msra.mxu0 0.0
        %1275 = vmatprep.subr.mxu0 0.0
        %1276 = vmatpush1.msra.mxu0 0.0
        %1277 = vmatprep.subr.mxu0 0.0
        %1278 = vmatpush1.msra.mxu0 0.0
        %1279 = vmatprep.subr.mxu0 0.0
        %1280 = vmatpush1.msra.mxu0 %v1248
        %1281 = vmatprep.subr.mxu0 0.0
        %1282 = vmatpush1.msra.mxu0 %v1247
        %1283 = vmatprep.subr.mxu0 0.0
        %1284 = vmatpush1.msra.mxu0 %v1246
        %1285 = vmatprep.subr.mxu0 0.0
        %1286 = vmatpush1.msra.mxu0 %v1245
        %1287 = vmatprep.subr.mxu0 0.0
        %1288 = vmatpush2.msra.mxu0 0.0
        %1289 = vmatprep.subr.mxu0 0.0
        %1290 = vmatpush2.msra.mxu0 0.0
        %1291 = vmatprep.subr.mxu0 0.0
        %1292 = vmatpush2.msra.mxu0 0.0
        %1293 = vmatprep.subr.mxu0 0.0
        %1294 = vmatpush2.msra.mxu0 0.0
        %1295 = vmatprep.subr.mxu0 0.0
        %1296 = vmatpush2.msra.mxu0 0.0
        %1297 = vmatprep.subr.mxu0 0.0
        %1298 = vmatpush2.msra.mxu0 0.0
        %1299 = vmatprep.subr.mxu0 0.0
        %1300 = vmatpush2.msra.mxu0 0.0
        %1301 = vmatprep.subr.mxu0 0.0
        %1302 = vmatpush2.msra.mxu0 0.0
        %1303 = vmatprep.subr.mxu0 0.0
        %1304 = vmatpush2.msra.mxu0 0.0
        %1305 = vmatprep.subr.mxu0 0.0
        %1306 = vmatpush2.msra.mxu0 0.0
        %1307 = vmatprep.subr.mxu0 0.0
        %1308 = vmatpush2.msra.mxu0 0.0
        %1309 = vmatprep.subr.mxu0 0.0
        %1310 = vmatpush2.msra.mxu0 0.0
        %1311 = vmatprep.subr.mxu0 0.0
        %1312 = vmatpush2.msra.mxu0 0.0
        %1313 = vmatprep.subr.mxu0 0.0
        %1314 = vmatpush2.msra.mxu0 0.0
        %1315 = vmatprep.subr.mxu0 0.0
        %1316 = vmatpush2.msra.mxu0 0.0
        %1317 = vmatprep.subr.mxu0 0.0
        %1318 = vmatpush2.msra.mxu0 0.0
        %1319 = vmatprep.mubr.f32.mxu0 0.0
        %1320 = vmatmul.mubr.f32.gmra.mxu0 %v1250
        %v1321 = vpop.f32.mrf.mxu0
        %v1322 = vadd.f32 0.0, %v1321
        %v1323 = vpop.f32.mrf.mxu0
        %1324 = vmatprep.mubr.f32.mxu0 0.0
        %1325 = vmatmul.mubr.f32.gmra.mxu0 %v1253
        %v1326 = vpop.f32.mrf.mxu0
        %v1327 = vadd.f32 0.0, %v1326
        %v1328 = vpop.f32.mrf.mxu0
        %1329 = vdwg.mxu0
        %v1330 = vadd.f32 %v284, %v1322
        %v1331 = vadd.f32 %v285, %v1327
        %v1332 = vlaneseq
        %v1333 = vshrl.u32 %v1332, 7
        %v1334 = vsub.s32 6, %v1333
        %v1335 = vrot.slane %v287, %v1334
        %v1336 = vadd.f32 %v1330, %v1335
        %v1337 = vadd.f32 %v1331, %v1335
        %v1338 = vsel %vm289, %v1336, 0.0
        %1339 = vadd.xlane.f32.xlu0 %v1338
        %v1340 = vpop.xlane.xlu0 %1339
        %v1341 = vsel %vm289, %v1337, 0.0
        %1342 = vadd.xlane.f32.xlu0 %v1341
        %v1343 = vpop.xlane.xlu0 %1342
        %v1344 = vmul.f32 %v1340, %v296
        %v1345 = vmul.f32 %v1343, %v296
        %v1346 = vsub.f32 %v1336, %v1344
        %v1347 = vsub.f32 %v1337, %v1345
        %v1348 = vmul.f32 %v1346, %v1346
        %v1349 = vmul.f32 %v1347, %v1347
        %v1350 = vsel %vm289, %v1348, 0.0
        %1351 = vadd.xlane.f32.xlu0 %v1350
        %v1352 = vpop.xlane.xlu0 %1351
        %v1353 = vsel %vm289, %v1349, 0.0
        %1354 = vadd.xlane.f32.xlu0 %v1353
        %v1355 = vpop.xlane.xlu0 %1354
        %v1356 = vmul.f32 %v1352, %v296
        %v1357 = vmul.f32 %v1355, %v296
        %v1358 = vadd.f32 %v1356, 1e-05
        %v1359 = vadd.f32 %v1357, 1e-05
        %v1360 = vrsqrt.pop %v1358
        %v1361 = vrsqrt.pop %v1359
        %v1362 = vmul.f32 %v1346, %v1360
        %v1363 = vmul.f32 %v1347, %v1361
        %v1364 = vlaneseq
        %v1365 = vshrl.u32 %v1364, 7
        %v1366 = vsub.s32 2, %v1365
        %v1367 = vrot.slane %v287, %v1366
        %v1368 = vmul.f32 %v1362, %v1367
        %v1369 = vmul.f32 %v1363, %v1367
        %v1370 = vlaneseq
        %v1371 = vshrl.u32 %v1370, 7
        %v1372 = vsub.s32 3, %v1371
        %v1373 = vrot.slane %v287, %v1372
        %v1374 = vadd.f32 %v1368, %v1373
        %v1375 = vadd.f32 %v1369, %v1373
        %v1376 = vld [vmem:[#allocation7 + $0x40] sm:$0xff]
        %v1377 = vld [vmem:[#allocation7 + $0x48] sm:$0xff]
        %v1378 = vld [vmem:[#allocation7 + $0x50] sm:$0xff]
        %v1379 = vld [vmem:[#allocation7 + $0x58] sm:$0xff]
        %v1381 = vsel %vm289, %v1374, 0
        %v1384 = vsel %vm289, %v1375, 0
        %1386 = vmatprep.subr.mxu0 0.0
        %1387 = vmatpush1.msra.mxu0 0.0
        %1388 = vmatprep.subr.mxu0 0.0
        %1389 = vmatpush1.msra.mxu0 0.0
        %1390 = vmatprep.subr.mxu0 0.0
        %1391 = vmatpush1.msra.mxu0 0.0
        %1392 = vmatprep.subr.mxu0 0.0
        %1393 = vmatpush1.msra.mxu0 0.0
        %1394 = vmatprep.subr.mxu0 0.0
        %1395 = vmatpush1.msra.mxu0 0.0
        %1396 = vmatprep.subr.mxu0 0.0
        %1397 = vmatpush1.msra.mxu0 0.0
        %1398 = vmatprep.subr.mxu0 0.0
        %1399 = vmatpush1.msra.mxu0 0.0
        %1400 = vmatprep.subr.mxu0 0.0
        %1401 = vmatpush1.msra.mxu0 0.0
        %1402 = vmatprep.subr.mxu0 0.0
        %1403 = vmatpush1.msra.mxu0 0.0
        %1404 = vmatprep.subr.mxu0 0.0
        %1405 = vmatpush1.msra.mxu0 0.0
        %1406 = vmatprep.subr.mxu0 0.0
        %1407 = vmatpush1.msra.mxu0 0.0
        %1408 = vmatprep.subr.mxu0 0.0
        %1409 = vmatpush1.msra.mxu0 0.0
        %1410 = vmatprep.subr.mxu0 0.0
        %1411 = vmatpush1.msra.mxu0 %v1379
        %1412 = vmatprep.subr.mxu0 0.0
        %1413 = vmatpush1.msra.mxu0 %v1378
        %1414 = vmatprep.subr.mxu0 0.0
        %1415 = vmatpush1.msra.mxu0 %v1377
        %1416 = vmatprep.subr.mxu0 0.0
        %1417 = vmatpush1.msra.mxu0 %v1376
        %1418 = vmatprep.subr.mxu0 0.0
        %1419 = vmatpush2.msra.mxu0 0.0
        %1420 = vmatprep.subr.mxu0 0.0
        %1421 = vmatpush2.msra.mxu0 0.0
        %1422 = vmatprep.subr.mxu0 0.0
        %1423 = vmatpush2.msra.mxu0 0.0
        %1424 = vmatprep.subr.mxu0 0.0
        %1425 = vmatpush2.msra.mxu0 0.0
        %1426 = vmatprep.subr.mxu0 0.0
        %1427 = vmatpush2.msra.mxu0 0.0
        %1428 = vmatprep.subr.mxu0 0.0
        %1429 = vmatpush2.msra.mxu0 0.0
        %1430 = vmatprep.subr.mxu0 0.0
        %1431 = vmatpush2.msra.mxu0 0.0
        %1432 = vmatprep.subr.mxu0 0.0
        %1433 = vmatpush2.msra.mxu0 0.0
        %1434 = vmatprep.subr.mxu0 0.0
        %1435 = vmatpush2.msra.mxu0 0.0
        %1436 = vmatprep.subr.mxu0 0.0
        %1437 = vmatpush2.msra.mxu0 0.0
        %1438 = vmatprep.subr.mxu0 0.0
        %1439 = vmatpush2.msra.mxu0 0.0
        %1440 = vmatprep.subr.mxu0 0.0
        %1441 = vmatpush2.msra.mxu0 0.0
        %1442 = vmatprep.subr.mxu0 0.0
        %1443 = vmatpush2.msra.mxu0 0.0
        %1444 = vmatprep.subr.mxu0 0.0
        %1445 = vmatpush2.msra.mxu0 0.0
        %1446 = vmatprep.subr.mxu0 0.0
        %1447 = vmatpush2.msra.mxu0 0.0
        %1448 = vmatprep.subr.mxu0 0.0
        %1449 = vmatpush2.msra.mxu0 0.0
        %1450 = vmatprep.mubr.f32.mxu0 0.0
        %1451 = vmatmul.mubr.f32.gmra.mxu0 %v1381
        %v1452 = vpop.f32.mrf.mxu0
        %v1453 = vadd.f32 0.0, %v1452
        %v1454 = vpop.f32.mrf.mxu0
        %1455 = vmatprep.mubr.f32.mxu0 0.0
        %1456 = vmatmul.mubr.f32.gmra.mxu0 %v1384
        %v1457 = vpop.f32.mrf.mxu0
        %v1458 = vadd.f32 0.0, %v1457
        %v1459 = vpop.f32.mrf.mxu0
        %1460 = vdwg.mxu0
        %v1461 = vld [vmem:[#allocation7 + $0x60] sm:$0xff]
        %v1462 = vld [vmem:[#allocation7 + $0x68] sm:$0xff]
        %v1463 = vld [vmem:[#allocation7 + $0x70] sm:$0xff]
        %v1464 = vld [vmem:[#allocation7 + $0x78] sm:$0xff]
        %v1466 = vsel %vm289, %v286, 0
        %1468 = vmatprep.subr.mxu0 0.0
        %1469 = vmatpush1.msra.mxu0 0.0
        %1470 = vmatprep.subr.mxu0 0.0
        %1471 = vmatpush1.msra.mxu0 0.0
        %1472 = vmatprep.subr.mxu0 0.0
        %1473 = vmatpush1.msra.mxu0 0.0
        %1474 = vmatprep.subr.mxu0 0.0
        %1475 = vmatpush1.msra.mxu0 0.0
        %1476 = vmatprep.subr.mxu0 0.0
        %1477 = vmatpush1.msra.mxu0 0.0
        %1478 = vmatprep.subr.mxu0 0.0
        %1479 = vmatpush1.msra.mxu0 0.0
        %1480 = vmatprep.subr.mxu0 0.0
        %1481 = vmatpush1.msra.mxu0 0.0
        %1482 = vmatprep.subr.mxu0 0.0
        %1483 = vmatpush1.msra.mxu0 0.0
        %1484 = vmatprep.subr.mxu0 0.0
        %1485 = vmatpush1.msra.mxu0 0.0
        %1486 = vmatprep.subr.mxu0 0.0
        %1487 = vmatpush1.msra.mxu0 0.0
        %1488 = vmatprep.subr.mxu0 0.0
        %1489 = vmatpush1.msra.mxu0 0.0
        %1490 = vmatprep.subr.mxu0 0.0
        %1491 = vmatpush1.msra.mxu0 0.0
        %1492 = vmatprep.subr.mxu0 0.0
        %1493 = vmatpush1.msra.mxu0 %v1464
        %1494 = vmatprep.subr.mxu0 0.0
        %1495 = vmatpush1.msra.mxu0 %v1463
        %1496 = vmatprep.subr.mxu0 0.0
        %1497 = vmatpush1.msra.mxu0 %v1462
        %1498 = vmatprep.subr.mxu0 0.0
        %1499 = vmatpush1.msra.mxu0 %v1461
        %1500 = vmatprep.subr.mxu0 0.0
        %1501 = vmatpush2.msra.mxu0 0.0
        %1502 = vmatprep.subr.mxu0 0.0
        %1503 = vmatpush2.msra.mxu0 0.0
        %1504 = vmatprep.subr.mxu0 0.0
        %1505 = vmatpush2.msra.mxu0 0.0
        %1506 = vmatprep.subr.mxu0 0.0
        %1507 = vmatpush2.msra.mxu0 0.0
        %1508 = vmatprep.subr.mxu0 0.0
        %1509 = vmatpush2.msra.mxu0 0.0
        %1510 = vmatprep.subr.mxu0 0.0
        %1511 = vmatpush2.msra.mxu0 0.0
        %1512 = vmatprep.subr.mxu0 0.0
        %1513 = vmatpush2.msra.mxu0 0.0
        %1514 = vmatprep.subr.mxu0 0.0
        %1515 = vmatpush2.msra.mxu0 0.0
        %1516 = vmatprep.subr.mxu0 0.0
        %1517 = vmatpush2.msra.mxu0 0.0
        %1518 = vmatprep.subr.mxu0 0.0
        %1519 = vmatpush2.msra.mxu0 0.0
        %1520 = vmatprep.subr.mxu0 0.0
        %1521 = vmatpush2.msra.mxu0 0.0
        %1522 = vmatprep.subr.mxu0 0.0
        %1523 = vmatpush2.msra.mxu0 0.0
        %1524 = vmatprep.subr.mxu0 0.0
        %1525 = vmatpush2.msra.mxu0 0.0
        %1526 = vmatprep.subr.mxu0 0.0
        %1527 = vmatpush2.msra.mxu0 0.0
        %1528 = vmatprep.subr.mxu0 0.0
        %1529 = vmatpush2.msra.mxu0 0.0
        %1530 = vmatprep.subr.mxu0 0.0
        %1531 = vmatpush2.msra.mxu0 0.0
        %1532 = vmatprep.mubr.f32.mxu0 0.0
        %1533 = vmatmul.mubr.f32.gmra.mxu0 %v1466
        %v1534 = vpop.f32.mrf.mxu0
        %v1535 = vadd.f32 0.0, %v1534
        %v1536 = vpop.f32.mrf.mxu0
        %1537 = vdwg.mxu0
        %1540 = vrot.lane.b32.xlu0 %v1453, 120
        %v1541 = vpop.permute.xlu0 %1540
        %1542 = vrot.lane.b32.xlu0 %v1458, 120
        %v1543 = vpop.permute.xlu0 %1542
        %1544 = vrot.lane.b32.xlu0 %v1453, 112
        %v1545 = vpop.permute.xlu0 %1544
        %1546 = vrot.lane.b32.xlu0 %v1458, 112
        %v1547 = vpop.permute.xlu0 %1546
        %1548 = vrot.lane.b32.xlu0 %v1453, 104
        %v1549 = vpop.permute.xlu0 %1548
        %1550 = vrot.lane.b32.xlu0 %v1458, 104
        %v1551 = vpop.permute.xlu0 %1550
        %1553 = vrot.lane.b32.xlu0 %v1535, 120
        %v1554 = vpop.permute.xlu0 %1553
        %1555 = vrot.lane.b32.xlu0 %v1535, 112
        %v1556 = vpop.permute.xlu0 %1555
        %1557 = vrot.lane.b32.xlu0 %v1535, 104
        %v1558 = vpop.permute.xlu0 %1557
        %v1559 = vsel %vm432, %v1453, 0
        %v1561 = vsel %vm432, %v1458, 0
        %v1563 = vsel %vm432, %v1535, 0
        %1565 = vmatprep.subr.mxu0 0.0
        %1566 = vmatpush1.xpose.msra.mxu0 0.0
        %1567 = vmatprep.subr.mxu0 0.0
        %1568 = vmatpush1.xpose.msra.mxu0 0.0
        %1569 = vmatprep.subr.mxu0 0.0
        %1570 = vmatpush1.xpose.msra.mxu0 0.0
        %1571 = vmatprep.subr.mxu0 0.0
        %1572 = vmatpush1.xpose.msra.mxu0 0.0
        %1573 = vmatprep.subr.mxu0 0.0
        %1574 = vmatpush1.xpose.msra.mxu0 0.0
        %1575 = vmatprep.subr.mxu0 0.0
        %1576 = vmatpush1.xpose.msra.mxu0 0.0
        %1577 = vmatprep.subr.mxu0 0.0
        %1578 = vmatpush1.xpose.msra.mxu0 0.0
        %1579 = vmatprep.subr.mxu0 0.0
        %1580 = vmatpush1.xpose.msra.mxu0 0.0
        %1581 = vmatprep.subr.mxu0 0.0
        %1582 = vmatpush1.xpose.msra.mxu0 0.0
        %1583 = vmatprep.subr.mxu0 0.0
        %1584 = vmatpush1.xpose.msra.mxu0 0.0
        %1585 = vmatprep.subr.mxu0 0.0
        %1586 = vmatpush1.xpose.msra.mxu0 0.0
        %1587 = vmatprep.subr.mxu0 0.0
        %1588 = vmatpush1.xpose.msra.mxu0 0.0
        %1589 = vmatprep.subr.mxu0 0.0
        %1590 = vmatpush1.xpose.msra.mxu0 0.0
        %1591 = vmatprep.subr.mxu0 0.0
        %1592 = vmatpush1.xpose.msra.mxu0 0.0
        %1593 = vmatprep.subr.mxu0 0.0
        %1594 = vmatpush1.xpose.msra.mxu0 0.0
        %1595 = vmatprep.subr.mxu0 0.0
        %1596 = vmatpush1.xpose.msra.mxu0 %v1563
        %1597 = vmatprep.subr.mxu0 0.0
        %1598 = vmatpush2.xpose.msra.mxu0 0.0
        %1599 = vmatprep.subr.mxu0 0.0
        %1600 = vmatpush2.xpose.msra.mxu0 0.0
        %1601 = vmatprep.subr.mxu0 0.0
        %1602 = vmatpush2.xpose.msra.mxu0 0.0
        %1603 = vmatprep.subr.mxu0 0.0
        %1604 = vmatpush2.xpose.msra.mxu0 0.0
        %1605 = vmatprep.subr.mxu0 0.0
        %1606 = vmatpush2.xpose.msra.mxu0 0.0
        %1607 = vmatprep.subr.mxu0 0.0
        %1608 = vmatpush2.xpose.msra.mxu0 0.0
        %1609 = vmatprep.subr.mxu0 0.0
        %1610 = vmatpush2.xpose.msra.mxu0 0.0
        %1611 = vmatprep.subr.mxu0 0.0
        %1612 = vmatpush2.xpose.msra.mxu0 0.0
        %1613 = vmatprep.subr.mxu0 0.0
        %1614 = vmatpush2.xpose.msra.mxu0 0.0
        %1615 = vmatprep.subr.mxu0 0.0
        %1616 = vmatpush2.xpose.msra.mxu0 0.0
        %1617 = vmatprep.subr.mxu0 0.0
        %1618 = vmatpush2.xpose.msra.mxu0 0.0
        %1619 = vmatprep.subr.mxu0 0.0
        %1620 = vmatpush2.xpose.msra.mxu0 0.0
        %1621 = vmatprep.subr.mxu0 0.0
        %1622 = vmatpush2.xpose.msra.mxu0 0.0
        %1623 = vmatprep.subr.mxu0 0.0
        %1624 = vmatpush2.xpose.msra.mxu0 0.0
        %1625 = vmatprep.subr.mxu0 0.0
        %1626 = vmatpush2.xpose.msra.mxu0 0.0
        %1627 = vmatprep.subr.mxu0 0.0
        %1628 = vmatpush2.xpose.msra.mxu0 0.0
        %1629 = vmatprep.mubr.f32.mxu0 0.0
        %1630 = vmatmul.mubr.f32.gmra.mxu0 %v1559
        %v1631 = vpop.f32.mrf.mxu0
        %v1632 = vadd.f32 0.0, %v1631
        %v1633 = vpop.f32.mrf.mxu0
        %1634 = vmatprep.mubr.f32.mxu0 0.0
        %1635 = vmatmul.mubr.f32.gmra.mxu0 %v1561
        %v1636 = vpop.f32.mrf.mxu0
        %v1637 = vadd.f32 0.0, %v1636
        %v1638 = vpop.f32.mrf.mxu0
        %1639 = vdwg.mxu0
        %v1640 = vsel %vm432, %v1541, 0
        %v1642 = vsel %vm432, %v1543, 0
        %v1644 = vsel %vm432, %v1554, 0
        %1646 = vmatprep.subr.mxu0 0.0
        %1647 = vmatpush1.xpose.msra.mxu0 0.0
        %1648 = vmatprep.subr.mxu0 0.0
        %1649 = vmatpush1.xpose.msra.mxu0 0.0
        %1650 = vmatprep.subr.mxu0 0.0
        %1651 = vmatpush1.xpose.msra.mxu0 0.0
        %1652 = vmatprep.subr.mxu0 0.0
        %1653 = vmatpush1.xpose.msra.mxu0 0.0
        %1654 = vmatprep.subr.mxu0 0.0
        %1655 = vmatpush1.xpose.msra.mxu0 0.0
        %1656 = vmatprep.subr.mxu0 0.0
        %1657 = vmatpush1.xpose.msra.mxu0 0.0
        %1658 = vmatprep.subr.mxu0 0.0
        %1659 = vmatpush1.xpose.msra.mxu0 0.0
        %1660 = vmatprep.subr.mxu0 0.0
        %1661 = vmatpush1.xpose.msra.mxu0 0.0
        %1662 = vmatprep.subr.mxu0 0.0
        %1663 = vmatpush1.xpose.msra.mxu0 0.0
        %1664 = vmatprep.subr.mxu0 0.0
        %1665 = vmatpush1.xpose.msra.mxu0 0.0
        %1666 = vmatprep.subr.mxu0 0.0
        %1667 = vmatpush1.xpose.msra.mxu0 0.0
        %1668 = vmatprep.subr.mxu0 0.0
        %1669 = vmatpush1.xpose.msra.mxu0 0.0
        %1670 = vmatprep.subr.mxu0 0.0
        %1671 = vmatpush1.xpose.msra.mxu0 0.0
        %1672 = vmatprep.subr.mxu0 0.0
        %1673 = vmatpush1.xpose.msra.mxu0 0.0
        %1674 = vmatprep.subr.mxu0 0.0
        %1675 = vmatpush1.xpose.msra.mxu0 0.0
        %1676 = vmatprep.subr.mxu0 0.0
        %1677 = vmatpush1.xpose.msra.mxu0 %v1644
        %1678 = vmatprep.subr.mxu0 0.0
        %1679 = vmatpush2.xpose.msra.mxu0 0.0
        %1680 = vmatprep.subr.mxu0 0.0
        %1681 = vmatpush2.xpose.msra.mxu0 0.0
        %1682 = vmatprep.subr.mxu0 0.0
        %1683 = vmatpush2.xpose.msra.mxu0 0.0
        %1684 = vmatprep.subr.mxu0 0.0
        %1685 = vmatpush2.xpose.msra.mxu0 0.0
        %1686 = vmatprep.subr.mxu0 0.0
        %1687 = vmatpush2.xpose.msra.mxu0 0.0
        %1688 = vmatprep.subr.mxu0 0.0
        %1689 = vmatpush2.xpose.msra.mxu0 0.0
        %1690 = vmatprep.subr.mxu0 0.0
        %1691 = vmatpush2.xpose.msra.mxu0 0.0
        %1692 = vmatprep.subr.mxu0 0.0
        %1693 = vmatpush2.xpose.msra.mxu0 0.0
        %1694 = vmatprep.subr.mxu0 0.0
        %1695 = vmatpush2.xpose.msra.mxu0 0.0
        %1696 = vmatprep.subr.mxu0 0.0
        %1697 = vmatpush2.xpose.msra.mxu0 0.0
        %1698 = vmatprep.subr.mxu0 0.0
        %1699 = vmatpush2.xpose.msra.mxu0 0.0
        %1700 = vmatprep.subr.mxu0 0.0
        %1701 = vmatpush2.xpose.msra.mxu0 0.0
        %1702 = vmatprep.subr.mxu0 0.0
        %1703 = vmatpush2.xpose.msra.mxu0 0.0
        %1704 = vmatprep.subr.mxu0 0.0
        %1705 = vmatpush2.xpose.msra.mxu0 0.0
        %1706 = vmatprep.subr.mxu0 0.0
        %1707 = vmatpush2.xpose.msra.mxu0 0.0
        %1708 = vmatprep.subr.mxu0 0.0
        %1709 = vmatpush2.xpose.msra.mxu0 0.0
        %1710 = vmatprep.mubr.f32.mxu0 0.0
        %1711 = vmatmul.mubr.f32.gmra.mxu0 %v1640
        %v1712 = vpop.f32.mrf.mxu0
        %v1713 = vadd.f32 0.0, %v1712
        %v1714 = vpop.f32.mrf.mxu0
        %1715 = vmatprep.mubr.f32.mxu0 0.0
        %1716 = vmatmul.mubr.f32.gmra.mxu0 %v1642
        %v1717 = vpop.f32.mrf.mxu0
        %v1718 = vadd.f32 0.0, %v1717
        %v1719 = vpop.f32.mrf.mxu0
        %1720 = vdwg.mxu0
        %v1721 = vsel %vm432, %v1545, 0
        %v1723 = vsel %vm432, %v1547, 0
        %v1725 = vsel %vm432, %v1556, 0
        %1727 = vmatprep.subr.mxu0 0.0
        %1728 = vmatpush1.xpose.msra.mxu0 0.0
        %1729 = vmatprep.subr.mxu0 0.0
        %1730 = vmatpush1.xpose.msra.mxu0 0.0
        %1731 = vmatprep.subr.mxu0 0.0
        %1732 = vmatpush1.xpose.msra.mxu0 0.0
        %1733 = vmatprep.subr.mxu0 0.0
        %1734 = vmatpush1.xpose.msra.mxu0 0.0
        %1735 = vmatprep.subr.mxu0 0.0
        %1736 = vmatpush1.xpose.msra.mxu0 0.0
        %1737 = vmatprep.subr.mxu0 0.0
        %1738 = vmatpush1.xpose.msra.mxu0 0.0
        %1739 = vmatprep.subr.mxu0 0.0
        %1740 = vmatpush1.xpose.msra.mxu0 0.0
        %1741 = vmatprep.subr.mxu0 0.0
        %1742 = vmatpush1.xpose.msra.mxu0 0.0
        %1743 = vmatprep.subr.mxu0 0.0
        %1744 = vmatpush1.xpose.msra.mxu0 0.0
        %1745 = vmatprep.subr.mxu0 0.0
        %1746 = vmatpush1.xpose.msra.mxu0 0.0
        %1747 = vmatprep.subr.mxu0 0.0
        %1748 = vmatpush1.xpose.msra.mxu0 0.0
        %1749 = vmatprep.subr.mxu0 0.0
        %1750 = vmatpush1.xpose.msra.mxu0 0.0
        %1751 = vmatprep.subr.mxu0 0.0
        %1752 = vmatpush1.xpose.msra.mxu0 0.0
        %1753 = vmatprep.subr.mxu0 0.0
        %1754 = vmatpush1.xpose.msra.mxu0 0.0
        %1755 = vmatprep.subr.mxu0 0.0
        %1756 = vmatpush1.xpose.msra.mxu0 0.0
        %1757 = vmatprep.subr.mxu0 0.0
        %1758 = vmatpush1.xpose.msra.mxu0 %v1725
        %1759 = vmatprep.subr.mxu0 0.0
        %1760 = vmatpush2.xpose.msra.mxu0 0.0
        %1761 = vmatprep.subr.mxu0 0.0
        %1762 = vmatpush2.xpose.msra.mxu0 0.0
        %1763 = vmatprep.subr.mxu0 0.0
        %1764 = vmatpush2.xpose.msra.mxu0 0.0
        %1765 = vmatprep.subr.mxu0 0.0
        %1766 = vmatpush2.xpose.msra.mxu0 0.0
        %1767 = vmatprep.subr.mxu0 0.0
        %1768 = vmatpush2.xpose.msra.mxu0 0.0
        %1769 = vmatprep.subr.mxu0 0.0
        %1770 = vmatpush2.xpose.msra.mxu0 0.0
        %1771 = vmatprep.subr.mxu0 0.0
        %1772 = vmatpush2.xpose.msra.mxu0 0.0
        %1773 = vmatprep.subr.mxu0 0.0
        %1774 = vmatpush2.xpose.msra.mxu0 0.0
        %1775 = vmatprep.subr.mxu0 0.0
        %1776 = vmatpush2.xpose.msra.mxu0 0.0
        %1777 = vmatprep.subr.mxu0 0.0
        %1778 = vmatpush2.xpose.msra.mxu0 0.0
        %1779 = vmatprep.subr.mxu0 0.0
        %1780 = vmatpush2.xpose.msra.mxu0 0.0
        %1781 = vmatprep.subr.mxu0 0.0
        %1782 = vmatpush2.xpose.msra.mxu0 0.0
        %1783 = vmatprep.subr.mxu0 0.0
        %1784 = vmatpush2.xpose.msra.mxu0 0.0
        %1785 = vmatprep.subr.mxu0 0.0
        %1786 = vmatpush2.xpose.msra.mxu0 0.0
        %1787 = vmatprep.subr.mxu0 0.0
        %1788 = vmatpush2.xpose.msra.mxu0 0.0
        %1789 = vmatprep.subr.mxu0 0.0
        %1790 = vmatpush2.xpose.msra.mxu0 0.0
        %1791 = vmatprep.mubr.f32.mxu0 0.0
        %1792 = vmatmul.mubr.f32.gmra.mxu0 %v1721
        %v1793 = vpop.f32.mrf.mxu0
        %v1794 = vadd.f32 0.0, %v1793
        %v1795 = vpop.f32.mrf.mxu0
        %1796 = vmatprep.mubr.f32.mxu0 0.0
        %1797 = vmatmul.mubr.f32.gmra.mxu0 %v1723
        %v1798 = vpop.f32.mrf.mxu0
        %v1799 = vadd.f32 0.0, %v1798
        %v1800 = vpop.f32.mrf.mxu0
        %1801 = vdwg.mxu0
        %v1802 = vsel %vm432, %v1549, 0
        %v1804 = vsel %vm432, %v1551, 0
        %v1806 = vsel %vm432, %v1558, 0
        %1808 = vmatprep.subr.mxu0 0.0
        %1809 = vmatpush1.xpose.msra.mxu0 0.0
        %1810 = vmatprep.subr.mxu0 0.0
        %1811 = vmatpush1.xpose.msra.mxu0 0.0
        %1812 = vmatprep.subr.mxu0 0.0
        %1813 = vmatpush1.xpose.msra.mxu0 0.0
        %1814 = vmatprep.subr.mxu0 0.0
        %1815 = vmatpush1.xpose.msra.mxu0 0.0
        %1816 = vmatprep.subr.mxu0 0.0
        %1817 = vmatpush1.xpose.msra.mxu0 0.0
        %1818 = vmatprep.subr.mxu0 0.0
        %1819 = vmatpush1.xpose.msra.mxu0 0.0
        %1820 = vmatprep.subr.mxu0 0.0
        %1821 = vmatpush1.xpose.msra.mxu0 0.0
        %1822 = vmatprep.subr.mxu0 0.0
        %1823 = vmatpush1.xpose.msra.mxu0 0.0
        %1824 = vmatprep.subr.mxu0 0.0
        %1825 = vmatpush1.xpose.msra.mxu0 0.0
        %1826 = vmatprep.subr.mxu0 0.0
        %1827 = vmatpush1.xpose.msra.mxu0 0.0
        %1828 = vmatprep.subr.mxu0 0.0
        %1829 = vmatpush1.xpose.msra.mxu0 0.0
        %1830 = vmatprep.subr.mxu0 0.0
        %1831 = vmatpush1.xpose.msra.mxu0 0.0
        %1832 = vmatprep.subr.mxu0 0.0
        %1833 = vmatpush1.xpose.msra.mxu0 0.0
        %1834 = vmatprep.subr.mxu0 0.0
        %1835 = vmatpush1.xpose.msra.mxu0 0.0
        %1836 = vmatprep.subr.mxu0 0.0
        %1837 = vmatpush1.xpose.msra.mxu0 0.0
        %1838 = vmatprep.subr.mxu0 0.0
        %1839 = vmatpush1.xpose.msra.mxu0 %v1806
        %1840 = vmatprep.subr.mxu0 0.0
        %1841 = vmatpush2.xpose.msra.mxu0 0.0
        %1842 = vmatprep.subr.mxu0 0.0
        %1843 = vmatpush2.xpose.msra.mxu0 0.0
        %1844 = vmatprep.subr.mxu0 0.0
        %1845 = vmatpush2.xpose.msra.mxu0 0.0
        %1846 = vmatprep.subr.mxu0 0.0
        %1847 = vmatpush2.xpose.msra.mxu0 0.0
        %1848 = vmatprep.subr.mxu0 0.0
        %1849 = vmatpush2.xpose.msra.mxu0 0.0
        %1850 = vmatprep.subr.mxu0 0.0
        %1851 = vmatpush2.xpose.msra.mxu0 0.0
        %1852 = vmatprep.subr.mxu0 0.0
        %1853 = vmatpush2.xpose.msra.mxu0 0.0
        %1854 = vmatprep.subr.mxu0 0.0
        %1855 = vmatpush2.xpose.msra.mxu0 0.0
        %1856 = vmatprep.subr.mxu0 0.0
        %1857 = vmatpush2.xpose.msra.mxu0 0.0
        %1858 = vmatprep.subr.mxu0 0.0
        %1859 = vmatpush2.xpose.msra.mxu0 0.0
        %1860 = vmatprep.subr.mxu0 0.0
        %1861 = vmatpush2.xpose.msra.mxu0 0.0
        %1862 = vmatprep.subr.mxu0 0.0
        %1863 = vmatpush2.xpose.msra.mxu0 0.0
        %1864 = vmatprep.subr.mxu0 0.0
        %1865 = vmatpush2.xpose.msra.mxu0 0.0
        %1866 = vmatprep.subr.mxu0 0.0
        %1867 = vmatpush2.xpose.msra.mxu0 0.0
        %1868 = vmatprep.subr.mxu0 0.0
        %1869 = vmatpush2.xpose.msra.mxu0 0.0
        %1870 = vmatprep.subr.mxu0 0.0
        %1871 = vmatpush2.xpose.msra.mxu0 0.0
        %1872 = vmatprep.mubr.f32.mxu0 0.0
        %1873 = vmatmul.mubr.f32.gmra.mxu0 %v1802
        %v1874 = vpop.f32.mrf.mxu0
        %v1875 = vadd.f32 0.0, %v1874
        %v1876 = vpop.f32.mrf.mxu0
        %1877 = vmatprep.mubr.f32.mxu0 0.0
        %1878 = vmatmul.mubr.f32.gmra.mxu0 %v1804
        %v1879 = vpop.f32.mrf.mxu0
        %v1880 = vadd.f32 0.0, %v1879
        %v1881 = vpop.f32.mrf.mxu0
        %1882 = vdwg.mxu0
        %v1883 = vsel %vm432, %v1632, -inf
        %1884 = vmax.xlane.f32.xlu0 %v1883
        %v1885 = vpop.xlane.xlu0 %1884
        %v1886 = vsel %vm432, %v1637, -inf
        %1887 = vmax.xlane.f32.xlu0 %v1886
        %v1888 = vpop.xlane.xlu0 %1887
        %v1889 = vsel %vm432, %v1713, -inf
        %1890 = vmax.xlane.f32.xlu0 %v1889
        %v1891 = vpop.xlane.xlu0 %1890
        %v1892 = vsel %vm432, %v1718, -inf
        %1893 = vmax.xlane.f32.xlu0 %v1892
        %v1894 = vpop.xlane.xlu0 %1893
        %v1895 = vsel %vm432, %v1794, -inf
        %1896 = vmax.xlane.f32.xlu0 %v1895
        %v1897 = vpop.xlane.xlu0 %1896
        %v1898 = vsel %vm432, %v1799, -inf
        %1899 = vmax.xlane.f32.xlu0 %v1898
        %v1900 = vpop.xlane.xlu0 %1899
        %v1901 = vsel %vm432, %v1875, -inf
        %1902 = vmax.xlane.f32.xlu0 %v1901
        %v1903 = vpop.xlane.xlu0 %1902
        %v1904 = vsel %vm432, %v1880, -inf
        %1905 = vmax.xlane.f32.xlu0 %v1904
        %v1906 = vpop.xlane.xlu0 %1905
        %v1907 = vsub.f32 %v1632, %v1885
        %v1908 = vsub.f32 %v1637, %v1888
        %v1909 = vsub.f32 %v1713, %v1891
        %v1910 = vsub.f32 %v1718, %v1894
        %v1911 = vsub.f32 %v1794, %v1897
        %v1912 = vsub.f32 %v1799, %v1900
        %v1913 = vsub.f32 %v1875, %v1903
        %v1914 = vsub.f32 %v1880, %v1906
        %v1915 = vmul.f32 %v1907, 1.442695
        %v1916 = vpow.pop %v1915
        %v1917 = vmul.f32 %v1908, 1.442695
        %v1918 = vpow.pop %v1917
        %v1919 = vmul.f32 %v1909, 1.442695
        %v1920 = vpow.pop %v1919
        %v1921 = vmul.f32 %v1910, 1.442695
        %v1922 = vpow.pop %v1921
        %v1923 = vmul.f32 %v1911, 1.442695
        %v1924 = vpow.pop %v1923
        %v1925 = vmul.f32 %v1912, 1.442695
        %v1926 = vpow.pop %v1925
        %v1927 = vmul.f32 %v1913, 1.442695
        %v1928 = vpow.pop %v1927
        %v1929 = vmul.f32 %v1914, 1.442695
        %v1930 = vpow.pop %v1929
        %v1931 = vsel %vm432, %v1916, 0.0
        %1932 = vadd.xlane.f32.xlu0 %v1931
        %v1933 = vpop.xlane.xlu0 %1932
        %v1934 = vsel %vm432, %v1918, 0.0
        %1935 = vadd.xlane.f32.xlu0 %v1934
        %v1936 = vpop.xlane.xlu0 %1935
        %v1937 = vsel %vm432, %v1920, 0.0
        %1938 = vadd.xlane.f32.xlu0 %v1937
        %v1939 = vpop.xlane.xlu0 %1938
        %v1940 = vsel %vm432, %v1922, 0.0
        %1941 = vadd.xlane.f32.xlu0 %v1940
        %v1942 = vpop.xlane.xlu0 %1941
        %v1943 = vsel %vm432, %v1924, 0.0
        %1944 = vadd.xlane.f32.xlu0 %v1943
        %v1945 = vpop.xlane.xlu0 %1944
        %v1946 = vsel %vm432, %v1926, 0.0
        %1947 = vadd.xlane.f32.xlu0 %v1946
        %v1948 = vpop.xlane.xlu0 %1947
        %v1949 = vsel %vm432, %v1928, 0.0
        %1950 = vadd.xlane.f32.xlu0 %v1949
        %v1951 = vpop.xlane.xlu0 %1950
        %v1952 = vsel %vm432, %v1930, 0.0
        %1953 = vadd.xlane.f32.xlu0 %v1952
        %v1954 = vpop.xlane.xlu0 %1953
        %v1955 = vrcp.pop %v1933
        %v1956 = vrcp.pop %v1936
        %v1957 = vrcp.pop %v1939
        %v1958 = vrcp.pop %v1942
        %v1959 = vrcp.pop %v1945
        %v1960 = vrcp.pop %v1948
        %v1961 = vrcp.pop %v1951
        %v1962 = vrcp.pop %v1954
        %v1963 = vmul.f32 %v1916, %v1955
        %v1964 = vmul.f32 %v1918, %v1956
        %v1965 = vmul.f32 %v1920, %v1957
        %v1966 = vmul.f32 %v1922, %v1958
        %v1967 = vmul.f32 %v1924, %v1959
        %v1968 = vmul.f32 %v1926, %v1960
        %v1969 = vmul.f32 %v1928, %v1961
        %v1970 = vmul.f32 %v1930, %v1962
        %1971 = vrot.lane.b32.xlu0 %v1535, 96
        %v1972 = vpop.permute.xlu0 %1971
        %v1975 = vsel %vm432, %v1963, 0
        %v1978 = vsel %vm432, %v1964, 0
        %1980 = vmatprep.subr.mxu0 0.0
        %1981 = vmatpush1.msra.mxu0 0.0
        %1982 = vmatprep.subr.mxu0 0.0
        %1983 = vmatpush1.msra.mxu0 0.0
        %1984 = vmatprep.subr.mxu0 0.0
        %1985 = vmatpush1.msra.mxu0 0.0
        %1986 = vmatprep.subr.mxu0 0.0
        %1987 = vmatpush1.msra.mxu0 0.0
        %1988 = vmatprep.subr.mxu0 0.0
        %1989 = vmatpush1.msra.mxu0 0.0
        %1990 = vmatprep.subr.mxu0 0.0
        %1991 = vmatpush1.msra.mxu0 0.0
        %1992 = vmatprep.subr.mxu0 0.0
        %1993 = vmatpush1.msra.mxu0 0.0
        %1994 = vmatprep.subr.mxu0 0.0
        %1995 = vmatpush1.msra.mxu0 0.0
        %1996 = vmatprep.subr.mxu0 0.0
        %1997 = vmatpush1.msra.mxu0 0.0
        %1998 = vmatprep.subr.mxu0 0.0
        %1999 = vmatpush1.msra.mxu0 0.0
        %2000 = vmatprep.subr.mxu0 0.0
        %2001 = vmatpush1.msra.mxu0 0.0
        %2002 = vmatprep.subr.mxu0 0.0
        %2003 = vmatpush1.msra.mxu0 0.0
        %2004 = vmatprep.subr.mxu0 0.0
        %2005 = vmatpush1.msra.mxu0 0.0
        %2006 = vmatprep.subr.mxu0 0.0
        %2007 = vmatpush1.msra.mxu0 0.0
        %2008 = vmatprep.subr.mxu0 0.0
        %2009 = vmatpush1.msra.mxu0 0.0
        %2010 = vmatprep.subr.mxu0 0.0
        %2011 = vmatpush1.msra.mxu0 %v1972
        %2012 = vmatprep.subr.mxu0 0.0
        %2013 = vmatpush2.msra.mxu0 0.0
        %2014 = vmatprep.subr.mxu0 0.0
        %2015 = vmatpush2.msra.mxu0 0.0
        %2016 = vmatprep.subr.mxu0 0.0
        %2017 = vmatpush2.msra.mxu0 0.0
        %2018 = vmatprep.subr.mxu0 0.0
        %2019 = vmatpush2.msra.mxu0 0.0
        %2020 = vmatprep.subr.mxu0 0.0
        %2021 = vmatpush2.msra.mxu0 0.0
        %2022 = vmatprep.subr.mxu0 0.0
        %2023 = vmatpush2.msra.mxu0 0.0
        %2024 = vmatprep.subr.mxu0 0.0
        %2025 = vmatpush2.msra.mxu0 0.0
        %2026 = vmatprep.subr.mxu0 0.0
        %2027 = vmatpush2.msra.mxu0 0.0
        %2028 = vmatprep.subr.mxu0 0.0
        %2029 = vmatpush2.msra.mxu0 0.0
        %2030 = vmatprep.subr.mxu0 0.0
        %2031 = vmatpush2.msra.mxu0 0.0
        %2032 = vmatprep.subr.mxu0 0.0
        %2033 = vmatpush2.msra.mxu0 0.0
        %2034 = vmatprep.subr.mxu0 0.0
        %2035 = vmatpush2.msra.mxu0 0.0
        %2036 = vmatprep.subr.mxu0 0.0
        %2037 = vmatpush2.msra.mxu0 0.0
        %2038 = vmatprep.subr.mxu0 0.0
        %2039 = vmatpush2.msra.mxu0 0.0
        %2040 = vmatprep.subr.mxu0 0.0
        %2041 = vmatpush2.msra.mxu0 0.0
        %2042 = vmatprep.subr.mxu0 0.0
        %2043 = vmatpush2.msra.mxu0 0.0
        %2044 = vmatprep.mubr.f32.mxu0 0.0
        %2045 = vmatmul.mubr.f32.gmra.mxu0 %v1975
        %v2046 = vpop.f32.mrf.mxu0
        %v2047 = vadd.f32 0.0, %v2046
        %v2048 = vpop.f32.mrf.mxu0
        %2049 = vmatprep.mubr.f32.mxu0 0.0
        %2050 = vmatmul.mubr.f32.gmra.mxu0 %v1978
        %v2051 = vpop.f32.mrf.mxu0
        %v2052 = vadd.f32 0.0, %v2051
        %v2053 = vpop.f32.mrf.mxu0
        %2054 = vdwg.mxu0
        %2055 = vrot.lane.b32.xlu0 %v1554, 96
        %v2056 = vpop.permute.xlu0 %2055
        %v2059 = vsel %vm432, %v1965, 0
        %v2062 = vsel %vm432, %v1966, 0
        %2064 = vmatprep.subr.mxu0 0.0
        %2065 = vmatpush1.msra.mxu0 0.0
        %2066 = vmatprep.subr.mxu0 0.0
        %2067 = vmatpush1.msra.mxu0 0.0
        %2068 = vmatprep.subr.mxu0 0.0
        %2069 = vmatpush1.msra.mxu0 0.0
        %2070 = vmatprep.subr.mxu0 0.0
        %2071 = vmatpush1.msra.mxu0 0.0
        %2072 = vmatprep.subr.mxu0 0.0
        %2073 = vmatpush1.msra.mxu0 0.0
        %2074 = vmatprep.subr.mxu0 0.0
        %2075 = vmatpush1.msra.mxu0 0.0
        %2076 = vmatprep.subr.mxu0 0.0
        %2077 = vmatpush1.msra.mxu0 0.0
        %2078 = vmatprep.subr.mxu0 0.0
        %2079 = vmatpush1.msra.mxu0 0.0
        %2080 = vmatprep.subr.mxu0 0.0
        %2081 = vmatpush1.msra.mxu0 0.0
        %2082 = vmatprep.subr.mxu0 0.0
        %2083 = vmatpush1.msra.mxu0 0.0
        %2084 = vmatprep.subr.mxu0 0.0
        %2085 = vmatpush1.msra.mxu0 0.0
        %2086 = vmatprep.subr.mxu0 0.0
        %2087 = vmatpush1.msra.mxu0 0.0
        %2088 = vmatprep.subr.mxu0 0.0
        %2089 = vmatpush1.msra.mxu0 0.0
        %2090 = vmatprep.subr.mxu0 0.0
        %2091 = vmatpush1.msra.mxu0 0.0
        %2092 = vmatprep.subr.mxu0 0.0
        %2093 = vmatpush1.msra.mxu0 0.0
        %2094 = vmatprep.subr.mxu0 0.0
        %2095 = vmatpush1.msra.mxu0 %v2056
        %2096 = vmatprep.subr.mxu0 0.0
        %2097 = vmatpush2.msra.mxu0 0.0
        %2098 = vmatprep.subr.mxu0 0.0
        %2099 = vmatpush2.msra.mxu0 0.0
        %2100 = vmatprep.subr.mxu0 0.0
        %2101 = vmatpush2.msra.mxu0 0.0
        %2102 = vmatprep.subr.mxu0 0.0
        %2103 = vmatpush2.msra.mxu0 0.0
        %2104 = vmatprep.subr.mxu0 0.0
        %2105 = vmatpush2.msra.mxu0 0.0
        %2106 = vmatprep.subr.mxu0 0.0
        %2107 = vmatpush2.msra.mxu0 0.0
        %2108 = vmatprep.subr.mxu0 0.0
        %2109 = vmatpush2.msra.mxu0 0.0
        %2110 = vmatprep.subr.mxu0 0.0
        %2111 = vmatpush2.msra.mxu0 0.0
        %2112 = vmatprep.subr.mxu0 0.0
        %2113 = vmatpush2.msra.mxu0 0.0
        %2114 = vmatprep.subr.mxu0 0.0
        %2115 = vmatpush2.msra.mxu0 0.0
        %2116 = vmatprep.subr.mxu0 0.0
        %2117 = vmatpush2.msra.mxu0 0.0
        %2118 = vmatprep.subr.mxu0 0.0
        %2119 = vmatpush2.msra.mxu0 0.0
        %2120 = vmatprep.subr.mxu0 0.0
        %2121 = vmatpush2.msra.mxu0 0.0
        %2122 = vmatprep.subr.mxu0 0.0
        %2123 = vmatpush2.msra.mxu0 0.0
        %2124 = vmatprep.subr.mxu0 0.0
        %2125 = vmatpush2.msra.mxu0 0.0
        %2126 = vmatprep.subr.mxu0 0.0
        %2127 = vmatpush2.msra.mxu0 0.0
        %2128 = vmatprep.mubr.f32.mxu0 0.0
        %2129 = vmatmul.mubr.f32.gmra.mxu0 %v2059
        %v2130 = vpop.f32.mrf.mxu0
        %v2131 = vadd.f32 0.0, %v2130
        %v2132 = vpop.f32.mrf.mxu0
        %2133 = vmatprep.mubr.f32.mxu0 0.0
        %2134 = vmatmul.mubr.f32.gmra.mxu0 %v2062
        %v2135 = vpop.f32.mrf.mxu0
        %v2136 = vadd.f32 0.0, %v2135
        %v2137 = vpop.f32.mrf.mxu0
        %2138 = vdwg.mxu0
        %2139 = vrot.lane.b32.xlu0 %v1556, 96
        %v2140 = vpop.permute.xlu0 %2139
        %v2143 = vsel %vm432, %v1967, 0
        %v2146 = vsel %vm432, %v1968, 0
        %2148 = vmatprep.subr.mxu0 0.0
        %2149 = vmatpush1.msra.mxu0 0.0
        %2150 = vmatprep.subr.mxu0 0.0
        %2151 = vmatpush1.msra.mxu0 0.0
        %2152 = vmatprep.subr.mxu0 0.0
        %2153 = vmatpush1.msra.mxu0 0.0
        %2154 = vmatprep.subr.mxu0 0.0
        %2155 = vmatpush1.msra.mxu0 0.0
        %2156 = vmatprep.subr.mxu0 0.0
        %2157 = vmatpush1.msra.mxu0 0.0
        %2158 = vmatprep.subr.mxu0 0.0
        %2159 = vmatpush1.msra.mxu0 0.0
        %2160 = vmatprep.subr.mxu0 0.0
        %2161 = vmatpush1.msra.mxu0 0.0
        %2162 = vmatprep.subr.mxu0 0.0
        %2163 = vmatpush1.msra.mxu0 0.0
        %2164 = vmatprep.subr.mxu0 0.0
        %2165 = vmatpush1.msra.mxu0 0.0
        %2166 = vmatprep.subr.mxu0 0.0
        %2167 = vmatpush1.msra.mxu0 0.0
        %2168 = vmatprep.subr.mxu0 0.0
        %2169 = vmatpush1.msra.mxu0 0.0
        %2170 = vmatprep.subr.mxu0 0.0
        %2171 = vmatpush1.msra.mxu0 0.0
        %2172 = vmatprep.subr.mxu0 0.0
        %2173 = vmatpush1.msra.mxu0 0.0
        %2174 = vmatprep.subr.mxu0 0.0
        %2175 = vmatpush1.msra.mxu0 0.0
        %2176 = vmatprep.subr.mxu0 0.0
        %2177 = vmatpush1.msra.mxu0 0.0
        %2178 = vmatprep.subr.mxu0 0.0
        %2179 = vmatpush1.msra.mxu0 %v2140
        %2180 = vmatprep.subr.mxu0 0.0
        %2181 = vmatpush2.msra.mxu0 0.0
        %2182 = vmatprep.subr.mxu0 0.0
        %2183 = vmatpush2.msra.mxu0 0.0
        %2184 = vmatprep.subr.mxu0 0.0
        %2185 = vmatpush2.msra.mxu0 0.0
        %2186 = vmatprep.subr.mxu0 0.0
        %2187 = vmatpush2.msra.mxu0 0.0
        %2188 = vmatprep.subr.mxu0 0.0
        %2189 = vmatpush2.msra.mxu0 0.0
        %2190 = vmatprep.subr.mxu0 0.0
        %2191 = vmatpush2.msra.mxu0 0.0
        %2192 = vmatprep.subr.mxu0 0.0
        %2193 = vmatpush2.msra.mxu0 0.0
        %2194 = vmatprep.subr.mxu0 0.0
        %2195 = vmatpush2.msra.mxu0 0.0
        %2196 = vmatprep.subr.mxu0 0.0
        %2197 = vmatpush2.msra.mxu0 0.0
        %2198 = vmatprep.subr.mxu0 0.0
        %2199 = vmatpush2.msra.mxu0 0.0
        %2200 = vmatprep.subr.mxu0 0.0
        %2201 = vmatpush2.msra.mxu0 0.0
        %2202 = vmatprep.subr.mxu0 0.0
        %2203 = vmatpush2.msra.mxu0 0.0
        %2204 = vmatprep.subr.mxu0 0.0
        %2205 = vmatpush2.msra.mxu0 0.0
        %2206 = vmatprep.subr.mxu0 0.0
        %2207 = vmatpush2.msra.mxu0 0.0
        %2208 = vmatprep.subr.mxu0 0.0
        %2209 = vmatpush2.msra.mxu0 0.0
        %2210 = vmatprep.subr.mxu0 0.0
        %2211 = vmatpush2.msra.mxu0 0.0
        %2212 = vmatprep.mubr.f32.mxu0 0.0
        %2213 = vmatmul.mubr.f32.gmra.mxu0 %v2143
        %v2214 = vpop.f32.mrf.mxu0
        %v2215 = vadd.f32 0.0, %v2214
        %v2216 = vpop.f32.mrf.mxu0
        %2217 = vmatprep.mubr.f32.mxu0 0.0
        %2218 = vmatmul.mubr.f32.gmra.mxu0 %v2146
        %v2219 = vpop.f32.mrf.mxu0
        %v2220 = vadd.f32 0.0, %v2219
        %v2221 = vpop.f32.mrf.mxu0
        %2222 = vdwg.mxu0
        %2223 = vrot.lane.b32.xlu0 %v1558, 96
        %v2224 = vpop.permute.xlu0 %2223
        %v2227 = vsel %vm432, %v1969, 0
        %v2230 = vsel %vm432, %v1970, 0
        %2232 = vmatprep.subr.mxu0 0.0
        %2233 = vmatpush1.msra.mxu0 0.0
        %2234 = vmatprep.subr.mxu0 0.0
        %2235 = vmatpush1.msra.mxu0 0.0
        %2236 = vmatprep.subr.mxu0 0.0
        %2237 = vmatpush1.msra.mxu0 0.0
        %2238 = vmatprep.subr.mxu0 0.0
        %2239 = vmatpush1.msra.mxu0 0.0
        %2240 = vmatprep.subr.mxu0 0.0
        %2241 = vmatpush1.msra.mxu0 0.0
        %2242 = vmatprep.subr.mxu0 0.0
        %2243 = vmatpush1.msra.mxu0 0.0
        %2244 = vmatprep.subr.mxu0 0.0
        %2245 = vmatpush1.msra.mxu0 0.0
        %2246 = vmatprep.subr.mxu0 0.0
        %2247 = vmatpush1.msra.mxu0 0.0
        %2248 = vmatprep.subr.mxu0 0.0
        %2249 = vmatpush1.msra.mxu0 0.0
        %2250 = vmatprep.subr.mxu0 0.0
        %2251 = vmatpush1.msra.mxu0 0.0
        %2252 = vmatprep.subr.mxu0 0.0
        %2253 = vmatpush1.msra.mxu0 0.0
        %2254 = vmatprep.subr.mxu0 0.0
        %2255 = vmatpush1.msra.mxu0 0.0
        %2256 = vmatprep.subr.mxu0 0.0
        %2257 = vmatpush1.msra.mxu0 0.0
        %2258 = vmatprep.subr.mxu0 0.0
        %2259 = vmatpush1.msra.mxu0 0.0
        %2260 = vmatprep.subr.mxu0 0.0
        %2261 = vmatpush1.msra.mxu0 0.0
        %2262 = vmatprep.subr.mxu0 0.0
        %2263 = vmatpush1.msra.mxu0 %v2224
        %2264 = vmatprep.subr.mxu0 0.0
        %2265 = vmatpush2.msra.mxu0 0.0
        %2266 = vmatprep.subr.mxu0 0.0
        %2267 = vmatpush2.msra.mxu0 0.0
        %2268 = vmatprep.subr.mxu0 0.0
        %2269 = vmatpush2.msra.mxu0 0.0
        %2270 = vmatprep.subr.mxu0 0.0
        %2271 = vmatpush2.msra.mxu0 0.0
        %2272 = vmatprep.subr.mxu0 0.0
        %2273 = vmatpush2.msra.mxu0 0.0
        %2274 = vmatprep.subr.mxu0 0.0
        %2275 = vmatpush2.msra.mxu0 0.0
        %2276 = vmatprep.subr.mxu0 0.0
        %2277 = vmatpush2.msra.mxu0 0.0
        %2278 = vmatprep.subr.mxu0 0.0
        %2279 = vmatpush2.msra.mxu0 0.0
        %2280 = vmatprep.subr.mxu0 0.0
        %2281 = vmatpush2.msra.mxu0 0.0
        %2282 = vmatprep.subr.mxu0 0.0
        %2283 = vmatpush2.msra.mxu0 0.0
        %2284 = vmatprep.subr.mxu0 0.0
        %2285 = vmatpush2.msra.mxu0 0.0
        %2286 = vmatprep.subr.mxu0 0.0
        %2287 = vmatpush2.msra.mxu0 0.0
        %2288 = vmatprep.subr.mxu0 0.0
        %2289 = vmatpush2.msra.mxu0 0.0
        %2290 = vmatprep.subr.mxu0 0.0
        %2291 = vmatpush2.msra.mxu0 0.0
        %2292 = vmatprep.subr.mxu0 0.0
        %2293 = vmatpush2.msra.mxu0 0.0
        %2294 = vmatprep.subr.mxu0 0.0
        %2295 = vmatpush2.msra.mxu0 0.0
        %2296 = vmatprep.mubr.f32.mxu0 0.0
        %2297 = vmatmul.mubr.f32.gmra.mxu0 %v2227
        %v2298 = vpop.f32.mrf.mxu0
        %v2299 = vadd.f32 0.0, %v2298
        %v2300 = vpop.f32.mrf.mxu0
        %2301 = vmatprep.mubr.f32.mxu0 0.0
        %2302 = vmatmul.mubr.f32.gmra.mxu0 %v2230
        %v2303 = vpop.f32.mrf.mxu0
        %v2304 = vadd.f32 0.0, %v2303
        %v2305 = vpop.f32.mrf.mxu0
        %2306 = vdwg.mxu0
        %2309 = vrot.lane.b32.xlu0 %v2131, 8
        %v2310 = vpop.permute.xlu0 %2309
        %2311 = vrot.lane.b32.xlu0 %v2136, 8
        %v2312 = vpop.permute.xlu0 %2311
        %2317 = vrot.lane.b32.xlu0 %v2215, 16
        %v2318 = vpop.permute.xlu0 %2317
        %2319 = vrot.lane.b32.xlu0 %v2220, 16
        %v2320 = vpop.permute.xlu0 %2319
        %2325 = vrot.lane.b32.xlu0 %v2299, 24
        %v2326 = vpop.permute.xlu0 %2325
        %2327 = vrot.lane.b32.xlu0 %v2304, 24
        %v2328 = vpop.permute.xlu0 %2327
        %v2331 = vsel %vm432, %v2047, %v2310
        %v2332 = vsel %vm432, %v2052, %v2312
        %v2333 = vsel %vm777, %v2331, %v2318
        %v2334 = vsel %vm777, %v2332, %v2320
        %v2335 = vsel %vm1242, %v2333, %v2326
        %v2336 = vsel %vm1242, %v2334, %v2328
        %v2337 = vld [vmem:[#allocation7 + $0x80] sm:$0xff]
        %v2338 = vld [vmem:[#allocation7 + $0x88] sm:$0xff]
        %v2339 = vld [vmem:[#allocation7 + $0x90] sm:$0xff]
        %v2340 = vld [vmem:[#allocation7 + $0x98] sm:$0xff]
        %v2342 = vsel %vm289, %v2335, 0
        %v2345 = vsel %vm289, %v2336, 0
        %2347 = vmatprep.subr.mxu0 0.0
        %2348 = vmatpush1.msra.mxu0 0.0
        %2349 = vmatprep.subr.mxu0 0.0
        %2350 = vmatpush1.msra.mxu0 0.0
        %2351 = vmatprep.subr.mxu0 0.0
        %2352 = vmatpush1.msra.mxu0 0.0
        %2353 = vmatprep.subr.mxu0 0.0
        %2354 = vmatpush1.msra.mxu0 0.0
        %2355 = vmatprep.subr.mxu0 0.0
        %2356 = vmatpush1.msra.mxu0 0.0
        %2357 = vmatprep.subr.mxu0 0.0
        %2358 = vmatpush1.msra.mxu0 0.0
        %2359 = vmatprep.subr.mxu0 0.0
        %2360 = vmatpush1.msra.mxu0 0.0
        %2361 = vmatprep.subr.mxu0 0.0
        %2362 = vmatpush1.msra.mxu0 0.0
        %2363 = vmatprep.subr.mxu0 0.0
        %2364 = vmatpush1.msra.mxu0 0.0
        %2365 = vmatprep.subr.mxu0 0.0
        %2366 = vmatpush1.msra.mxu0 0.0
        %2367 = vmatprep.subr.mxu0 0.0
        %2368 = vmatpush1.msra.mxu0 0.0
        %2369 = vmatprep.subr.mxu0 0.0
        %2370 = vmatpush1.msra.mxu0 0.0
        %2371 = vmatprep.subr.mxu0 0.0
        %2372 = vmatpush1.msra.mxu0 %v2340
        %2373 = vmatprep.subr.mxu0 0.0
        %2374 = vmatpush1.msra.mxu0 %v2339
        %2375 = vmatprep.subr.mxu0 0.0
        %2376 = vmatpush1.msra.mxu0 %v2338
        %2377 = vmatprep.subr.mxu0 0.0
        %2378 = vmatpush1.msra.mxu0 %v2337
        %2379 = vmatprep.subr.mxu0 0.0
        %2380 = vmatpush2.msra.mxu0 0.0
        %2381 = vmatprep.subr.mxu0 0.0
        %2382 = vmatpush2.msra.mxu0 0.0
        %2383 = vmatprep.subr.mxu0 0.0
        %2384 = vmatpush2.msra.mxu0 0.0
        %2385 = vmatprep.subr.mxu0 0.0
        %2386 = vmatpush2.msra.mxu0 0.0
        %2387 = vmatprep.subr.mxu0 0.0
        %2388 = vmatpush2.msra.mxu0 0.0
        %2389 = vmatprep.subr.mxu0 0.0
        %2390 = vmatpush2.msra.mxu0 0.0
        %2391 = vmatprep.subr.mxu0 0.0
        %2392 = vmatpush2.msra.mxu0 0.0
        %2393 = vmatprep.subr.mxu0 0.0
        %2394 = vmatpush2.msra.mxu0 0.0
        %2395 = vmatprep.subr.mxu0 0.0
        %2396 = vmatpush2.msra.mxu0 0.0
        %2397 = vmatprep.subr.mxu0 0.0
        %2398 = vmatpush2.msra.mxu0 0.0
        %2399 = vmatprep.subr.mxu0 0.0
        %2400 = vmatpush2.msra.mxu0 0.0
        %2401 = vmatprep.subr.mxu0 0.0
        %2402 = vmatpush2.msra.mxu0 0.0
        %2403 = vmatprep.subr.mxu0 0.0
        %2404 = vmatpush2.msra.mxu0 0.0
        %2405 = vmatprep.subr.mxu0 0.0
        %2406 = vmatpush2.msra.mxu0 0.0
        %2407 = vmatprep.subr.mxu0 0.0
        %2408 = vmatpush2.msra.mxu0 0.0
        %2409 = vmatprep.subr.mxu0 0.0
        %2410 = vmatpush2.msra.mxu0 0.0
        %2411 = vmatprep.mubr.f32.mxu0 0.0
        %2412 = vmatmul.mubr.f32.gmra.mxu0 %v2342
        %v2413 = vpop.f32.mrf.mxu0
        %v2414 = vadd.f32 0.0, %v2413
        %v2415 = vpop.f32.mrf.mxu0
        %2416 = vmatprep.mubr.f32.mxu0 0.0
        %2417 = vmatmul.mubr.f32.gmra.mxu0 %v2345
        %v2418 = vpop.f32.mrf.mxu0
        %v2419 = vadd.f32 0.0, %v2418
        %v2420 = vpop.f32.mrf.mxu0
        %2421 = vdwg.mxu0
        %v2422 = vadd.f32 %v1336, %v2414
        %v2423 = vadd.f32 %v1337, %v2419
        %v2424 = vlaneseq
        %v2425 = vshrl.u32 %v2424, 7
        %v2426 = vsub.s32 7, %v2425
        %v2427 = vrot.slane %v287, %v2426
        %v2428 = vadd.f32 %v2422, %v2427
        %v2429 = vadd.f32 %v2423, %v2427
        %v2430 = vsel %vm289, %v2428, 0.0
        %2431 = vadd.xlane.f32.xlu0 %v2430
        %v2432 = vpop.xlane.xlu0 %2431
        %v2433 = vsel %vm289, %v2429, 0.0
        %2434 = vadd.xlane.f32.xlu0 %v2433
        %v2435 = vpop.xlane.xlu0 %2434
        %v2436 = vmul.f32 %v2432, %v296
        %v2437 = vmul.f32 %v2435, %v296
        %v2438 = vsub.f32 %v2428, %v2436
        %v2439 = vsub.f32 %v2429, %v2437
        %v2440 = vmul.f32 %v2438, %v2438
        %v2441 = vmul.f32 %v2439, %v2439
        %v2442 = vsel %vm289, %v2440, 0.0
        %2443 = vadd.xlane.f32.xlu0 %v2442
        %v2444 = vpop.xlane.xlu0 %2443
        %v2445 = vsel %vm289, %v2441, 0.0
        %2446 = vadd.xlane.f32.xlu0 %v2445
        %v2447 = vpop.xlane.xlu0 %2446
        %v2448 = vmul.f32 %v2444, %v296
        %v2449 = vmul.f32 %v2447, %v296
        %v2450 = vadd.f32 %v2448, 1e-05
        %v2451 = vadd.f32 %v2449, 1e-05
        %v2452 = vrsqrt.pop %v2450
        %v2453 = vrsqrt.pop %v2451
        %v2454 = vmul.f32 %v2438, %v2452
        %v2455 = vmul.f32 %v2439, %v2453
        %v2456 = vlaneseq
        %v2457 = vshrl.u32 %v2456, 7
        %v2458 = vsub.s32 4, %v2457
        %v2459 = vrot.slane %v287, %v2458
        %v2460 = vmul.f32 %v2454, %v2459
        %v2461 = vmul.f32 %v2455, %v2459
        %v2462 = vlaneseq
        %v2463 = vshrl.u32 %v2462, 7
        %v2464 = vsub.s32 5, %v2463
        %v2465 = vrot.slane %v287, %v2464
        %v2466 = vadd.f32 %v2460, %v2465
        %v2467 = vadd.f32 %v2461, %v2465
        %v2468 = vld [vmem:[#allocation7 + $0xa0] sm:$0xff]
        %v2469 = vld [vmem:[#allocation7 + $0xa8] sm:$0xff]
        %v2470 = vld [vmem:[#allocation7 + $0xb0] sm:$0xff]
        %v2471 = vld [vmem:[#allocation7 + $0xb8] sm:$0xff]
        %v2472 = vlaneseq
        %v2473 = vshrl.u32 %v2472, 7
        %v2474 = vsub.s32 1, %v2473
        %v2475 = vrot.slane %v288, %v2474
        %v2477 = vsel %vm289, %v2466, 0
        %v2480 = vsel %vm289, %v2467, 0
        %2482 = vmatprep.subr.mxu0 0.0
        %2483 = vmatpush1.msra.mxu0 0.0
        %2484 = vmatprep.subr.mxu0 0.0
        %2485 = vmatpush1.msra.mxu0 0.0
        %2486 = vmatprep.subr.mxu0 0.0
        %2487 = vmatpush1.msra.mxu0 0.0
        %2488 = vmatprep.subr.mxu0 0.0
        %2489 = vmatpush1.msra.mxu0 0.0
        %2490 = vmatprep.subr.mxu0 0.0
        %2491 = vmatpush1.msra.mxu0 0.0
        %2492 = vmatprep.subr.mxu0 0.0
        %2493 = vmatpush1.msra.mxu0 0.0
        %2494 = vmatprep.subr.mxu0 0.0
        %2495 = vmatpush1.msra.mxu0 0.0
        %2496 = vmatprep.subr.mxu0 0.0
        %2497 = vmatpush1.msra.mxu0 0.0
        %2498 = vmatprep.subr.mxu0 0.0
        %2499 = vmatpush1.msra.mxu0 0.0
        %2500 = vmatprep.subr.mxu0 0.0
        %2501 = vmatpush1.msra.mxu0 0.0
        %2502 = vmatprep.subr.mxu0 0.0
        %2503 = vmatpush1.msra.mxu0 0.0
        %2504 = vmatprep.subr.mxu0 0.0
        %2505 = vmatpush1.msra.mxu0 0.0
        %2506 = vmatprep.subr.mxu0 0.0
        %2507 = vmatpush1.msra.mxu0 %v2471
        %2508 = vmatprep.subr.mxu0 0.0
        %2509 = vmatpush1.msra.mxu0 %v2470
        %2510 = vmatprep.subr.mxu0 0.0
        %2511 = vmatpush1.msra.mxu0 %v2469
        %2512 = vmatprep.subr.mxu0 0.0
        %2513 = vmatpush1.msra.mxu0 %v2468
        %2514 = vmatprep.subr.mxu0 0.0
        %2515 = vmatpush2.msra.mxu0 0.0
        %2516 = vmatprep.subr.mxu0 0.0
        %2517 = vmatpush2.msra.mxu0 0.0
        %2518 = vmatprep.subr.mxu0 0.0
        %2519 = vmatpush2.msra.mxu0 0.0
        %2520 = vmatprep.subr.mxu0 0.0
        %2521 = vmatpush2.msra.mxu0 0.0
        %2522 = vmatprep.subr.mxu0 0.0
        %2523 = vmatpush2.msra.mxu0 0.0
        %2524 = vmatprep.subr.mxu0 0.0
        %2525 = vmatpush2.msra.mxu0 0.0
        %2526 = vmatprep.subr.mxu0 0.0
        %2527 = vmatpush2.msra.mxu0 0.0
        %2528 = vmatprep.subr.mxu0 0.0
        %2529 = vmatpush2.msra.mxu0 0.0
        %2530 = vmatprep.subr.mxu0 0.0
        %2531 = vmatpush2.msra.mxu0 0.0
        %2532 = vmatprep.subr.mxu0 0.0
        %2533 = vmatpush2.msra.mxu0 0.0
        %2534 = vmatprep.subr.mxu0 0.0
        %2535 = vmatpush2.msra.mxu0 0.0
        %2536 = vmatprep.subr.mxu0 0.0
        %2537 = vmatpush2.msra.mxu0 0.0
        %2538 = vmatprep.subr.mxu0 0.0
        %2539 = vmatpush2.msra.mxu0 0.0
        %2540 = vmatprep.subr.mxu0 0.0
        %2541 = vmatpush2.msra.mxu0 0.0
        %2542 = vmatprep.subr.mxu0 0.0
        %2543 = vmatpush2.msra.mxu0 0.0
        %2544 = vmatprep.subr.mxu0 0.0
        %2545 = vmatpush2.msra.mxu0 0.0
        %2546 = vmatprep.mubr.f32.mxu0 0.0
        %2547 = vmatmul.mubr.f32.gmra.mxu0 %v2477
        %v2548 = vpop.f32.mrf.mxu0
        %v2549 = vadd.f32 %v2475, %v2548
        %v2550 = vpop.f32.mrf.mxu0
        %2551 = vmatprep.mubr.f32.mxu0 0.0
        %2552 = vmatmul.mubr.f32.gmra.mxu0 %v2480
        %v2553 = vpop.f32.mrf.mxu0
        %v2554 = vadd.f32 %v2475, %v2553
        %v2555 = vpop.f32.mrf.mxu0
        %2556 = vdwg.mxu0
        %v2557 = vld [vmem:[#allocation7 + $0xc0] sm:$0xff]
        %v2558 = vld [vmem:[#allocation7 + $0xc8] sm:$0xff]
        %v2559 = vld [vmem:[#allocation7 + $0xd0] sm:$0xff]
        %v2560 = vld [vmem:[#allocation7 + $0xd8] sm:$0xff]
        %v2561 = vlaneseq
        %v2562 = vshrl.u32 %v2561, 7
        %v2563 = vsub.s32 2, %v2562
        %v2564 = vrot.slane %v288, %v2563
        %2565 = vmatprep.subr.mxu0 0.0
        %2566 = vmatpush1.msra.mxu0 0.0
        %2567 = vmatprep.subr.mxu0 0.0
        %2568 = vmatpush1.msra.mxu0 0.0
        %2569 = vmatprep.subr.mxu0 0.0
        %2570 = vmatpush1.msra.mxu0 0.0
        %2571 = vmatprep.subr.mxu0 0.0
        %2572 = vmatpush1.msra.mxu0 0.0
        %2573 = vmatprep.subr.mxu0 0.0
        %2574 = vmatpush1.msra.mxu0 0.0
        %2575 = vmatprep.subr.mxu0 0.0
        %2576 = vmatpush1.msra.mxu0 0.0
        %2577 = vmatprep.subr.mxu0 0.0
        %2578 = vmatpush1.msra.mxu0 0.0
        %2579 = vmatprep.subr.mxu0 0.0
        %2580 = vmatpush1.msra.mxu0 0.0
        %2581 = vmatprep.subr.mxu0 0.0
        %2582 = vmatpush1.msra.mxu0 0.0
        %2583 = vmatprep.subr.mxu0 0.0
        %2584 = vmatpush1.msra.mxu0 0.0
        %2585 = vmatprep.subr.mxu0 0.0
        %2586 = vmatpush1.msra.mxu0 0.0
        %2587 = vmatprep.subr.mxu0 0.0
        %2588 = vmatpush1.msra.mxu0 0.0
        %2589 = vmatprep.subr.mxu0 0.0
        %2590 = vmatpush1.msra.mxu0 %v2560
        %2591 = vmatprep.subr.mxu0 0.0
        %2592 = vmatpush1.msra.mxu0 %v2559
        %2593 = vmatprep.subr.mxu0 0.0
        %2594 = vmatpush1.msra.mxu0 %v2558
        %2595 = vmatprep.subr.mxu0 0.0
        %2596 = vmatpush1.msra.mxu0 %v2557
        %2597 = vmatprep.subr.mxu0 0.0
        %2598 = vmatpush2.msra.mxu0 0.0
        %2599 = vmatprep.subr.mxu0 0.0
        %2600 = vmatpush2.msra.mxu0 0.0
        %2601 = vmatprep.subr.mxu0 0.0
        %2602 = vmatpush2.msra.mxu0 0.0
        %2603 = vmatprep.subr.mxu0 0.0
        %2604 = vmatpush2.msra.mxu0 0.0
        %2605 = vmatprep.subr.mxu0 0.0
        %2606 = vmatpush2.msra.mxu0 0.0
        %2607 = vmatprep.subr.mxu0 0.0
        %2608 = vmatpush2.msra.mxu0 0.0
        %2609 = vmatprep.subr.mxu0 0.0
        %2610 = vmatpush2.msra.mxu0 0.0
        %2611 = vmatprep.subr.mxu0 0.0
        %2612 = vmatpush2.msra.mxu0 0.0
        %2613 = vmatprep.subr.mxu0 0.0
        %2614 = vmatpush2.msra.mxu0 0.0
        %2615 = vmatprep.subr.mxu0 0.0
        %2616 = vmatpush2.msra.mxu0 0.0
        %2617 = vmatprep.subr.mxu0 0.0
        %2618 = vmatpush2.msra.mxu0 0.0
        %2619 = vmatprep.subr.mxu0 0.0
        %2620 = vmatpush2.msra.mxu0 0.0
        %2621 = vmatprep.subr.mxu0 0.0
        %2622 = vmatpush2.msra.mxu0 0.0
        %2623 = vmatprep.subr.mxu0 0.0
        %2624 = vmatpush2.msra.mxu0 0.0
        %2625 = vmatprep.subr.mxu0 0.0
        %2626 = vmatpush2.msra.mxu0 0.0
        %2627 = vmatprep.subr.mxu0 0.0
        %2628 = vmatpush2.msra.mxu0 0.0
        %2629 = vmatprep.mubr.f32.mxu0 0.0
        %2630 = vmatmul.mubr.f32.gmra.mxu0 %v2477
        %v2631 = vpop.f32.mrf.mxu0
        %v2632 = vadd.f32 %v2564, %v2631
        %v2633 = vpop.f32.mrf.mxu0
        %2634 = vmatprep.mubr.f32.mxu0 0.0
        %2635 = vmatmul.mubr.f32.gmra.mxu0 %v2480
        %v2636 = vpop.f32.mrf.mxu0
        %v2637 = vadd.f32 %v2564, %v2636
        %v2638 = vpop.f32.mrf.mxu0
        %2639 = vdwg.mxu0
        %v2640 = vsub.f32 0.0, %v2549
        %v2641 = vsub.f32 0.0, %v2554
        %v2642 = vmul.f32 %v2640, 1.442695
        %v2643 = vpow.pop %v2642
        %v2644 = vmul.f32 %v2641, 1.442695
        %v2645 = vpow.pop %v2644
        %v2646 = vadd.f32 %v2643, 1.0
        %v2647 = vadd.f32 %v2645, 1.0
        %v2648 = vrcp.pop %v2646
        %v2649 = vmul.f32 1.0, %v2648
        %v2650 = vrcp.pop %v2647
        %v2651 = vmul.f32 1.0, %v2650
        %v2652 = vmul.f32 %v2549, %v2649
        %v2653 = vmul.f32 %v2554, %v2651
        %v2654 = vmul.f32 %v2652, %v2632
        %v2655 = vmul.f32 %v2653, %v2637
        %v2656 = vld [vmem:[#allocation7 + $0xe0] sm:$0xff]
        %v2657 = vld [vmem:[#allocation7 + $0xe8] sm:$0xff]
        %v2658 = vld [vmem:[#allocation7 + $0xf0] sm:$0xff]
        %v2659 = vld [vmem:[#allocation7 + $0xf8] sm:$0xff]
        %v2660 = vld [vmem:[#allocation7 + $0x100] sm:$0xff]
        %v2661 = vld [vmem:[#allocation7 + $0x108] sm:$0xff]
        %v2662 = vlaneseq
        %v2663 = vshrl.u32 %v2662, 7
        %v2664 = vsub.s32 0, %v2663
        %v2665 = vrot.slane %v288, %v2664
        %vm2666 = vcmask 392192
        %v2668 = vsel %vm2666, %v2654, 0
        %v2671 = vsel %vm2666, %v2655, 0
        %2673 = vmatprep.subr.mxu0 0.0
        %2674 = vmatpush1.msra.mxu0 0.0
        %2675 = vmatprep.subr.mxu0 0.0
        %2676 = vmatpush1.msra.mxu0 0.0
        %2677 = vmatprep.subr.mxu0 0.0
        %2678 = vmatpush1.msra.mxu0 0.0
        %2679 = vmatprep.subr.mxu0 0.0
        %2680 = vmatpush1.msra.mxu0 0.0
        %2681 = vmatprep.subr.mxu0 0.0
        %2682 = vmatpush1.msra.mxu0 0.0
        %2683 = vmatprep.subr.mxu0 0.0
        %2684 = vmatpush1.msra.mxu0 0.0
        %2685 = vmatprep.subr.mxu0 0.0
        %2686 = vmatpush1.msra.mxu0 0.0
        %2687 = vmatprep.subr.mxu0 0.0
        %2688 = vmatpush1.msra.mxu0 0.0
        %2689 = vmatprep.subr.mxu0 0.0
        %2690 = vmatpush1.msra.mxu0 0.0
        %2691 = vmatprep.subr.mxu0 0.0
        %2692 = vmatpush1.msra.mxu0 0.0
        %2693 = vmatprep.subr.mxu0 0.0
        %2694 = vmatpush1.msra.mxu0 %v2661
        %2695 = vmatprep.subr.mxu0 0.0
        %2696 = vmatpush1.msra.mxu0 %v2660
        %2697 = vmatprep.subr.mxu0 0.0
        %2698 = vmatpush1.msra.mxu0 %v2659
        %2699 = vmatprep.subr.mxu0 0.0
        %2700 = vmatpush1.msra.mxu0 %v2658
        %2701 = vmatprep.subr.mxu0 0.0
        %2702 = vmatpush1.msra.mxu0 %v2657
        %2703 = vmatprep.subr.mxu0 0.0
        %2704 = vmatpush1.msra.mxu0 %v2656
        %2705 = vmatprep.subr.mxu0 0.0
        %2706 = vmatpush2.msra.mxu0 0.0
        %2707 = vmatprep.subr.mxu0 0.0
        %2708 = vmatpush2.msra.mxu0 0.0
        %2709 = vmatprep.subr.mxu0 0.0
        %2710 = vmatpush2.msra.mxu0 0.0
        %2711 = vmatprep.subr.mxu0 0.0
        %2712 = vmatpush2.msra.mxu0 0.0
        %2713 = vmatprep.subr.mxu0 0.0
        %2714 = vmatpush2.msra.mxu0 0.0
        %2715 = vmatprep.subr.mxu0 0.0
        %2716 = vmatpush2.msra.mxu0 0.0
        %2717 = vmatprep.subr.mxu0 0.0
        %2718 = vmatpush2.msra.mxu0 0.0
        %2719 = vmatprep.subr.mxu0 0.0
        %2720 = vmatpush2.msra.mxu0 0.0
        %2721 = vmatprep.subr.mxu0 0.0
        %2722 = vmatpush2.msra.mxu0 0.0
        %2723 = vmatprep.subr.mxu0 0.0
        %2724 = vmatpush2.msra.mxu0 0.0
        %2725 = vmatprep.subr.mxu0 0.0
        %2726 = vmatpush2.msra.mxu0 0.0
        %2727 = vmatprep.subr.mxu0 0.0
        %2728 = vmatpush2.msra.mxu0 0.0
        %2729 = vmatprep.subr.mxu0 0.0
        %2730 = vmatpush2.msra.mxu0 0.0
        %2731 = vmatprep.subr.mxu0 0.0
        %2732 = vmatpush2.msra.mxu0 0.0
        %2733 = vmatprep.subr.mxu0 0.0
        %2734 = vmatpush2.msra.mxu0 0.0
        %2735 = vmatprep.subr.mxu0 0.0
        %2736 = vmatpush2.msra.mxu0 0.0
        %2737 = vmatprep.mubr.f32.mxu0 0.0
        %2738 = vmatmul.mubr.f32.gmra.mxu0 %v2668
        %v2739 = vpop.f32.mrf.mxu0
        %v2740 = vadd.f32 %v2665, %v2739
        %v2741 = vpop.f32.mrf.mxu0
        %2742 = vmatprep.mubr.f32.mxu0 0.0
        %2743 = vmatmul.mubr.f32.gmra.mxu0 %v2671
        %v2744 = vpop.f32.mrf.mxu0
        %v2745 = vadd.f32 %v2665, %v2744
        %v2746 = vpop.f32.mrf.mxu0
        %2747 = vdwg.mxu0
        %v2748 = vadd.f32 %v2428, %v2740
        %v2749 = vadd.f32 %v2429, %v2745
        %2750 = vst.msk [vmem:[%s281] sm:$0xff] %vm289, %v2748
        %2751 = vst.msk [vmem:[%s281 + $0x8] sm:$0xff] %vm289, %v2749
        %s2752 = sand.u32 %s127, 1
        %s2753 = scalar_lea.sflag [#allocation4], %s2752
        %s2754 = sand.u32 %s127, 1
        %s2755 = smul.addr %s2754, 16
        %s2756 = scalar_lea.vmem [#allocation10], %s2755
        // Predicated region
        $region53: #{decoder_layer.1} parent=35 // pred_check
          %p2757 = pneg %p137
        $region54: #{decoder_layer.1} parent=35 // pred_check_branch
          %2759 = sbr.rel (%p2757) target = $region56
        $region55: #{decoder_layer.1} parent=35 // pred_region
          %s2760 = smul.u32 2, %s25
          %s2762 = ssub.s32 256, 256
          %2763 = vsyncadd %s2753, %s2762
          %s2764 = smul.addr %s2760, 128
          %s2765 = scalar_lea.hbm %s4, %s2764
          %s2766 = sshll.u32 %s2756, 4
          %s2767 = int_to_ptr.vmem [resolvable:$true] %s2766
          %2772 = dma.vmem_to_hbm [thread:$0]  %s2767, 256, %s2765, %s2753, 128, 128, 8
        $region56: #{decoder_layer.1} parent=35 // pred_fallthru
          _
      $region36: #{decoder_layer.1} parent=5 // pred_fallthru
        _
      %p2773 = scmp.le.s32.totalorder 2, %s20
      // Predicated region
      $region57: #{decoder_layer.1} parent=5 // pred_check
        %p2774 = pneg %p2773
      $region58: #{decoder_layer.1} parent=5 // pred_check_branch
        %2776 = sbr.rel (%p2774) target = $region60
      $region59: #{decoder_layer.1} parent=5 // pred_region
        %s2777 = ssub.s32 %s20, 2
        // Predicated region
        $region61: #{decoder_layer.1} parent=59 // pred_check
          %p2778 = pneg %p143
        $region62: #{decoder_layer.1} parent=59 // pred_check_branch
          %2780 = sbr.rel (%p2778) target = $region64
        $region63: #{decoder_layer.1} parent=59 // pred_region
          %s2781 = sand.u32 %s128, 1
          %s2782 = scalar_lea.sflag [#allocation4], %s2781
          %s2783 = sand.u32 %s128, 1
          %s2784 = smul.addr %s2783, 16
          %s2785 = scalar_lea.vmem [#allocation10], %s2784
          %2786 = dma.done %s2782, 256
        $region64: #{decoder_layer.1} parent=59 // pred_fallthru
          _
      $region60: #{decoder_layer.1} parent=5 // pred_fallthru
        _
    $region6: #{decoder_layer.1} parent=1 // loop_footer
      %s24 = sadd.s32 1, %s20
    $region7: #{decoder_layer.1} parent=1 // loop_footer_branch
      %19 = sbr.rel target = $region3
    $region8: #{decoder_layer.1} parent=1 // loop_exit
      _
    %2787 = vsyncpa [#allocation3], 1
    %s2788 = scalar_lea.sflag [#allocation3], 1
    %2789 = vsyncpa %s2788, 1
    %2790 = vsyncpa [#allocation6], 1
    %s2791 = scalar_lea.sflag [#allocation6], 1
    %2792 = vsyncpa %s2791, 1
    %2793 = vsyncpa [#allocation9], 1
    %2794 = vsyncpa [#allocation4], 1
    %s2795 = scalar_lea.sflag [#allocation4], 1
    %2796 = vsyncpa %s2795, 1

</llo_original>
